<compile_context>
chip_gen: v7x
topology: tpu7x:2x2x1
jax: 0.10.0
libtpu: 0.0.40
codegen_flags: <defaults>
</compile_context>

<pallas_src>
import functools
import math

import jax
import jax.numpy as jnp
from jax import lax
from jax.experimental import pallas as pl
from jax.experimental.pallas import tpu as pltpu

LN_EPS = 1e-5


# --------------------------------------------------------------------------- #
# helpers
# --------------------------------------------------------------------------- #
def _tile(dim, target, unit):
    """Largest block size <= target that divides `dim` and is a multiple of `unit`
    (falls back to the full extent, which is always a legal block)."""
    if dim <= target:
        return dim
    cand = (target // unit) * unit
    while cand >= unit:
        if dim % cand == 0:
            return cand
        cand -= unit
    return dim


# One-time probe: can this build take pipeline_mode=pl.Buffered(1) on a BlockSpec?
_SINGLE_BUFFER_OK = None


def _probe_single_buffer():
    global _SINGLE_BUFFER_OK
    if _SINGLE_BUFFER_OK is not None:
        return _SINGLE_BUFFER_OK
    try:
        spec = pl.BlockSpec((8, 128), lambda i: (0, 0), pipeline_mode=pl.Buffered(1))

        def _k(x_ref, o_ref):
            o_ref[...] = x_ref[...] + 1.0

        y = pl.pallas_call(
            _k,
            grid=(1,),
            out_shape=jax.ShapeDtypeStruct((8, 128), jnp.float32),
            in_specs=[spec],
            out_specs=pl.BlockSpec((8, 128), lambda i: (0, 0)),
        )(jnp.zeros((8, 128), jnp.float32))
        jax.block_until_ready(y)
        _SINGLE_BUFFER_OK = True
    except Exception:
        _SINGLE_BUFFER_OK = False
    return _SINGLE_BUFFER_OK


def _inv_spec(block_shape, index_map):
    """BlockSpec for a grid-invariant operand: single-buffered when supported,
    halving its VMEM footprint (performance review item)."""
    if _SINGLE_BUFFER_OK:
        return pl.BlockSpec(block_shape, index_map, pipeline_mode=pl.Buffered(1))
    return pl.BlockSpec(block_shape, index_map)


# --------------------------------------------------------------------------- #
# Fused attention kernel (QKV projection + all-heads attention, one batch/step)
# --------------------------------------------------------------------------- #
def _attn_kernel(*refs, H, Dh, self_attn, has_am, has_kpm, return_probs):
    """One batch element, all heads.

    self_attn=True : refs = x(1,L,E), w_qkv(E,3E) bf16, b_qkv(1,3E),
                            [attn_mask(Lq,Lk)], [kpm(1,1,Lk)], o(1,Lq,E), [probs(1,Lq,Lk)]
    self_attn=False: refs = xq(1,T,E), mem(1,S,E), w_q(E,E) bf16, b_q(1,E),
                            w_kv(E,2E) bf16, b_kv(1,2E), [mask], [kpm], o, [probs]
    The 1/sqrt(Dh) softmax scale is folded into the q projection weight/bias.
    """
    it = iter(refs)
    if self_attn:
        x_ref = next(it)
        w_ref = next(it)
        b_ref = next(it)
    else:
        xq_ref = next(it)
        xm_ref = next(it)
        wq_ref = next(it)
        bq_ref = next(it)
        wkv_ref = next(it)
        bkv_ref = next(it)
    am_ref = next(it) if has_am else None
    kp_ref = next(it) if has_kpm else None
    o_ref = next(it)
    p_ref = next(it) if return_probs else None

    E = H * Dh

    if self_attn:
        x = x_ref[0]                                             # (L, E) f32
        qkv = jnp.dot(x.astype(jnp.bfloat16), w_ref[...],
                      preferred_element_type=jnp.float32) + b_ref[...]
        qkv_b = qkv.astype(jnp.bfloat16)
        q = qkv_b[:, :E]
        k = qkv_b[:, E:2 * E]
        v = qkv_b[:, 2 * E:]
        Lq = x.shape[0]
        Lk = Lq
    else:
        xq = xq_ref[0]                                           # (T, E)
        xm = xm_ref[0]                                           # (S, E)
        q = (jnp.dot(xq.astype(jnp.bfloat16), wq_ref[...],
                     preferred_element_type=jnp.float32)
             + bq_ref[...]).astype(jnp.bfloat16)
        kv = (jnp.dot(xm.astype(jnp.bfloat16), wkv_ref[...],
                      preferred_element_type=jnp.float32)
              + bkv_ref[...]).astype(jnp.bfloat16)
        k = kv[:, :E]
        v = kv[:, E:]
        Lq = xq.shape[0]
        Lk = xm.shape[0]

    # Hoist mask construction out of the per-head loop (one broadcast, one add total).
    mask = None
    if has_am:
        mask = am_ref[...]                                       # (Lq, Lk) f32
    if has_kpm:
        kp = jnp.broadcast_to(kp_ref[...].reshape(1, Lk), (Lq, Lk))
        mask = kp if mask is None else mask + kp

    p_sum = None
    for h in range(H):                    # H is small & static -> unrolled
        sl = slice(h * Dh, (h + 1) * Dh)
        # QK^T: contract the last dims directly (no transpose), bf16 in / fp32 out.
        s = lax.dot_general(q[:, sl], k[:, sl], (((1,), (1,)), ((), ())),
                            preferred_element_type=jnp.float32)  # (Lq, Lk)
        if mask is not None:
            s = s + mask
        m = jnp.max(s, axis=-1, keepdims=True)
        e = jnp.exp(s - m)
        p = e / jnp.sum(e, axis=-1, keepdims=True)
        # PV on the bf16 MXU path; store the head's result into its lane slice
        # (no lane-axis concatenation).
        o_ref[0, :, sl] = jnp.dot(p.astype(jnp.bfloat16), v[:, sl],
                                  preferred_element_type=jnp.float32)
        if return_probs:
            p_sum = p if p_sum is None else p_sum + p

    if return_probs:
        p_ref[...] = (p_sum * (1.0 / H)).reshape(1, Lq, Lk)


def fused_self_attention(x, w_qkv, b_qkv, nhead,
                         attn_mask=None, kpm_add=None, return_probs=True):
    """x:(N,L,E) f32.  Returns (out (N,L,E), head-averaged probs (N,L,L) or None)."""
    N, L, E = x.shape
    Dh = E // nhead
    has_am = attn_mask is not None
    has_kp = kpm_add is not None

    in_specs = [
        pl.BlockSpec((1, L, E), lambda b: (b, 0, 0)),
        _inv_spec((E, 3 * E), lambda b: (0, 0)),
        _inv_spec((1, 3 * E), lambda b: (0, 0)),
    ]
    args = [x, w_qkv, b_qkv]
    if has_am:
        in_specs.append(_inv_spec((L, L), lambda b: (0, 0)))
        args.append(attn_mask.astype(jnp.float32))
    if has_kp:
        in_specs.append(pl.BlockSpec((1, 1, L), lambda b: (b, 0, 0)))
        args.append(kpm_add)

    out_shape = [jax.ShapeDtypeStruct((N, L, E), jnp.float32)]
    out_specs = [pl.BlockSpec((1, L, E), lambda b: (b, 0, 0))]
    if return_probs:
        out_shape.append(jax.ShapeDtypeStruct((N, L, L), jnp.float32))
        out_specs.append(pl.BlockSpec((1, L, L), lambda b: (b, 0, 0)))

    kernel = functools.partial(_attn_kernel, H=nhead, Dh=Dh, self_attn=True,
                               has_am=has_am, has_kpm=has_kp,
                               return_probs=return_probs)
    outs = pl.pallas_call(
        kernel,
        grid=(N,),
        out_shape=tuple(out_shape),
        in_specs=in_specs,
        out_specs=tuple(out_specs),
        compiler_params=pltpu.CompilerParams(dimension_semantics=("parallel",)),
    )(*args)
    if not isinstance(outs, (tuple, list)):
        outs = (outs,)
    return (outs[0], outs[1]) if return_probs else (outs[0], None)


def fused_cross_attention(xq, mem, w_q, b_q, w_kv, b_kv, nhead,
                          attn_mask=None, kpm_add=None, return_probs=True):
    """xq:(N,T,E) mem:(N,S,E).  Returns (out (N,T,E), head-averaged probs (N,T,S) or None)."""
    N, T, E = xq.shape
    S = mem.shape[1]
    Dh = E // nhead
    has_am = attn_mask is not None
    has_kp = kpm_add is not None

    in_specs = [
        pl.BlockSpec((1, T, E), lambda b: (b, 0, 0)),
        pl.BlockSpec((1, S, E), lambda b: (b, 0, 0)),
        _inv_spec((E, E), lambda b: (0, 0)),
        _inv_spec((1, E), lambda b: (0, 0)),
        _inv_spec((E, 2 * E), lambda b: (0, 0)),
        _inv_spec((1, 2 * E), lambda b: (0, 0)),
    ]
    args = [xq, mem, w_q, b_q, w_kv, b_kv]
    if has_am:
        in_specs.append(_inv_spec((T, S), lambda b: (0, 0)))
        args.append(attn_mask.astype(jnp.float32))
    if has_kp:
        in_specs.append(pl.BlockSpec((1, 1, S), lambda b: (b, 0, 0)))
        args.append(kpm_add)

    out_shape = [jax.ShapeDtypeStruct((N, T, E), jnp.float32)]
    out_specs = [pl.BlockSpec((1, T, E), lambda b: (b, 0, 0))]
    if return_probs:
        out_shape.append(jax.ShapeDtypeStruct((N, T, S), jnp.float32))
        out_specs.append(pl.BlockSpec((1, T, S), lambda b: (b, 0, 0)))

    kernel = functools.partial(_attn_kernel, H=nhead, Dh=Dh, self_attn=False,
                               has_am=has_am, has_kpm=has_kp,
                               return_probs=return_probs)
    outs = pl.pallas_call(
        kernel,
        grid=(N,),
        out_shape=tuple(out_shape),
        in_specs=in_specs,
        out_specs=tuple(out_specs),
        compiler_params=pltpu.CompilerParams(dimension_semantics=("parallel",)),
    )(*args)
    if not isinstance(outs, (tuple, list)):
        outs = (outs,)
    return (outs[0], outs[1]) if return_probs else (outs[0], None)


# --------------------------------------------------------------------------- #
# out-projection + residual + LayerNorm (fused, row-tiled)
# --------------------------------------------------------------------------- #
def _proj_add_ln_kernel(x_ref, w_ref, b_ref, r_ref, g_ref, bb_ref, o_ref):
    y = jnp.dot(x_ref[...].astype(jnp.bfloat16), w_ref[...],
                preferred_element_type=jnp.float32) + b_ref[...]
    z = r_ref[...] + y
    mean = jnp.mean(z, axis=-1, keepdims=True)
    var = jnp.mean(jnp.square(z - mean), axis=-1, keepdims=True)
    o_ref[...] = (z - mean) * lax.rsqrt(var + LN_EPS) * g_ref[...] + bb_ref[...]


def proj_add_ln(x, w, b, residual, gamma, beta, tm=512):
    """LayerNorm(residual + x @ w + b).  x,residual:(M,E) f32, w:(E,E) bf16."""
    M, K = x.shape
    E = w.shape[1]
    tm = _tile(M, tm, 8)   # NOTE: re-derive tm against 64 MiB VMEM on v7x.
    return pl.pallas_call(
        _proj_add_ln_kernel,
        grid=(M // tm,),
        out_shape=jax.ShapeDtypeStruct((M, E), jnp.float32),
        in_specs=[
            pl.BlockSpec((tm, K), lambda i: (i, 0)),
            _inv_spec((K, E), lambda i: (0, 0)),
            _inv_spec((1, E), lambda i: (0, 0)),
            pl.BlockSpec((tm, E), lambda i: (i, 0)),
            _inv_spec((1, E), lambda i: (0, 0)),
            _inv_spec((1, E), lambda i: (0, 0)),
        ],
        out_specs=pl.BlockSpec((tm, E), lambda i: (i, 0)),
        compiler_params=pltpu.CompilerParams(dimension_semantics=("parallel",)),
    )(x, w, b.reshape(1, E), residual, gamma.reshape(1, E), beta.reshape(1, E))


# --------------------------------------------------------------------------- #
# FFN: linear1 + ReLU + linear2 + residual + LayerNorm, F-tiled with fp32 accumulator
# --------------------------------------------------------------------------- #
def _ffn_add_ln_kernel(x_ref, w1_ref, b1_ref, w2_ref, b2_ref, g_ref, bb_ref,
                       o_ref, acc_ref):
    f = pl.program_id(1)

    @pl.when(f == 0)
    def _():
        acc_ref[...] = jnp.zeros_like(acc_ref)

    h = jnp.dot(x_ref[...].astype(jnp.bfloat16), w1_ref[...],
                preferred_element_type=jnp.float32) + b1_ref[...]
    h = jnp.maximum(h, 0.0)
    acc_ref[...] += jnp.dot(h.astype(jnp.bfloat16), w2_ref[...],
                            preferred_element_type=jnp.float32)

    @pl.when(f == pl.num_programs(1) - 1)
    def _():
        z = x_ref[...] + acc_ref[...] + b2_ref[...]
        mean = jnp.mean(z, axis=-1, keepdims=True)
        var = jnp.mean(jnp.square(z - mean), axis=-1, keepdims=True)
        o_ref[...] = (z - mean) * lax.rsqrt(var + LN_EPS) * g_ref[...] + bb_ref[...]


def ffn_add_ln(x, w1, b1, w2, b2, gamma, beta, tm=512, tf=512):
    """LayerNorm(x + relu(x @ w1 + b1) @ w2 + b2).  x:(M,E) f32, w1:(E,F)/w2:(F,E) bf16.
    Tiled over rows (parallel) and over F (arbitrary, fp32 VMEM accumulator) so both
    full weight matrices are never resident at once."""
    M, E = x.shape
    F = w1.shape[1]
    tm = _tile(M, tm, 8)
    tf = _tile(F, tf, 128)
    return pl.pallas_call(
        _ffn_add_ln_kernel,
        grid=(M // tm, F // tf),
        out_shape=jax.ShapeDtypeStruct((M, E), jnp.float32),
        in_specs=[
            pl.BlockSpec((tm, E), lambda i, f: (i, 0)),
            pl.BlockSpec((E, tf), lambda i, f: (0, f)),
            pl.BlockSpec((1, tf), lambda i, f: (0, f)),
            pl.BlockSpec((tf, E), lambda i, f: (f, 0)),
            _inv_spec((1, E), lambda i, f: (0, 0)),
            _inv_spec((1, E), lambda i, f: (0, 0)),
            _inv_spec((1, E), lambda i, f: (0, 0)),
        ],
        out_specs=pl.BlockSpec((tm, E), lambda i, f: (i, 0)),
        scratch_shapes=[pltpu.VMEM((tm, E), jnp.float32)],
        compiler_params=pltpu.CompilerParams(
            dimension_semantics=("parallel", "arbitrary")),
    )(x, w1, b1.reshape(1, F), w2, b2.reshape(1, E),
      gamma.reshape(1, E), beta.reshape(1, E))


# --------------------------------------------------------------------------- #
# Layers (batch-major: activations are (N*L, E) slabs, row order = (N, L))
# --------------------------------------------------------------------------- #
def _kpm_to_additive(kpm):
    if kpm is None:
        return None
    kpm_b = jnp.asarray(kpm).astype(jnp.bool_)
    add = jnp.where(kpm_b, jnp.float32(-jnp.inf), jnp.float32(0.0))
    return add.reshape(kpm_b.shape[0], 1, kpm_b.shape[1]).astype(jnp.float32)


def _encoder_layer(x, N, S, p, nhead, attn_mask, kpm_add):
    E = x.shape[1]
    a = p["attn"]
    o, probs = fused_self_attention(x.reshape(N, S, E), a["w_qkv"], a["b_qkv"], nhead,
                                    attn_mask=attn_mask, kpm_add=kpm_add,
                                    return_probs=True)
    x = proj_add_ln(o.reshape(N * S, E), a["w_out"], a["b_out"], x,
                    p["norm1_w"], p["norm1_b"])
    x = ffn_add_ln(x, p["w1"], p["b1"], p["w2"], p["b2"],
                   p["norm2_w"], p["norm2_b"])
    return x, probs


def _decoder_layer(y, memory, N, T, S, p, nhead, tgt_mask, memory_mask,
                   tgt_kpm_add, mem_kpm_add):
    E = y.shape[1]

    sa = p["self_attn"]
    o, _ = fused_self_attention(y.reshape(N, T, E), sa["w_qkv"], sa["b_qkv"], nhead,
                                attn_mask=tgt_mask, kpm_add=tgt_kpm_add,
                                return_probs=False)
    y = proj_add_ln(o.reshape(N * T, E), sa["w_out"], sa["b_out"], y,
                    p["norm1_w"], p["norm1_b"])

    ca = p["cross_attn"]
    o, cross = fused_cross_attention(y.reshape(N, T, E), memory,
                                     ca["w_q"], ca["b_q"], ca["w_kv"], ca["b_kv"], nhead,
                                     attn_mask=memory_mask, kpm_add=mem_kpm_add,
                                     return_probs=True)
    y = proj_add_ln(o.reshape(N * T, E), ca["w_out"], ca["b_out"], y,
                    p["norm2_w"], p["norm2_b"])
    y = ffn_add_ln(y, p["w1"], p["b1"], p["w2"], p["b2"],
                   p["norm3_w"], p["norm3_b"])
    return y, cross


def _forward(enc_params, dec_params, src, tgt, src_mask, tgt_mask, memory_mask,
             src_kpm, tgt_kpm, mem_kpm, *, nhead):
    S, N, E = src.shape
    T = tgt.shape[0]

    # single layout change to batch-major (N, L, E), undone once at the end.
    x = jnp.transpose(src.astype(jnp.float32), (1, 0, 2)).reshape(N * S, E)
    y = jnp.transpose(tgt.astype(jnp.float32), (1, 0, 2)).reshape(N * T, E)

    src_kpm_add = _kpm_to_additive(src_kpm)
    tgt_kpm_add = _kpm_to_additive(tgt_kpm)
    mem_kpm_add = _kpm_to_additive(mem_kpm)

    enc_attn = []
    for p in enc_params:
        x, a = _encoder_layer(x, N, S, p, nhead, src_mask, src_kpm_add)
        enc_attn.append(a)
    memory = x.reshape(N, S, E)

    dec_attn = []
    for p in dec_params:
        y, a = _decoder_layer(y, memory, N, T, S, p, nhead,
                              tgt_mask, memory_mask, tgt_kpm_add, mem_kpm_add)
        dec_attn.append(a)

    output = jnp.transpose(y.reshape(N, T, E), (1, 0, 2))
    return output, jnp.stack(dec_attn), jnp.stack(enc_attn)


# --------------------------------------------------------------------------- #
# Parameter preprocessing (done ONCE at construction: transposes, packing, bf16
# weight cast, and folding the 1/sqrt(Dh) softmax scale into the q projection).
# --------------------------------------------------------------------------- #
def _prep_mha(p, nhead):
    E = p["out_proj_weight"].shape[0]
    Dh = E // nhead
    scale = 1.0 / math.sqrt(Dh)
    w_in = jnp.asarray(p["in_proj_weight"], jnp.float32)   # (3E, E)
    b_in = jnp.asarray(p["in_proj_bias"], jnp.float32)     # (3E,)
    w_q = w_in[:E] * scale
    b_q = b_in[:E] * scale
    w_kv = w_in[E:]
    b_kv = b_in[E:]
    return {
        "w_qkv": jnp.transpose(jnp.concatenate([w_q, w_kv], axis=0)).astype(jnp.bfloat16),
        "b_qkv": jnp.concatenate([b_q, b_kv]).reshape(1, 3 * E),
        "w_q": jnp.transpose(w_q).astype(jnp.bfloat16),
        "b_q": b_q.reshape(1, E),
        "w_kv": jnp.transpose(w_kv).astype(jnp.bfloat16),
        "b_kv": b_kv.reshape(1, 2 * E),
        "w_out": jnp.transpose(
            jnp.asarray(p["out_proj_weight"], jnp.float32)).astype(jnp.bfloat16),
        "b_out": jnp.asarray(p["out_proj_bias"], jnp.float32),
    }


def _prep_common_ffn(p):
    return {
        "w1": jnp.transpose(jnp.asarray(p["linear1_w"], jnp.float32)).astype(jnp.bfloat16),
        "b1": jnp.asarray(p["linear1_b"], jnp.float32),
        "w2": jnp.transpose(jnp.asarray(p["linear2_w"], jnp.float32)).astype(jnp.bfloat16),
        "b2": jnp.asarray(p["linear2_b"], jnp.float32),
    }


def _prep_encoder_layer(p, nhead):
    out = {"attn": _prep_mha(p["self_attn"], nhead)}
    out.update(_prep_common_ffn(p))
    for k in ("norm1_w", "norm1_b", "norm2_w", "norm2_b"):
        out[k] = jnp.asarray(p[k], jnp.float32)
    return out


def _prep_decoder_layer(p, nhead):
    out = {
        "self_attn": _prep_mha(p["self_attn"], nhead),
        "cross_attn": _prep_mha(p["cross_attn"], nhead),
    }
    out.update(_prep_common_ffn(p))
    for k in ("norm1_w", "norm1_b", "norm2_w", "norm2_b", "norm3_w", "norm3_b"):
        out[k] = jnp.asarray(p[k], jnp.float32)
    return out


# --------------------------------------------------------------------------- #
# TransformerCustom wrapper (same forward signature / return tuple)
# --------------------------------------------------------------------------- #
class TransformerCustomPallas:
    def __init__(self, d_model, nhead, encoder_layers, decoder_layers):
        _probe_single_buffer()   # set the Buffered(1) capability flag eagerly (outside jit)
        self.d_model = d_model
        self.nhead = nhead
        self.enc_params = [_prep_encoder_layer(p, nhead) for p in encoder_layers]
        self.dec_params = [_prep_decoder_layer(p, nhead) for p in decoder_layers]
        self._fwd = jax.jit(functools.partial(_forward, nhead=nhead))

    def __call__(self, src, tgt, src_mask=None, tgt_mask=None, memory_mask=None,
                 src_key_padding_mask=None, tgt_key_padding_mask=None,
                 memory_key_padding_mask=None):
        if src.shape[1] != tgt.shape[1]:
            raise RuntimeError("the batch number of src and tgt must be equal")
        if src.shape[2] != self.d_model or tgt.shape[2] != self.d_model:
            raise RuntimeError("the feature number of src and tgt must be equal to d_model")
        return self._fwd(self.enc_params, self.dec_params, src, tgt,
                         src_mask, tgt_mask, memory_mask,
                         src_key_padding_mask, tgt_key_padding_mask,
                         memory_key_padding_mask)


# --------------------------------------------------------------------------- #
# Deterministic parameter construction (xavier_uniform for dim>1, zeros for bias)
# --------------------------------------------------------------------------- #
def xavier_uniform(key, shape):
    fan_out, fan_in = shape
    limit = math.sqrt(6.0 / (fan_in + fan_out))
    return jax.random.uniform(key, shape, jnp.float32, -limit, limit)


def make_mha_params(key, d_model):
    k1, k2 = jax.random.split(key)
    return {
        "in_proj_weight": xavier_uniform(k1, (3 * d_model, d_model)),
        "in_proj_bias": jnp.zeros((3 * d_model,), jnp.float32),
        "out_proj_weight": xavier_uniform(k2, (d_model, d_model)),
        "out_proj_bias": jnp.zeros((d_model,), jnp.float32),
    }


def make_encoder_layer_params(key, d_model, dim_ff):
    k1, k2, k3 = jax.random.split(key, 3)
    return {
        "self_attn": make_mha_params(k1, d_model),
        "linear1_w": xavier_uniform(k2, (dim_ff, d_model)),
        "linear1_b": jnp.zeros((dim_ff,), jnp.float32),
        "linear2_w": xavier_uniform(k3, (d_model, dim_ff)),
        "linear2_b": jnp.zeros((d_model,), jnp.float32),
        "norm1_w": jnp.ones((d_model,), jnp.float32),
        "norm1_b": jnp.zeros((d_model,), jnp.float32),
        "norm2_w": jnp.ones((d_model,), jnp.float32),
        "norm2_b": jnp.zeros((d_model,), jnp.float32),
    }


def make_decoder_layer_params(key, d_model, dim_ff):
    k1, k2, k3, k4 = jax.random.split(key, 4)
    return {
        "self_attn": make_mha_params(k1, d_model),
        "cross_attn": make_mha_params(k2, d_model),
        "linear1_w": xavier_uniform(k3, (dim_ff, d_model)),
        "linear1_b": jnp.zeros((dim_ff,), jnp.float32),
        "linear2_w": xavier_uniform(k4, (d_model, dim_ff)),
        "linear2_b": jnp.zeros((d_model,), jnp.float32),
        "norm1_w": jnp.ones((d_model,), jnp.float32),
        "norm1_b": jnp.zeros((d_model,), jnp.float32),
        "norm2_w": jnp.ones((d_model,), jnp.float32),
        "norm2_b": jnp.zeros((d_model,), jnp.float32),
        "norm3_w": jnp.ones((d_model,), jnp.float32),
        "norm3_b": jnp.zeros((d_model,), jnp.float32),
    }


# --------------------------------------------------------------------------- #
if __name__ == "__main__":
    # Small config consistent with the module's (S, N, E) convention.
    d_model, nhead, dim_ff = 32, 4, 64
    num_enc_layers, num_dec_layers = 2, 2
    S, T, N = 8, 8, 2

    key = jax.random.PRNGKey(0)
    k_src, k_tgt, k_enc, k_dec = jax.random.split(key, 4)

    enc_keys = jax.random.split(k_enc, num_enc_layers)
    dec_keys = jax.random.split(k_dec, num_dec_layers)
    encoder_layers = [make_encoder_layer_params(k, d_model, dim_ff) for k in enc_keys]
    decoder_layers = [make_decoder_layer_params(k, d_model, dim_ff) for k in dec_keys]

    model = TransformerCustomPallas(d_model, nhead, encoder_layers, decoder_layers)

    src = jax.random.normal(k_src, (S, N, d_model), jnp.float32)
    tgt = jax.random.normal(k_tgt, (T, N, d_model), jnp.float32)

    # Causal additive mask for the decoder self-attention (-inf above the diagonal).
    tgt_mask = jnp.where(jnp.triu(jnp.ones((T, T), jnp.float32), k=1) > 0,
                         -jnp.inf, 0.0)

    output, attn_dec, attn_enc = model(src, tgt, tgt_mask=tgt_mask)
    output = jax.block_until_ready(output)
    attn_dec = jax.block_until_ready(attn_dec)
    attn_enc = jax.block_until_ready(attn_enc)

    assert output.shape == (T, N, d_model)
    assert attn_enc.shape == (num_enc_layers, N, S, S)
    assert attn_dec.shape == (num_dec_layers, N, T, S)
    assert bool(jnp.all(jnp.isfinite(output)))
    assert bool(jnp.all(jnp.isfinite(attn_enc)))
    assert bool(jnp.all(jnp.isfinite(attn_dec)))
    print("KERNEL_OK")
</pallas_src>

<mosaic_0001>
module attributes {stable_mosaic.version = 11 : i64} {
  func.func @_k(%arg0: i32, %arg1: memref<8x128xf32, #tpu.memory_space<vmem>>, %arg2: memref<8x128xf32, #tpu.memory_space<vmem>>) attributes {dimension_semantics = [#tpu.dimension_semantics<arbitrary>], iteration_bounds = array<i64: 1>, scalar_prefetch = 0 : i64, scratch_operands = 0 : i64, tpu.core_type = #tpu.core_type<tc>, window_params = [{pipeline_mode = #tpu.pipeline_mode<synchronous>, transform_indices = @transform_0, window_bounds = array<i64: 8, 128>}, {pipeline_mode = #tpu.pipeline_mode<synchronous>, transform_indices = @transform_1, window_bounds = array<i64: 8, 128>}]} {
    %c0 = arith.constant 0 : index
    %c0_0 = arith.constant 0 : index
    %0 = vector.load %arg1[%c0, %c0_0] : memref<8x128xf32, #tpu.memory_space<vmem>>, vector<8x128xf32>
    %cst = arith.constant 1.000000e+00 : f32
    %1 = vector.broadcast %cst : f32 to vector<8x128xf32>
    %2 = arith.addf %0, %1 : vector<8x128xf32>
    %c0_1 = arith.constant 0 : index
    %c0_2 = arith.constant 0 : index
    %3 = vector.load %arg2[%c0_1, %c0_2] : memref<8x128xf32, #tpu.memory_space<vmem>>, vector<8x128xf32>
    tpu.vector_store %arg2[%c0_1, %c0_2], %2 {strides = array<i32>} : memref<8x128xf32, #tpu.memory_space<vmem>>, vector<8x128xf32>,
    return
  }
  func.func @transform_0(%arg0: i32) -> (i32, i32) {
    %c0_i32 = arith.constant 0 : i32
    %c0_i32_0 = arith.constant 0 : i32
    %c0_i32_1 = arith.constant 0 : i32
    return %c0_i32, %c0_i32_0 : i32, i32
  }
  func.func @transform_1(%arg0: i32) -> (i32, i32) {
    %c0_i32 = arith.constant 0 : i32
    %c0_i32_0 = arith.constant 0 : i32
    %c0_i32_1 = arith.constant 0 : i32
    return %c0_i32, %c0_i32_0 : i32, i32
  }
}

module attributes {stable_mosaic.version = 11 : i64} {
  func.func @_proj_add_ln_kernel(%arg0: i32, %arg1: memref<16x32xf32, #tpu.memory_space<vmem>>, %arg2: memref<32x32xbf16, #tpu.memory_space<vmem>>, %arg3: memref<1x32xf32, #tpu.memory_space<vmem>>, %arg4: memref<16x32xf32, #tpu.memory_space<vmem>>, %arg5: memref<1x32xf32, #tpu.memory_space<vmem>>, %arg6: memref<1x32xf32, #tpu.memory_space<vmem>>, %arg7: memref<16x32xf32, #tpu.memory_space<vmem>>) attributes {dimension_semantics = [#tpu.dimension_semantics<parallel>], iteration_bounds = array<i64: 1>, scalar_prefetch = 0 : i64, scratch_operands = 0 : i64, tpu.core_type = #tpu.core_type<tc>, window_params = [{transform_indices = @transform_0, window_bounds = array<i64: 16, 32>}, {pipeline_mode = #tpu.pipeline_mode<synchronous>, transform_indices = @transform_1, window_bounds = array<i64: 32, 32>}, {pipeline_mode = #tpu.pipeline_mode<synchronous>, transform_indices = @transform_2, window_bounds = array<i64: 1, 32>}, {transform_indices = @transform_3, window_bounds = array<i64: 16, 32>}, {pipeline_mode = #tpu.pipeline_mode<synchronous>, transform_indices = @transform_4, window_bounds = array<i64: 1, 32>}, {pipeline_mode = #tpu.pipeline_mode<synchronous>, transform_indices = @transform_5, window_bounds = array<i64: 1, 32>}, {transform_indices = @transform_6, window_bounds = array<i64: 16, 32>}]} {
    %c0 = arith.constant 0 : index
    %c0_0 = arith.constant 0 : index
    %0 = vector.load %arg1[%c0, %c0_0] : memref<16x32xf32, #tpu.memory_space<vmem>>, vector<16x32xf32>
    %1 = arith.truncf %0 : vector<16x32xf32> to vector<16x32xbf16>
    %c0_1 = arith.constant 0 : index
    %c0_2 = arith.constant 0 : index
    %2 = vector.load %arg2[%c0_1, %c0_2] : memref<32x32xbf16, #tpu.memory_space<vmem>>, vector<32x32xbf16>
    %cst = arith.constant dense<0.000000e+00> : vector<16x32xf32>
    %3 = tpu.matmul %1, %2, %cst {dimension_numbers = #tpu.dot_dimension_numbers<[1], [0], [0], [1], [0, 0, 1, 1], [], []>} : vector<16x32xbf16>, vector<32x32xbf16>, vector<16x32xf32> -> vector<16x32xf32>
    %c0_3 = arith.constant 0 : index
    %c0_4 = arith.constant 0 : index
    %4 = vector.load %arg3[%c0_3, %c0_4] : memref<1x32xf32, #tpu.memory_space<vmem>>, vector<1x32xf32>
    %5 = vector.broadcast %4 : vector<1x32xf32> to vector<16x32xf32>
    %6 = arith.addf %3, %5 : vector<16x32xf32>
    %c0_5 = arith.constant 0 : index
    %c0_6 = arith.constant 0 : index
    %7 = vector.load %arg4[%c0_5, %c0_6] : memref<16x32xf32, #tpu.memory_space<vmem>>, vector<16x32xf32>
    %8 = arith.addf %7, %6 : vector<16x32xf32>
    %cst_7 = arith.constant dense<0.000000e+00> : vector<16xf32>
    %9 = vector.multi_reduction <add>, %8, %cst_7 [1] : vector<16x32xf32> to vector<16xf32>
    %10 = vector.shape_cast %9 : vector<16xf32> to vector<16x1xf32>
    %cst_8 = arith.constant 3.200000e+01 : f32
    %11 = vector.broadcast %cst_8 : f32 to vector<16x1xf32>
    %12 = arith.divf %10, %11 : vector<16x1xf32>
    %13 = vector.broadcast %12 : vector<16x1xf32> to vector<16x32xf32>
    %14 = arith.subf %8, %13 : vector<16x32xf32>
    %15 = arith.mulf %14, %14 : vector<16x32xf32>
    %cst_9 = arith.constant dense<0.000000e+00> : vector<16xf32>
    %16 = vector.multi_reduction <add>, %15, %cst_9 [1] : vector<16x32xf32> to vector<16xf32>
    %17 = vector.shape_cast %16 : vector<16xf32> to vector<16x1xf32>
    %cst_10 = arith.constant 3.200000e+01 : f32
    %18 = vector.broadcast %cst_10 : f32 to vector<16x1xf32>
    %19 = arith.divf %17, %18 : vector<16x1xf32>
    %20 = vector.broadcast %12 : vector<16x1xf32> to vector<16x32xf32>
    %21 = arith.subf %8, %20 : vector<16x32xf32>
    %cst_11 = arith.constant 9.99999974E-6 : f32
    %22 = vector.broadcast %cst_11 : f32 to vector<16x1xf32>
    %23 = arith.addf %19, %22 : vector<16x1xf32>
    %24 = math.rsqrt %23 : vector<16x1xf32>
    %25 = vector.broadcast %24 : vector<16x1xf32> to vector<16x32xf32>
    %26 = arith.mulf %21, %25 : vector<16x32xf32>
    %c0_12 = arith.constant 0 : index
    %c0_13 = arith.constant 0 : index
    %27 = vector.load %arg5[%c0_12, %c0_13] : memref<1x32xf32, #tpu.memory_space<vmem>>, vector<1x32xf32>
    %28 = vector.broadcast %27 : vector<1x32xf32> to vector<16x32xf32>
    %29 = arith.mulf %26, %28 : vector<16x32xf32>
    %c0_14 = arith.constant 0 : index
    %c0_15 = arith.constant 0 : index
    %30 = vector.load %arg6[%c0_14, %c0_15] : memref<1x32xf32, #tpu.memory_space<vmem>>, vector<1x32xf32>
    %31 = vector.broadcast %30 : vector<1x32xf32> to vector<16x32xf32>
    %32 = arith.addf %29, %31 : vector<16x32xf32>
    %c0_16 = arith.constant 0 : index
    %c0_17 = arith.constant 0 : index
    %33 = vector.load %arg7[%c0_16, %c0_17] : memref<16x32xf32, #tpu.memory_space<vmem>>, vector<16x32xf32>
    tpu.vector_store %arg7[%c0_16, %c0_17], %32 {strides = array<i32>} : memref<16x32xf32, #tpu.memory_space<vmem>>, vector<16x32xf32>,
    return
  }
  func.func @transform_0(%arg0: i32) -> (i32, i32) {
    %c0_i32 = arith.constant 0 : i32
    %c0_i32_0 = arith.constant 0 : i32
    return %arg0, %c0_i32 : i32, i32
  }
  func.func @transform_1(%arg0: i32) -> (i32, i32) {
    %c0_i32 = arith.constant 0 : i32
    %c0_i32_0 = arith.constant 0 : i32
    %c0_i32_1 = arith.constant 0 : i32
    return %c0_i32, %c0_i32_0 : i32, i32
  }
  func.func @transform_2(%arg0: i32) -> (i32, i32) {
    %c0_i32 = arith.constant 0 : i32
    %c0_i32_0 = arith.constant 0 : i32
    %c0_i32_1 = arith.constant 0 : i32
    return %c0_i32, %c0_i32_0 : i32, i32
  }
  func.func @transform_3(%arg0: i32) -> (i32, i32) {
    %c0_i32 = arith.constant 0 : i32
    %c0_i32_0 = arith.constant 0 : i32
    return %arg0, %c0_i32 : i32, i32
  }
  func.func @transform_4(%arg0: i32) -> (i32, i32) {
    %c0_i32 = arith.constant 0 : i32
    %c0_i32_0 = arith.constant 0 : i32
    %c0_i32_1 = arith.constant 0 : i32
    return %c0_i32, %c0_i32_0 : i32, i32
  }
  func.func @transform_5(%arg0: i32) -> (i32, i32) {
    %c0_i32 = arith.constant 0 : i32
    %c0_i32_0 = arith.constant 0 : i32
    %c0_i32_1 = arith.constant 0 : i32
    return %c0_i32, %c0_i32_0 : i32, i32
  }
  func.func @transform_6(%arg0: i32) -> (i32, i32) {
    %c0_i32 = arith.constant 0 : i32
    %c0_i32_0 = arith.constant 0 : i32
    return %arg0, %c0_i32 : i32, i32
  }
}

module attributes {stable_mosaic.version = 11 : i64} {
  func.func @_attn_kernel(%arg0: i32, %arg1: memref<1x8x32xf32, #tpu.memory_space<vmem>>, %arg2: memref<32x96xbf16, #tpu.memory_space<vmem>>, %arg3: memref<1x96xf32, #tpu.memory_space<vmem>>, %arg4: memref<1x8x32xf32, #tpu.memory_space<vmem>>, %arg5: memref<1x8x8xf32, #tpu.memory_space<vmem>>) attributes {dimension_semantics = [#tpu.dimension_semantics<parallel>], iteration_bounds = array<i64: 2>, scalar_prefetch = 0 : i64, scratch_operands = 0 : i64, tpu.core_type = #tpu.core_type<tc>, window_params = [{transform_indices = @transform_0, window_bounds = array<i64: 1, 8, 32>}, {pipeline_mode = #tpu.pipeline_mode<synchronous>, transform_indices = @transform_1, window_bounds = array<i64: 32, 96>}, {pipeline_mode = #tpu.pipeline_mode<synchronous>, transform_indices = @transform_2, window_bounds = array<i64: 1, 96>}, {transform_indices = @transform_3, window_bounds = array<i64: 1, 8, 32>}, {transform_indices = @transform_4, window_bounds = array<i64: 1, 8, 8>}]} {
    %c0 = arith.constant 0 : index
    %c0_0 = arith.constant 0 : index
    %c0_1 = arith.constant 0 : index
    %0 = vector.load %arg1[%c0, %c0_0, %c0_1] : memref<1x8x32xf32, #tpu.memory_space<vmem>>, vector<1x8x32xf32>
    %1 = vector.shape_cast %0 : vector<1x8x32xf32> to vector<8x32xf32>
    %2 = arith.truncf %1 : vector<8x32xf32> to vector<8x32xbf16>
    %c0_2 = arith.constant 0 : index
    %c0_3 = arith.constant 0 : index
    %3 = vector.load %arg2[%c0_2, %c0_3] : memref<32x96xbf16, #tpu.memory_space<vmem>>, vector<32x96xbf16>
    %cst = arith.constant dense<0.000000e+00> : vector<8x96xf32>
    %4 = tpu.matmul %2, %3, %cst {dimension_numbers = #tpu.dot_dimension_numbers<[1], [0], [0], [1], [0, 0, 1, 1], [], []>} : vector<8x32xbf16>, vector<32x96xbf16>, vector<8x96xf32> -> vector<8x96xf32>
    %c0_4 = arith.constant 0 : index
    %c0_5 = arith.constant 0 : index
    %5 = vector.load %arg3[%c0_4, %c0_5] : memref<1x96xf32, #tpu.memory_space<vmem>>, vector<1x96xf32>
    %6 = vector.broadcast %5 : vector<1x96xf32> to vector<8x96xf32>
    %7 = arith.addf %4, %6 : vector<8x96xf32>
    %8 = arith.truncf %7 : vector<8x96xf32> to vector<8x96xbf16>
    %9 = vector.extract_strided_slice %8 {offsets = [0, 0], sizes = [8, 32], strides = [1, 1]} : vector<8x96xbf16> to vector<8x32xbf16>
    %10 = vector.extract_strided_slice %8 {offsets = [0, 32], sizes = [8, 32], strides = [1, 1]} : vector<8x96xbf16> to vector<8x32xbf16>
    %11 = vector.extract_strided_slice %8 {offsets = [0, 64], sizes = [8, 32], strides = [1, 1]} : vector<8x96xbf16> to vector<8x32xbf16>
    %12 = vector.extract_strided_slice %9 {offsets = [0, 0], sizes = [8, 8], strides = [1, 1]} : vector<8x32xbf16> to vector<8x8xbf16>
    %13 = vector.extract_strided_slice %10 {offsets = [0, 0], sizes = [8, 8], strides = [1, 1]} : vector<8x32xbf16> to vector<8x8xbf16>
    %cst_6 = arith.constant dense<0.000000e+00> : vector<8x8xf32>
    %14 = tpu.matmul %12, %13, %cst_6 {dimension_numbers = #tpu.dot_dimension_numbers<[1], [1], [0], [0], [0, 0, 1, 0], [], []>} : vector<8x8xbf16>, vector<8x8xbf16>, vector<8x8xf32> -> vector<8x8xf32>
    %cst_7 = arith.constant dense<0xFF800000> : vector<8xf32>
    %15 = vector.multi_reduction <maximumf>, %14, %cst_7 [1] : vector<8x8xf32> to vector<8xf32>
    %16 = vector.shape_cast %15 : vector<8xf32> to vector<8x1xf32>
    %17 = vector.broadcast %16 : vector<8x1xf32> to vector<8x8xf32>
    %18 = arith.subf %14, %17 : vector<8x8xf32>
    %19 = math.exp %18 : vector<8x8xf32>
    %cst_8 = arith.constant dense<0.000000e+00> : vector<8xf32>
    %20 = vector.multi_reduction <add>, %19, %cst_8 [1] : vector<8x8xf32> to vector<8xf32>
    %21 = vector.shape_cast %20 : vector<8xf32> to vector<8x1xf32>
    %22 = vector.broadcast %21 : vector<8x1xf32> to vector<8x8xf32>
    %23 = arith.divf %19, %22 : vector<8x8xf32>
    %24 = arith.truncf %23 : vector<8x8xf32> to vector<8x8xbf16>
    %25 = vector.extract_strided_slice %11 {offsets = [0, 0], sizes = [8, 8], strides = [1, 1]} : vector<8x32xbf16> to vector<8x8xbf16>
    %cst_9 = arith.constant dense<0.000000e+00> : vector<8x8xf32>
    %26 = tpu.matmul %24, %25, %cst_9 {dimension_numbers = #tpu.dot_dimension_numbers<[1], [0], [0], [1], [0, 0, 1, 1], [], []>} : vector<8x8xbf16>, vector<8x8xbf16>, vector<8x8xf32> -> vector<8x8xf32>
    %c0_10 = arith.constant 0 : index
    %c0_11 = arith.constant 0 : index
    %c0_12 = arith.constant 0 : index
    %27 = vector.load %arg4[%c0_10, %c0_11, %c0_12] : memref<1x8x32xf32, #tpu.memory_space<vmem>>, vector<1x8x8xf32>
    %28 = vector.shape_cast %27 : vector<1x8x8xf32> to vector<8x8xf32>
    %29 = vector.shape_cast %26 : vector<8x8xf32> to vector<1x8x8xf32>
    tpu.vector_store %arg4[%c0_10, %c0_11, %c0_12], %29 {strides = array<i32>} : memref<1x8x32xf32, #tpu.memory_space<vmem>>, vector<1x8x8xf32>,
    %30 = vector.extract_strided_slice %9 {offsets = [0, 8], sizes = [8, 8], strides = [1, 1]} : vector<8x32xbf16> to vector<8x8xbf16>
    %31 = vector.extract_strided_slice %10 {offsets = [0, 8], sizes = [8, 8], strides = [1, 1]} : vector<8x32xbf16> to vector<8x8xbf16>
    %cst_13 = arith.constant dense<0.000000e+00> : vector<8x8xf32>
    %32 = tpu.matmul %30, %31, %cst_13 {dimension_numbers = #tpu.dot_dimension_numbers<[1], [1], [0], [0], [0, 0, 1, 0], [], []>} : vector<8x8xbf16>, vector<8x8xbf16>, vector<8x8xf32> -> vector<8x8xf32>
    %cst_14 = arith.constant dense<0xFF800000> : vector<8xf32>
    %33 = vector.multi_reduction <maximumf>, %32, %cst_14 [1] : vector<8x8xf32> to vector<8xf32>
    %34 = vector.shape_cast %33 : vector<8xf32> to vector<8x1xf32>
    %35 = vector.broadcast %34 : vector<8x1xf32> to vector<8x8xf32>
    %36 = arith.subf %32, %35 : vector<8x8xf32>
    %37 = math.exp %36 : vector<8x8xf32>
    %cst_15 = arith.constant dense<0.000000e+00> : vector<8xf32>
    %38 = vector.multi_reduction <add>, %37, %cst_15 [1] : vector<8x8xf32> to vector<8xf32>
    %39 = vector.shape_cast %38 : vector<8xf32> to vector<8x1xf32>
    %40 = vector.broadcast %39 : vector<8x1xf32> to vector<8x8xf32>
    %41 = arith.divf %37, %40 : vector<8x8xf32>
    %42 = arith.truncf %41 : vector<8x8xf32> to vector<8x8xbf16>
    %43 = vector.extract_strided_slice %11 {offsets = [0, 8], sizes = [8, 8], strides = [1, 1]} : vector<8x32xbf16> to vector<8x8xbf16>
    %cst_16 = arith.constant dense<0.000000e+00> : vector<8x8xf32>
    %44 = tpu.matmul %42, %43, %cst_16 {dimension_numbers = #tpu.dot_dimension_numbers<[1], [0], [0], [1], [0, 0, 1, 1], [], []>} : vector<8x8xbf16>, vector<8x8xbf16>, vector<8x8xf32> -> vector<8x8xf32>
    %c0_17 = arith.constant 0 : index
    %c0_18 = arith.constant 0 : index
    %c8 = arith.constant 8 : index
    %45 = vector.load %arg4[%c0_17, %c0_18, %c8] : memref<1x8x32xf32, #tpu.memory_space<vmem>>, vector<1x8x8xf32>
    %46 = vector.shape_cast %45 : vector<1x8x8xf32> to vector<8x8xf32>
    %47 = vector.shape_cast %44 : vector<8x8xf32> to vector<1x8x8xf32>
    tpu.vector_store %arg4[%c0_17, %c0_18, %c8], %47 {strides = array<i32>} : memref<1x8x32xf32, #tpu.memory_space<vmem>>, vector<1x8x8xf32>,
    %48 = arith.addf %23, %41 : vector<8x8xf32>
    %49 = vector.extract_strided_slice %9 {offsets = [0, 16], sizes = [8, 8], strides = [1, 1]} : vector<8x32xbf16> to vector<8x8xbf16>
    %50 = vector.extract_strided_slice %10 {offsets = [0, 16], sizes = [8, 8], strides = [1, 1]} : vector<8x32xbf16> to vector<8x8xbf16>
    %cst_19 = arith.constant dense<0.000000e+00> : vector<8x8xf32>
    %51 = tpu.matmul %49, %50, %cst_19 {dimension_numbers = #tpu.dot_dimension_numbers<[1], [1], [0], [0], [0, 0, 1, 0], [], []>} : vector<8x8xbf16>, vector<8x8xbf16>, vector<8x8xf32> -> vector<8x8xf32>
    %cst_20 = arith.constant dense<0xFF800000> : vector<8xf32>
    %52 = vector.multi_reduction <maximumf>, %51, %cst_20 [1] : vector<8x8xf32> to vector<8xf32>
    %53 = vector.shape_cast %52 : vector<8xf32> to vector<8x1xf32>
    %54 = vector.broadcast %53 : vector<8x1xf32> to vector<8x8xf32>
    %55 = arith.subf %51, %54 : vector<8x8xf32>
    %56 = math.exp %55 : vector<8x8xf32>
    %cst_21 = arith.constant dense<0.000000e+00> : vector<8xf32>
    %57 = vector.multi_reduction <add>, %56, %cst_21 [1] : vector<8x8xf32> to vector<8xf32>
    %58 = vector.shape_cast %57 : vector<8xf32> to vector<8x1xf32>
    %59 = vector.broadcast %58 : vector<8x1xf32> to vector<8x8xf32>
    %60 = arith.divf %56, %59 : vector<8x8xf32>
    %61 = arith.truncf %60 : vector<8x8xf32> to vector<8x8xbf16>
    %62 = vector.extract_strided_slice %11 {offsets = [0, 16], sizes = [8, 8], strides = [1, 1]} : vector<8x32xbf16> to vector<8x8xbf16>
    %cst_22 = arith.constant dense<0.000000e+00> : vector<8x8xf32>
    %63 = tpu.matmul %61, %62, %cst_22 {dimension_numbers = #tpu.dot_dimension_numbers<[1], [0], [0], [1], [0, 0, 1, 1], [], []>} : vector<8x8xbf16>, vector<8x8xbf16>, vector<8x8xf32> -> vector<8x8xf32>
    %c0_23 = arith.constant 0 : index
    %c0_24 = arith.constant 0 : index
    %c16 = arith.constant 16 : index
    %64 = vector.load %arg4[%c0_23, %c0_24, %c16] : memref<1x8x32xf32, #tpu.memory_space<vmem>>, vector<1x8x8xf32>
    %65 = vector.shape_cast %64 : vector<1x8x8xf32> to vector<8x8xf32>
    %66 = vector.shape_cast %63 : vector<8x8xf32> to vector<1x8x8xf32>
    tpu.vector_store %arg4[%c0_23, %c0_24, %c16], %66 {strides = array<i32>} : memref<1x8x32xf32, #tpu.memory_space<vmem>>, vector<1x8x8xf32>,
    %67 = arith.addf %48, %60 : vector<8x8xf32>
    %68 = vector.extract_strided_slice %9 {offsets = [0, 24], sizes = [8, 8], strides = [1, 1]} : vector<8x32xbf16> to vector<8x8xbf16>
    %69 = vector.extract_strided_slice %10 {offsets = [0, 24], sizes = [8, 8], strides = [1, 1]} : vector<8x32xbf16> to vector<8x8xbf16>
    %cst_25 = arith.constant dense<0.000000e+00> : vector<8x8xf32>
    %70 = tpu.matmul %68, %69, %cst_25 {dimension_numbers = #tpu.dot_dimension_numbers<[1], [1], [0], [0], [0, 0, 1, 0], [], []>} : vector<8x8xbf16>, vector<8x8xbf16>, vector<8x8xf32> -> vector<8x8xf32>
    %cst_26 = arith.constant dense<0xFF800000> : vector<8xf32>
    %71 = vector.multi_reduction <maximumf>, %70, %cst_26 [1] : vector<8x8xf32> to vector<8xf32>
    %72 = vector.shape_cast %71 : vector<8xf32> to vector<8x1xf32>
    %73 = vector.broadcast %72 : vector<8x1xf32> to vector<8x8xf32>
    %74 = arith.subf %70, %73 : vector<8x8xf32>
    %75 = math.exp %74 : vector<8x8xf32>
    %cst_27 = arith.constant dense<0.000000e+00> : vector<8xf32>
    %76 = vector.multi_reduction <add>, %75, %cst_27 [1] : vector<8x8xf32> to vector<8xf32>
    %77 = vector.shape_cast %76 : vector<8xf32> to vector<8x1xf32>
    %78 = vector.broadcast %77 : vector<8x1xf32> to vector<8x8xf32>
    %79 = arith.divf %75, %78 : vector<8x8xf32>
    %80 = arith.truncf %79 : vector<8x8xf32> to vector<8x8xbf16>
    %81 = vector.extract_strided_slice %11 {offsets = [0, 24], sizes = [8, 8], strides = [1, 1]} : vector<8x32xbf16> to vector<8x8xbf16>
    %cst_28 = arith.constant dense<0.000000e+00> : vector<8x8xf32>
    %82 = tpu.matmul %80, %81, %cst_28 {dimension_numbers = #tpu.dot_dimension_numbers<[1], [0], [0], [1], [0, 0, 1, 1], [], []>} : vector<8x8xbf16>, vector<8x8xbf16>, vector<8x8xf32> -> vector<8x8xf32>
    %c0_29 = arith.constant 0 : index
    %c0_30 = arith.constant 0 : index
    %c24 = arith.constant 24 : index
    %83 = vector.load %arg4[%c0_29, %c0_30, %c24] : memref<1x8x32xf32, #tpu.memory_space<vmem>>, vector<1x8x8xf32>
    %84 = vector.shape_cast %83 : vector<1x8x8xf32> to vector<8x8xf32>
    %85 = vector.shape_cast %82 : vector<8x8xf32> to vector<1x8x8xf32>
    tpu.vector_store %arg4[%c0_29, %c0_30, %c24], %85 {strides = array<i32>} : memref<1x8x32xf32, #tpu.memory_space<vmem>>, vector<1x8x8xf32>,
    %86 = arith.addf %67, %79 : vector<8x8xf32>
    %cst_31 = arith.constant 2.500000e-01 : f32
    %87 = vector.broadcast %cst_31 : f32 to vector<8x8xf32>
    %88 = arith.mulf %86, %87 : vector<8x8xf32>
    %89 = vector.shape_cast %88 : vector<8x8xf32> to vector<1x8x8xf32>
    %c0_32 = arith.constant 0 : index
    %c0_33 = arith.constant 0 : index
    %c0_34 = arith.constant 0 : index
    %90 = vector.load %arg5[%c0_32, %c0_33, %c0_34] : memref<1x8x8xf32, #tpu.memory_space<vmem>>, vector<1x8x8xf32>
    tpu.vector_store %arg5[%c0_32, %c0_33, %c0_34], %89 {strides = array<i32>} : memref<1x8x8xf32, #tpu.memory_space<vmem>>, vector<1x8x8xf32>,
    return
  }
  func.func @transform_0(%arg0: i32) -> (i32, i32, i32) {
    %c0_i32 = arith.constant 0 : i32
    %c0_i32_0 = arith.constant 0 : i32
    %c0_i32_1 = arith.constant 0 : i32
    return %arg0, %c0_i32, %c0_i32_0 : i32, i32, i32
  }
  func.func @transform_1(%arg0: i32) -> (i32, i32) {
    %c0_i32 = arith.constant 0 : i32
    %c0_i32_0 = arith.constant 0 : i32
    %c0_i32_1 = arith.constant 0 : i32
    return %c0_i32, %c0_i32_0 : i32, i32
  }
  func.func @transform_2(%arg0: i32) -> (i32, i32) {
    %c0_i32 = arith.constant 0 : i32
    %c0_i32_0 = arith.constant 0 : i32
    %c0_i32_1 = arith.constant 0 : i32
    return %c0_i32, %c0_i32_0 : i32, i32
  }
  func.func @transform_3(%arg0: i32) -> (i32, i32, i32) {
    %c0_i32 = arith.constant 0 : i32
    %c0_i32_0 = arith.constant 0 : i32
    %c0_i32_1 = arith.constant 0 : i32
    return %arg0, %c0_i32, %c0_i32_0 : i32, i32, i32
  }
  func.func @transform_4(%arg0: i32) -> (i32, i32, i32) {
    %c0_i32 = arith.constant 0 : i32
    %c0_i32_0 = arith.constant 0 : i32
    %c0_i32_1 = arith.constant 0 : i32
    return %arg0, %c0_i32, %c0_i32_0 : i32, i32, i32
  }
}

module attributes {stable_mosaic.version = 11 : i64} {
  func.func @_ffn_add_ln_kernel(%arg0: i32, %arg1: i32, %arg2: memref<16x32xf32, #tpu.memory_space<vmem>>, %arg3: memref<32x64xbf16, #tpu.memory_space<vmem>>, %arg4: memref<1x64xf32, #tpu.memory_space<vmem>>, %arg5: memref<64x32xbf16, #tpu.memory_space<vmem>>, %arg6: memref<1x32xf32, #tpu.memory_space<vmem>>, %arg7: memref<1x32xf32, #tpu.memory_space<vmem>>, %arg8: memref<1x32xf32, #tpu.memory_space<vmem>>, %arg9: memref<16x32xf32, #tpu.memory_space<vmem>>, %arg10: memref<16x32xf32, #tpu.memory_space<vmem>>) attributes {dimension_semantics = [#tpu.dimension_semantics<parallel>, #tpu.dimension_semantics<arbitrary>], iteration_bounds = array<i64: 1, 1>, scalar_prefetch = 0 : i64, scratch_operands = 1 : i64, tpu.core_type = #tpu.core_type<tc>, window_params = [{transform_indices = @transform_0, window_bounds = array<i64: 16, 32>}, {transform_indices = @transform_1, window_bounds = array<i64: 32, 64>}, {transform_indices = @transform_2, window_bounds = array<i64: 1, 64>}, {transform_indices = @transform_3, window_bounds = array<i64: 64, 32>}, {pipeline_mode = #tpu.pipeline_mode<synchronous>, transform_indices = @transform_4, window_bounds = array<i64: 1, 32>}, {pipeline_mode = #tpu.pipeline_mode<synchronous>, transform_indices = @transform_5, window_bounds = array<i64: 1, 32>}, {pipeline_mode = #tpu.pipeline_mode<synchronous>, transform_indices = @transform_6, window_bounds = array<i64: 1, 32>}, {transform_indices = @transform_7, window_bounds = array<i64: 16, 32>}]} {
    %c0_i32 = arith.constant 0 : i32
    %0 = arith.cmpi eq, %arg1, %c0_i32 : i32
    %1 = arith.extui %0 : i1 to i32
    %c0_i32_0 = arith.constant 0 : i32
    %2 = arith.cmpi ne, %1, %c0_i32_0 : i32
    scf.if %2 {
      %cst_16 = arith.constant 0.000000e+00 : f32
      %21 = vector.broadcast %cst_16 : f32 to vector<16x32xf32>
      %c0_17 = arith.constant 0 : index
      %c0_18 = arith.constant 0 : index
      %22 = vector.load %arg10[%c0_17, %c0_18] : memref<16x32xf32, #tpu.memory_space<vmem>>, vector<16x32xf32>
      tpu.vector_store %arg10[%c0_17, %c0_18], %21 {strides = array<i32>} : memref<16x32xf32, #tpu.memory_space<vmem>>, vector<16x32xf32>,
    } else {
    }
    %c0 = arith.constant 0 : index
    %c0_1 = arith.constant 0 : index
    %3 = vector.load %arg2[%c0, %c0_1] : memref<16x32xf32, #tpu.memory_space<vmem>>, vector<16x32xf32>
    %4 = arith.truncf %3 : vector<16x32xf32> to vector<16x32xbf16>
    %c0_2 = arith.constant 0 : index
    %c0_3 = arith.constant 0 : index
    %5 = vector.load %arg3[%c0_2, %c0_3] : memref<32x64xbf16, #tpu.memory_space<vmem>>, vector<32x64xbf16>
    %cst = arith.constant dense<0.000000e+00> : vector<16x64xf32>
    %6 = tpu.matmul %4, %5, %cst {dimension_numbers = #tpu.dot_dimension_numbers<[1], [0], [0], [1], [0, 0, 1, 1], [], []>} : vector<16x32xbf16>, vector<32x64xbf16>, vector<16x64xf32> -> vector<16x64xf32>
    %c0_4 = arith.constant 0 : index
    %c0_5 = arith.constant 0 : index
    %7 = vector.load %arg4[%c0_4, %c0_5] : memref<1x64xf32, #tpu.memory_space<vmem>>, vector<1x64xf32>
    %8 = vector.broadcast %7 : vector<1x64xf32> to vector<16x64xf32>
    %9 = arith.addf %6, %8 : vector<16x64xf32>
    %cst_6 = arith.constant 0.000000e+00 : f32
    %10 = vector.broadcast %cst_6 : f32 to vector<16x64xf32>
    %11 = arith.maximumf %9, %10 : vector<16x64xf32>
    %c0_7 = arith.constant 0 : index
    %c0_8 = arith.constant 0 : index
    %12 = vector.load %arg10[%c0_7, %c0_8] : memref<16x32xf32, #tpu.memory_space<vmem>>, vector<16x32xf32>
    %13 = arith.truncf %11 : vector<16x64xf32> to vector<16x64xbf16>
    %c0_9 = arith.constant 0 : index
    %c0_10 = arith.constant 0 : index
    %14 = vector.load %arg5[%c0_9, %c0_10] : memref<64x32xbf16, #tpu.memory_space<vmem>>, vector<64x32xbf16>
    %cst_11 = arith.constant dense<0.000000e+00> : vector<16x32xf32>
    %15 = tpu.matmul %13, %14, %cst_11 {dimension_numbers = #tpu.dot_dimension_numbers<[1], [0], [0], [1], [0, 0, 1, 1], [], []>} : vector<16x64xbf16>, vector<64x32xbf16>, vector<16x32xf32> -> vector<16x32xf32>
    %16 = arith.addf %12, %15 : vector<16x32xf32>
    %c0_12 = arith.constant 0 : index
    %c0_13 = arith.constant 0 : index
    %17 = vector.load %arg10[%c0_12, %c0_13] : memref<16x32xf32, #tpu.memory_space<vmem>>, vector<16x32xf32>
    tpu.vector_store %arg10[%c0_12, %c0_13], %16 {strides = array<i32>} : memref<16x32xf32, #tpu.memory_space<vmem>>, vector<16x32xf32>,
    %c0_i32_14 = arith.constant 0 : i32
    %18 = arith.cmpi eq, %arg1, %c0_i32_14 : i32
    %19 = arith.extui %18 : i1 to i32
    %c0_i32_15 = arith.constant 0 : i32
    %20 = arith.cmpi ne, %19, %c0_i32_15 : i32
    scf.if %20 {
      %c0_16 = arith.constant 0 : index
      %c0_17 = arith.constant 0 : index
      %21 = vector.load %arg2[%c0_16, %c0_17] : memref<16x32xf32, #tpu.memory_space<vmem>>, vector<16x32xf32>
      %c0_18 = arith.constant 0 : index
      %c0_19 = arith.constant 0 : index
      %22 = vector.load %arg10[%c0_18, %c0_19] : memref<16x32xf32, #tpu.memory_space<vmem>>, vector<16x32xf32>
      %23 = arith.addf %21, %22 : vector<16x32xf32>
      %c0_20 = arith.constant 0 : index
      %c0_21 = arith.constant 0 : index
      %24 = vector.load %arg6[%c0_20, %c0_21] : memref<1x32xf32, #tpu.memory_space<vmem>>, vector<1x32xf32>
      %25 = vector.broadcast %24 : vector<1x32xf32> to vector<16x32xf32>
      %26 = arith.addf %23, %25 : vector<16x32xf32>
      %cst_22 = arith.constant dense<0.000000e+00> : vector<16xf32>
      %27 = vector.multi_reduction <add>, %26, %cst_22 [1] : vector<16x32xf32> to vector<16xf32>
      %28 = vector.shape_cast %27 : vector<16xf32> to vector<16x1xf32>
      %cst_23 = arith.constant 3.200000e+01 : f32
      %29 = vector.broadcast %cst_23 : f32 to vector<16x1xf32>
      %30 = arith.divf %28, %29 : vector<16x1xf32>
      %31 = vector.broadcast %30 : vector<16x1xf32> to vector<16x32xf32>
      %32 = arith.subf %26, %31 : vector<16x32xf32>
      %33 = arith.mulf %32, %32 : vector<16x32xf32>
      %cst_24 = arith.constant dense<0.000000e+00> : vector<16xf32>
      %34 = vector.multi_reduction <add>, %33, %cst_24 [1] : vector<16x32xf32> to vector<16xf32>
      %35 = vector.shape_cast %34 : vector<16xf32> to vector<16x1xf32>
      %cst_25 = arith.constant 3.200000e+01 : f32
      %36 = vector.broadcast %cst_25 : f32 to vector<16x1xf32>
      %37 = arith.divf %35, %36 : vector<16x1xf32>
      %38 = vector.broadcast %30 : vector<16x1xf32> to vector<16x32xf32>
      %39 = arith.subf %26, %38 : vector<16x32xf32>
      %cst_26 = arith.constant 9.99999974E-6 : f32
      %40 = vector.broadcast %cst_26 : f32 to vector<16x1xf32>
      %41 = arith.addf %37, %40 : vector<16x1xf32>
      %42 = math.rsqrt %41 : vector<16x1xf32>
      %43 = vector.broadcast %42 : vector<16x1xf32> to vector<16x32xf32>
      %44 = arith.mulf %39, %43 : vector<16x32xf32>
      %c0_27 = arith.constant 0 : index
      %c0_28 = arith.constant 0 : index
      %45 = vector.load %arg7[%c0_27, %c0_28] : memref<1x32xf32, #tpu.memory_space<vmem>>, vector<1x32xf32>
      %46 = vector.broadcast %45 : vector<1x32xf32> to vector<16x32xf32>
      %47 = arith.mulf %44, %46 : vector<16x32xf32>
      %c0_29 = arith.constant 0 : index
      %c0_30 = arith.constant 0 : index
      %48 = vector.load %arg8[%c0_29, %c0_30] : memref<1x32xf32, #tpu.memory_space<vmem>>, vector<1x32xf32>
      %49 = vector.broadcast %48 : vector<1x32xf32> to vector<16x32xf32>
      %50 = arith.addf %47, %49 : vector<16x32xf32>
      %c0_31 = arith.constant 0 : index
      %c0_32 = arith.constant 0 : index
      %51 = vector.load %arg9[%c0_31, %c0_32] : memref<16x32xf32, #tpu.memory_space<vmem>>, vector<16x32xf32>
      tpu.vector_store %arg9[%c0_31, %c0_32], %50 {strides = array<i32>} : memref<16x32xf32, #tpu.memory_space<vmem>>, vector<16x32xf32>,
    } else {
    }
    return
  }
  func.func @transform_0(%arg0: i32, %arg1: i32) -> (i32, i32) {
    %c0_i32 = arith.constant 0 : i32
    %c0_i32_0 = arith.constant 0 : i32
    return %arg0, %c0_i32 : i32, i32
  }
  func.func @transform_1(%arg0: i32, %arg1: i32) -> (i32, i32) {
    %c0_i32 = arith.constant 0 : i32
    %c0_i32_0 = arith.constant 0 : i32
    return %c0_i32, %arg1 : i32, i32
  }
  func.func @transform_2(%arg0: i32, %arg1: i32) -> (i32, i32) {
    %c0_i32 = arith.constant 0 : i32
    %c0_i32_0 = arith.constant 0 : i32
    return %c0_i32, %arg1 : i32, i32
  }
  func.func @transform_3(%arg0: i32, %arg1: i32) -> (i32, i32) {
    %c0_i32 = arith.constant 0 : i32
    %c0_i32_0 = arith.constant 0 : i32
    return %arg1, %c0_i32 : i32, i32
  }
  func.func @transform_4(%arg0: i32, %arg1: i32) -> (i32, i32) {
    %c0_i32 = arith.constant 0 : i32
    %c0_i32_0 = arith.constant 0 : i32
    %c0_i32_1 = arith.constant 0 : i32
    return %c0_i32, %c0_i32_0 : i32, i32
  }
  func.func @transform_5(%arg0: i32, %arg1: i32) -> (i32, i32) {
    %c0_i32 = arith.constant 0 : i32
    %c0_i32_0 = arith.constant 0 : i32
    %c0_i32_1 = arith.constant 0 : i32
    return %c0_i32, %c0_i32_0 : i32, i32
  }
  func.func @transform_6(%arg0: i32, %arg1: i32) -> (i32, i32) {
    %c0_i32 = arith.constant 0 : i32
    %c0_i32_0 = arith.constant 0 : i32
    %c0_i32_1 = arith.constant 0 : i32
    return %c0_i32, %c0_i32_0 : i32, i32
  }
  func.func @transform_7(%arg0: i32, %arg1: i32) -> (i32, i32) {
    %c0_i32 = arith.constant 0 : i32
    %c0_i32_0 = arith.constant 0 : i32
    return %arg0, %c0_i32 : i32, i32
  }
}

module attributes {stable_mosaic.version = 11 : i64} {
  func.func @_attn_kernel(%arg0: i32, %arg1: memref<1x8x32xf32, #tpu.memory_space<vmem>>, %arg2: memref<32x96xbf16, #tpu.memory_space<vmem>>, %arg3: memref<1x96xf32, #tpu.memory_space<vmem>>, %arg4: memref<8x8xf32, #tpu.memory_space<vmem>>, %arg5: memref<1x8x32xf32, #tpu.memory_space<vmem>>) attributes {dimension_semantics = [#tpu.dimension_semantics<parallel>], iteration_bounds = array<i64: 2>, scalar_prefetch = 0 : i64, scratch_operands = 0 : i64, tpu.core_type = #tpu.core_type<tc>, window_params = [{transform_indices = @transform_0, window_bounds = array<i64: 1, 8, 32>}, {pipeline_mode = #tpu.pipeline_mode<synchronous>, transform_indices = @transform_1, window_bounds = array<i64: 32, 96>}, {pipeline_mode = #tpu.pipeline_mode<synchronous>, transform_indices = @transform_2, window_bounds = array<i64: 1, 96>}, {pipeline_mode = #tpu.pipeline_mode<synchronous>, transform_indices = @transform_3, window_bounds = array<i64: 8, 8>}, {transform_indices = @transform_4, window_bounds = array<i64: 1, 8, 32>}]} {
    %c0 = arith.constant 0 : index
    %c0_0 = arith.constant 0 : index
    %c0_1 = arith.constant 0 : index
    %0 = vector.load %arg1[%c0, %c0_0, %c0_1] : memref<1x8x32xf32, #tpu.memory_space<vmem>>, vector<1x8x32xf32>
    %1 = vector.shape_cast %0 : vector<1x8x32xf32> to vector<8x32xf32>
    %2 = arith.truncf %1 : vector<8x32xf32> to vector<8x32xbf16>
    %c0_2 = arith.constant 0 : index
    %c0_3 = arith.constant 0 : index
    %3 = vector.load %arg2[%c0_2, %c0_3] : memref<32x96xbf16, #tpu.memory_space<vmem>>, vector<32x96xbf16>
    %cst = arith.constant dense<0.000000e+00> : vector<8x96xf32>
    %4 = tpu.matmul %2, %3, %cst {dimension_numbers = #tpu.dot_dimension_numbers<[1], [0], [0], [1], [0, 0, 1, 1], [], []>} : vector<8x32xbf16>, vector<32x96xbf16>, vector<8x96xf32> -> vector<8x96xf32>
    %c0_4 = arith.constant 0 : index
    %c0_5 = arith.constant 0 : index
    %5 = vector.load %arg3[%c0_4, %c0_5] : memref<1x96xf32, #tpu.memory_space<vmem>>, vector<1x96xf32>
    %6 = vector.broadcast %5 : vector<1x96xf32> to vector<8x96xf32>
    %7 = arith.addf %4, %6 : vector<8x96xf32>
    %8 = arith.truncf %7 : vector<8x96xf32> to vector<8x96xbf16>
    %9 = vector.extract_strided_slice %8 {offsets = [0, 0], sizes = [8, 32], strides = [1, 1]} : vector<8x96xbf16> to vector<8x32xbf16>
    %10 = vector.extract_strided_slice %8 {offsets = [0, 32], sizes = [8, 32], strides = [1, 1]} : vector<8x96xbf16> to vector<8x32xbf16>
    %11 = vector.extract_strided_slice %8 {offsets = [0, 64], sizes = [8, 32], strides = [1, 1]} : vector<8x96xbf16> to vector<8x32xbf16>
    %c0_6 = arith.constant 0 : index
    %c0_7 = arith.constant 0 : index
    %12 = vector.load %arg4[%c0_6, %c0_7] : memref<8x8xf32, #tpu.memory_space<vmem>>, vector<8x8xf32>
    %13 = vector.extract_strided_slice %9 {offsets = [0, 0], sizes = [8, 8], strides = [1, 1]} : vector<8x32xbf16> to vector<8x8xbf16>
    %14 = vector.extract_strided_slice %10 {offsets = [0, 0], sizes = [8, 8], strides = [1, 1]} : vector<8x32xbf16> to vector<8x8xbf16>
    %cst_8 = arith.constant dense<0.000000e+00> : vector<8x8xf32>
    %15 = tpu.matmul %13, %14, %cst_8 {dimension_numbers = #tpu.dot_dimension_numbers<[1], [1], [0], [0], [0, 0, 1, 0], [], []>} : vector<8x8xbf16>, vector<8x8xbf16>, vector<8x8xf32> -> vector<8x8xf32>
    %16 = arith.addf %15, %12 : vector<8x8xf32>
    %cst_9 = arith.constant dense<0xFF800000> : vector<8xf32>
    %17 = vector.multi_reduction <maximumf>, %16, %cst_9 [1] : vector<8x8xf32> to vector<8xf32>
    %18 = vector.shape_cast %17 : vector<8xf32> to vector<8x1xf32>
    %19 = vector.broadcast %18 : vector<8x1xf32> to vector<8x8xf32>
    %20 = arith.subf %16, %19 : vector<8x8xf32>
    %21 = math.exp %20 : vector<8x8xf32>
    %cst_10 = arith.constant dense<0.000000e+00> : vector<8xf32>
    %22 = vector.multi_reduction <add>, %21, %cst_10 [1] : vector<8x8xf32> to vector<8xf32>
    %23 = vector.shape_cast %22 : vector<8xf32> to vector<8x1xf32>
    %24 = vector.broadcast %23 : vector<8x1xf32> to vector<8x8xf32>
    %25 = arith.divf %21, %24 : vector<8x8xf32>
    %26 = arith.truncf %25 : vector<8x8xf32> to vector<8x8xbf16>
    %27 = vector.extract_strided_slice %11 {offsets = [0, 0], sizes = [8, 8], strides = [1, 1]} : vector<8x32xbf16> to vector<8x8xbf16>
    %cst_11 = arith.constant dense<0.000000e+00> : vector<8x8xf32>
    %28 = tpu.matmul %26, %27, %cst_11 {dimension_numbers = #tpu.dot_dimension_numbers<[1], [0], [0], [1], [0, 0, 1, 1], [], []>} : vector<8x8xbf16>, vector<8x8xbf16>, vector<8x8xf32> -> vector<8x8xf32>
    %c0_12 = arith.constant 0 : index
    %c0_13 = arith.constant 0 : index
    %c0_14 = arith.constant 0 : index
    %29 = vector.load %arg5[%c0_12, %c0_13, %c0_14] : memref<1x8x32xf32, #tpu.memory_space<vmem>>, vector<1x8x8xf32>
    %30 = vector.shape_cast %29 : vector<1x8x8xf32> to vector<8x8xf32>
    %31 = vector.shape_cast %28 : vector<8x8xf32> to vector<1x8x8xf32>
    tpu.vector_store %arg5[%c0_12, %c0_13, %c0_14], %31 {strides = array<i32>} : memref<1x8x32xf32, #tpu.memory_space<vmem>>, vector<1x8x8xf32>,
    %32 = vector.extract_strided_slice %9 {offsets = [0, 8], sizes = [8, 8], strides = [1, 1]} : vector<8x32xbf16> to vector<8x8xbf16>
    %33 = vector.extract_strided_slice %10 {offsets = [0, 8], sizes = [8, 8], strides = [1, 1]} : vector<8x32xbf16> to vector<8x8xbf16>
    %cst_15 = arith.constant dense<0.000000e+00> : vector<8x8xf32>
    %34 = tpu.matmul %32, %33, %cst_15 {dimension_numbers = #tpu.dot_dimension_numbers<[1], [1], [0], [0], [0, 0, 1, 0], [], []>} : vector<8x8xbf16>, vector<8x8xbf16>, vector<8x8xf32> -> vector<8x8xf32>
    %35 = arith.addf %34, %12 : vector<8x8xf32>
    %cst_16 = arith.constant dense<0xFF800000> : vector<8xf32>
    %36 = vector.multi_reduction <maximumf>, %35, %cst_16 [1] : vector<8x8xf32> to vector<8xf32>
    %37 = vector.shape_cast %36 : vector<8xf32> to vector<8x1xf32>
    %38 = vector.broadcast %37 : vector<8x1xf32> to vector<8x8xf32>
    %39 = arith.subf %35, %38 : vector<8x8xf32>
    %40 = math.exp %39 : vector<8x8xf32>
    %cst_17 = arith.constant dense<0.000000e+00> : vector<8xf32>
    %41 = vector.multi_reduction <add>, %40, %cst_17 [1] : vector<8x8xf32> to vector<8xf32>
    %42 = vector.shape_cast %41 : vector<8xf32> to vector<8x1xf32>
    %43 = vector.broadcast %42 : vector<8x1xf32> to vector<8x8xf32>
    %44 = arith.divf %40, %43 : vector<8x8xf32>
    %45 = arith.truncf %44 : vector<8x8xf32> to vector<8x8xbf16>
    %46 = vector.extract_strided_slice %11 {offsets = [0, 8], sizes = [8, 8], strides = [1, 1]} : vector<8x32xbf16> to vector<8x8xbf16>
    %cst_18 = arith.constant dense<0.000000e+00> : vector<8x8xf32>
    %47 = tpu.matmul %45, %46, %cst_18 {dimension_numbers = #tpu.dot_dimension_numbers<[1], [0], [0], [1], [0, 0, 1, 1], [], []>} : vector<8x8xbf16>, vector<8x8xbf16>, vector<8x8xf32> -> vector<8x8xf32>
    %c0_19 = arith.constant 0 : index
    %c0_20 = arith.constant 0 : index
    %c8 = arith.constant 8 : index
    %48 = vector.load %arg5[%c0_19, %c0_20, %c8] : memref<1x8x32xf32, #tpu.memory_space<vmem>>, vector<1x8x8xf32>
    %49 = vector.shape_cast %48 : vector<1x8x8xf32> to vector<8x8xf32>
    %50 = vector.shape_cast %47 : vector<8x8xf32> to vector<1x8x8xf32>
    tpu.vector_store %arg5[%c0_19, %c0_20, %c8], %50 {strides = array<i32>} : memref<1x8x32xf32, #tpu.memory_space<vmem>>, vector<1x8x8xf32>,
    %51 = vector.extract_strided_slice %9 {offsets = [0, 16], sizes = [8, 8], strides = [1, 1]} : vector<8x32xbf16> to vector<8x8xbf16>
    %52 = vector.extract_strided_slice %10 {offsets = [0, 16], sizes = [8, 8], strides = [1, 1]} : vector<8x32xbf16> to vector<8x8xbf16>
    %cst_21 = arith.constant dense<0.000000e+00> : vector<8x8xf32>
    %53 = tpu.matmul %51, %52, %cst_21 {dimension_numbers = #tpu.dot_dimension_numbers<[1], [1], [0], [0], [0, 0, 1, 0], [], []>} : vector<8x8xbf16>, vector<8x8xbf16>, vector<8x8xf32> -> vector<8x8xf32>
    %54 = arith.addf %53, %12 : vector<8x8xf32>
    %cst_22 = arith.constant dense<0xFF800000> : vector<8xf32>
    %55 = vector.multi_reduction <maximumf>, %54, %cst_22 [1] : vector<8x8xf32> to vector<8xf32>
    %56 = vector.shape_cast %55 : vector<8xf32> to vector<8x1xf32>
    %57 = vector.broadcast %56 : vector<8x1xf32> to vector<8x8xf32>
    %58 = arith.subf %54, %57 : vector<8x8xf32>
    %59 = math.exp %58 : vector<8x8xf32>
    %cst_23 = arith.constant dense<0.000000e+00> : vector<8xf32>
    %60 = vector.multi_reduction <add>, %59, %cst_23 [1] : vector<8x8xf32> to vector<8xf32>
    %61 = vector.shape_cast %60 : vector<8xf32> to vector<8x1xf32>
    %62 = vector.broadcast %61 : vector<8x1xf32> to vector<8x8xf32>
    %63 = arith.divf %59, %62 : vector<8x8xf32>
    %64 = arith.truncf %63 : vector<8x8xf32> to vector<8x8xbf16>
    %65 = vector.extract_strided_slice %11 {offsets = [0, 16], sizes = [8, 8], strides = [1, 1]} : vector<8x32xbf16> to vector<8x8xbf16>
    %cst_24 = arith.constant dense<0.000000e+00> : vector<8x8xf32>
    %66 = tpu.matmul %64, %65, %cst_24 {dimension_numbers = #tpu.dot_dimension_numbers<[1], [0], [0], [1], [0, 0, 1, 1], [], []>} : vector<8x8xbf16>, vector<8x8xbf16>, vector<8x8xf32> -> vector<8x8xf32>
    %c0_25 = arith.constant 0 : index
    %c0_26 = arith.constant 0 : index
    %c16 = arith.constant 16 : index
    %67 = vector.load %arg5[%c0_25, %c0_26, %c16] : memref<1x8x32xf32, #tpu.memory_space<vmem>>, vector<1x8x8xf32>
    %68 = vector.shape_cast %67 : vector<1x8x8xf32> to vector<8x8xf32>
    %69 = vector.shape_cast %66 : vector<8x8xf32> to vector<1x8x8xf32>
    tpu.vector_store %arg5[%c0_25, %c0_26, %c16], %69 {strides = array<i32>} : memref<1x8x32xf32, #tpu.memory_space<vmem>>, vector<1x8x8xf32>,
    %70 = vector.extract_strided_slice %9 {offsets = [0, 24], sizes = [8, 8], strides = [1, 1]} : vector<8x32xbf16> to vector<8x8xbf16>
    %71 = vector.extract_strided_slice %10 {offsets = [0, 24], sizes = [8, 8], strides = [1, 1]} : vector<8x32xbf16> to vector<8x8xbf16>
    %cst_27 = arith.constant dense<0.000000e+00> : vector<8x8xf32>
    %72 = tpu.matmul %70, %71, %cst_27 {dimension_numbers = #tpu.dot_dimension_numbers<[1], [1], [0], [0], [0, 0, 1, 0], [], []>} : vector<8x8xbf16>, vector<8x8xbf16>, vector<8x8xf32> -> vector<8x8xf32>
    %73 = arith.addf %72, %12 : vector<8x8xf32>
    %cst_28 = arith.constant dense<0xFF800000> : vector<8xf32>
    %74 = vector.multi_reduction <maximumf>, %73, %cst_28 [1] : vector<8x8xf32> to vector<8xf32>
    %75 = vector.shape_cast %74 : vector<8xf32> to vector<8x1xf32>
    %76 = vector.broadcast %75 : vector<8x1xf32> to vector<8x8xf32>
    %77 = arith.subf %73, %76 : vector<8x8xf32>
    %78 = math.exp %77 : vector<8x8xf32>
    %cst_29 = arith.constant dense<0.000000e+00> : vector<8xf32>
    %79 = vector.multi_reduction <add>, %78, %cst_29 [1] : vector<8x8xf32> to vector<8xf32>
    %80 = vector.shape_cast %79 : vector<8xf32> to vector<8x1xf32>
    %81 = vector.broadcast %80 : vector<8x1xf32> to vector<8x8xf32>
    %82 = arith.divf %78, %81 : vector<8x8xf32>
    %83 = arith.truncf %82 : vector<8x8xf32> to vector<8x8xbf16>
    %84 = vector.extract_strided_slice %11 {offsets = [0, 24], sizes = [8, 8], strides = [1, 1]} : vector<8x32xbf16> to vector<8x8xbf16>
    %cst_30 = arith.constant dense<0.000000e+00> : vector<8x8xf32>
    %85 = tpu.matmul %83, %84, %cst_30 {dimension_numbers = #tpu.dot_dimension_numbers<[1], [0], [0], [1], [0, 0, 1, 1], [], []>} : vector<8x8xbf16>, vector<8x8xbf16>, vector<8x8xf32> -> vector<8x8xf32>
    %c0_31 = arith.constant 0 : index
    %c0_32 = arith.constant 0 : index
    %c24 = arith.constant 24 : index
    %86 = vector.load %arg5[%c0_31, %c0_32, %c24] : memref<1x8x32xf32, #tpu.memory_space<vmem>>, vector<1x8x8xf32>
    %87 = vector.shape_cast %86 : vector<1x8x8xf32> to vector<8x8xf32>
    %88 = vector.shape_cast %85 : vector<8x8xf32> to vector<1x8x8xf32>
    tpu.vector_store %arg5[%c0_31, %c0_32, %c24], %88 {strides = array<i32>} : memref<1x8x32xf32, #tpu.memory_space<vmem>>, vector<1x8x8xf32>,
    return
  }
  func.func @transform_0(%arg0: i32) -> (i32, i32, i32) {
    %c0_i32 = arith.constant 0 : i32
    %c0_i32_0 = arith.constant 0 : i32
    %c0_i32_1 = arith.constant 0 : i32
    return %arg0, %c0_i32, %c0_i32_0 : i32, i32, i32
  }
  func.func @transform_1(%arg0: i32) -> (i32, i32) {
    %c0_i32 = arith.constant 0 : i32
    %c0_i32_0 = arith.constant 0 : i32
    %c0_i32_1 = arith.constant 0 : i32
    return %c0_i32, %c0_i32_0 : i32, i32
  }
  func.func @transform_2(%arg0: i32) -> (i32, i32) {
    %c0_i32 = arith.constant 0 : i32
    %c0_i32_0 = arith.constant 0 : i32
    %c0_i32_1 = arith.constant 0 : i32
    return %c0_i32, %c0_i32_0 : i32, i32
  }
  func.func @transform_3(%arg0: i32) -> (i32, i32) {
    %c0_i32 = arith.constant 0 : i32
    %c0_i32_0 = arith.constant 0 : i32
    %c0_i32_1 = arith.constant 0 : i32
    return %c0_i32, %c0_i32_0 : i32, i32
  }
  func.func @transform_4(%arg0: i32) -> (i32, i32, i32) {
    %c0_i32 = arith.constant 0 : i32
    %c0_i32_0 = arith.constant 0 : i32
    %c0_i32_1 = arith.constant 0 : i32
    return %arg0, %c0_i32, %c0_i32_0 : i32, i32, i32
  }
}

module attributes {stable_mosaic.version = 11 : i64} {
  func.func @_attn_kernel(%arg0: i32, %arg1: memref<1x8x32xf32, #tpu.memory_space<vmem>>, %arg2: memref<1x8x32xf32, #tpu.memory_space<vmem>>, %arg3: memref<32x32xbf16, #tpu.memory_space<vmem>>, %arg4: memref<1x32xf32, #tpu.memory_space<vmem>>, %arg5: memref<32x64xbf16, #tpu.memory_space<vmem>>, %arg6: memref<1x64xf32, #tpu.memory_space<vmem>>, %arg7: memref<1x8x32xf32, #tpu.memory_space<vmem>>, %arg8: memref<1x8x8xf32, #tpu.memory_space<vmem>>) attributes {dimension_semantics = [#tpu.dimension_semantics<parallel>], iteration_bounds = array<i64: 2>, scalar_prefetch = 0 : i64, scratch_operands = 0 : i64, tpu.core_type = #tpu.core_type<tc>, window_params = [{transform_indices = @transform_0, window_bounds = array<i64: 1, 8, 32>}, {transform_indices = @transform_1, window_bounds = array<i64: 1, 8, 32>}, {pipeline_mode = #tpu.pipeline_mode<synchronous>, transform_indices = @transform_2, window_bounds = array<i64: 32, 32>}, {pipeline_mode = #tpu.pipeline_mode<synchronous>, transform_indices = @transform_3, window_bounds = array<i64: 1, 32>}, {pipeline_mode = #tpu.pipeline_mode<synchronous>, transform_indices = @transform_4, window_bounds = array<i64: 32, 64>}, {pipeline_mode = #tpu.pipeline_mode<synchronous>, transform_indices = @transform_5, window_bounds = array<i64: 1, 64>}, {transform_indices = @transform_6, window_bounds = array<i64: 1, 8, 32>}, {transform_indices = @transform_7, window_bounds = array<i64: 1, 8, 8>}]} {
    %c0 = arith.constant 0 : index
    %c0_0 = arith.constant 0 : index
    %c0_1 = arith.constant 0 : index
    %0 = vector.load %arg1[%c0, %c0_0, %c0_1] : memref<1x8x32xf32, #tpu.memory_space<vmem>>, vector<1x8x32xf32>
    %1 = vector.shape_cast %0 : vector<1x8x32xf32> to vector<8x32xf32>
    %c0_2 = arith.constant 0 : index
    %c0_3 = arith.constant 0 : index
    %c0_4 = arith.constant 0 : index
    %2 = vector.load %arg2[%c0_2, %c0_3, %c0_4] : memref<1x8x32xf32, #tpu.memory_space<vmem>>, vector<1x8x32xf32>
    %3 = vector.shape_cast %2 : vector<1x8x32xf32> to vector<8x32xf32>
    %4 = arith.truncf %1 : vector<8x32xf32> to vector<8x32xbf16>
    %c0_5 = arith.constant 0 : index
    %c0_6 = arith.constant 0 : index
    %5 = vector.load %arg3[%c0_5, %c0_6] : memref<32x32xbf16, #tpu.memory_space<vmem>>, vector<32x32xbf16>
    %cst = arith.constant dense<0.000000e+00> : vector<8x32xf32>
    %6 = tpu.matmul %4, %5, %cst {dimension_numbers = #tpu.dot_dimension_numbers<[1], [0], [0], [1], [0, 0, 1, 1], [], []>} : vector<8x32xbf16>, vector<32x32xbf16>, vector<8x32xf32> -> vector<8x32xf32>
    %c0_7 = arith.constant 0 : index
    %c0_8 = arith.constant 0 : index
    %7 = vector.load %arg4[%c0_7, %c0_8] : memref<1x32xf32, #tpu.memory_space<vmem>>, vector<1x32xf32>
    %8 = vector.broadcast %7 : vector<1x32xf32> to vector<8x32xf32>
    %9 = arith.addf %6, %8 : vector<8x32xf32>
    %10 = arith.truncf %9 : vector<8x32xf32> to vector<8x32xbf16>
    %11 = arith.truncf %3 : vector<8x32xf32> to vector<8x32xbf16>
    %c0_9 = arith.constant 0 : index
    %c0_10 = arith.constant 0 : index
    %12 = vector.load %arg5[%c0_9, %c0_10] : memref<32x64xbf16, #tpu.memory_space<vmem>>, vector<32x64xbf16>
    %cst_11 = arith.constant dense<0.000000e+00> : vector<8x64xf32>
    %13 = tpu.matmul %11, %12, %cst_11 {dimension_numbers = #tpu.dot_dimension_numbers<[1], [0], [0], [1], [0, 0, 1, 1], [], []>} : vector<8x32xbf16>, vector<32x64xbf16>, vector<8x64xf32> -> vector<8x64xf32>
    %c0_12 = arith.constant 0 : index
    %c0_13 = arith.constant 0 : index
    %14 = vector.load %arg6[%c0_12, %c0_13] : memref<1x64xf32, #tpu.memory_space<vmem>>, vector<1x64xf32>
    %15 = vector.broadcast %14 : vector<1x64xf32> to vector<8x64xf32>
    %16 = arith.addf %13, %15 : vector<8x64xf32>
    %17 = arith.truncf %16 : vector<8x64xf32> to vector<8x64xbf16>
    %18 = vector.extract_strided_slice %17 {offsets = [0, 0], sizes = [8, 32], strides = [1, 1]} : vector<8x64xbf16> to vector<8x32xbf16>
    %19 = vector.extract_strided_slice %17 {offsets = [0, 32], sizes = [8, 32], strides = [1, 1]} : vector<8x64xbf16> to vector<8x32xbf16>
    %20 = vector.extract_strided_slice %10 {offsets = [0, 0], sizes = [8, 8], strides = [1, 1]} : vector<8x32xbf16> to vector<8x8xbf16>
    %21 = vector.extract_strided_slice %18 {offsets = [0, 0], sizes = [8, 8], strides = [1, 1]} : vector<8x32xbf16> to vector<8x8xbf16>
    %cst_14 = arith.constant dense<0.000000e+00> : vector<8x8xf32>
    %22 = tpu.matmul %20, %21, %cst_14 {dimension_numbers = #tpu.dot_dimension_numbers<[1], [1], [0], [0], [0, 0, 1, 0], [], []>} : vector<8x8xbf16>, vector<8x8xbf16>, vector<8x8xf32> -> vector<8x8xf32>
    %cst_15 = arith.constant dense<0xFF800000> : vector<8xf32>
    %23 = vector.multi_reduction <maximumf>, %22, %cst_15 [1] : vector<8x8xf32> to vector<8xf32>
    %24 = vector.shape_cast %23 : vector<8xf32> to vector<8x1xf32>
    %25 = vector.broadcast %24 : vector<8x1xf32> to vector<8x8xf32>
    %26 = arith.subf %22, %25 : vector<8x8xf32>
    %27 = math.exp %26 : vector<8x8xf32>
    %cst_16 = arith.constant dense<0.000000e+00> : vector<8xf32>
    %28 = vector.multi_reduction <add>, %27, %cst_16 [1] : vector<8x8xf32> to vector<8xf32>
    %29 = vector.shape_cast %28 : vector<8xf32> to vector<8x1xf32>
    %30 = vector.broadcast %29 : vector<8x1xf32> to vector<8x8xf32>
    %31 = arith.divf %27, %30 : vector<8x8xf32>
    %32 = arith.truncf %31 : vector<8x8xf32> to vector<8x8xbf16>
    %33 = vector.extract_strided_slice %19 {offsets = [0, 0], sizes = [8, 8], strides = [1, 1]} : vector<8x32xbf16> to vector<8x8xbf16>
    %cst_17 = arith.constant dense<0.000000e+00> : vector<8x8xf32>
    %34 = tpu.matmul %32, %33, %cst_17 {dimension_numbers = #tpu.dot_dimension_numbers<[1], [0], [0], [1], [0, 0, 1, 1], [], []>} : vector<8x8xbf16>, vector<8x8xbf16>, vector<8x8xf32> -> vector<8x8xf32>
    %c0_18 = arith.constant 0 : index
    %c0_19 = arith.constant 0 : index
    %c0_20 = arith.constant 0 : index
    %35 = vector.load %arg7[%c0_18, %c0_19, %c0_20] : memref<1x8x32xf32, #tpu.memory_space<vmem>>, vector<1x8x8xf32>
    %36 = vector.shape_cast %35 : vector<1x8x8xf32> to vector<8x8xf32>
    %37 = vector.shape_cast %34 : vector<8x8xf32> to vector<1x8x8xf32>
    tpu.vector_store %arg7[%c0_18, %c0_19, %c0_20], %37 {strides = array<i32>} : memref<1x8x32xf32, #tpu.memory_space<vmem>>, vector<1x8x8xf32>,
    %38 = vector.extract_strided_slice %10 {offsets = [0, 8], sizes = [8, 8], strides = [1, 1]} : vector<8x32xbf16> to vector<8x8xbf16>
    %39 = vector.extract_strided_slice %18 {offsets = [0, 8], sizes = [8, 8], strides = [1, 1]} : vector<8x32xbf16> to vector<8x8xbf16>
    %cst_21 = arith.constant dense<0.000000e+00> : vector<8x8xf32>
    %40 = tpu.matmul %38, %39, %cst_21 {dimension_numbers = #tpu.dot_dimension_numbers<[1], [1], [0], [0], [0, 0, 1, 0], [], []>} : vector<8x8xbf16>, vector<8x8xbf16>, vector<8x8xf32> -> vector<8x8xf32>
    %cst_22 = arith.constant dense<0xFF800000> : vector<8xf32>
    %41 = vector.multi_reduction <maximumf>, %40, %cst_22 [1] : vector<8x8xf32> to vector<8xf32>
    %42 = vector.shape_cast %41 : vector<8xf32> to vector<8x1xf32>
    %43 = vector.broadcast %42 : vector<8x1xf32> to vector<8x8xf32>
    %44 = arith.subf %40, %43 : vector<8x8xf32>
    %45 = math.exp %44 : vector<8x8xf32>
    %cst_23 = arith.constant dense<0.000000e+00> : vector<8xf32>
    %46 = vector.multi_reduction <add>, %45, %cst_23 [1] : vector<8x8xf32> to vector<8xf32>
    %47 = vector.shape_cast %46 : vector<8xf32> to vector<8x1xf32>
    %48 = vector.broadcast %47 : vector<8x1xf32> to vector<8x8xf32>
    %49 = arith.divf %45, %48 : vector<8x8xf32>
    %50 = arith.truncf %49 : vector<8x8xf32> to vector<8x8xbf16>
    %51 = vector.extract_strided_slice %19 {offsets = [0, 8], sizes = [8, 8], strides = [1, 1]} : vector<8x32xbf16> to vector<8x8xbf16>
    %cst_24 = arith.constant dense<0.000000e+00> : vector<8x8xf32>
    %52 = tpu.matmul %50, %51, %cst_24 {dimension_numbers = #tpu.dot_dimension_numbers<[1], [0], [0], [1], [0, 0, 1, 1], [], []>} : vector<8x8xbf16>, vector<8x8xbf16>, vector<8x8xf32> -> vector<8x8xf32>
    %c0_25 = arith.constant 0 : index
    %c0_26 = arith.constant 0 : index
    %c8 = arith.constant 8 : index
    %53 = vector.load %arg7[%c0_25, %c0_26, %c8] : memref<1x8x32xf32, #tpu.memory_space<vmem>>, vector<1x8x8xf32>
    %54 = vector.shape_cast %53 : vector<1x8x8xf32> to vector<8x8xf32>
    %55 = vector.shape_cast %52 : vector<8x8xf32> to vector<1x8x8xf32>
    tpu.vector_store %arg7[%c0_25, %c0_26, %c8], %55 {strides = array<i32>} : memref<1x8x32xf32, #tpu.memory_space<vmem>>, vector<1x8x8xf32>,
    %56 = arith.addf %31, %49 : vector<8x8xf32>
    %57 = vector.extract_strided_slice %10 {offsets = [0, 16], sizes = [8, 8], strides = [1, 1]} : vector<8x32xbf16> to vector<8x8xbf16>
    %58 = vector.extract_strided_slice %18 {offsets = [0, 16], sizes = [8, 8], strides = [1, 1]} : vector<8x32xbf16> to vector<8x8xbf16>
    %cst_27 = arith.constant dense<0.000000e+00> : vector<8x8xf32>
    %59 = tpu.matmul %57, %58, %cst_27 {dimension_numbers = #tpu.dot_dimension_numbers<[1], [1], [0], [0], [0, 0, 1, 0], [], []>} : vector<8x8xbf16>, vector<8x8xbf16>, vector<8x8xf32> -> vector<8x8xf32>
    %cst_28 = arith.constant dense<0xFF800000> : vector<8xf32>
    %60 = vector.multi_reduction <maximumf>, %59, %cst_28 [1] : vector<8x8xf32> to vector<8xf32>
    %61 = vector.shape_cast %60 : vector<8xf32> to vector<8x1xf32>
    %62 = vector.broadcast %61 : vector<8x1xf32> to vector<8x8xf32>
    %63 = arith.subf %59, %62 : vector<8x8xf32>
    %64 = math.exp %63 : vector<8x8xf32>
    %cst_29 = arith.constant dense<0.000000e+00> : vector<8xf32>
    %65 = vector.multi_reduction <add>, %64, %cst_29 [1] : vector<8x8xf32> to vector<8xf32>
    %66 = vector.shape_cast %65 : vector<8xf32> to vector<8x1xf32>
    %67 = vector.broadcast %66 : vector<8x1xf32> to vector<8x8xf32>
    %68 = arith.divf %64, %67 : vector<8x8xf32>
    %69 = arith.truncf %68 : vector<8x8xf32> to vector<8x8xbf16>
    %70 = vector.extract_strided_slice %19 {offsets = [0, 16], sizes = [8, 8], strides = [1, 1]} : vector<8x32xbf16> to vector<8x8xbf16>
    %cst_30 = arith.constant dense<0.000000e+00> : vector<8x8xf32>
    %71 = tpu.matmul %69, %70, %cst_30 {dimension_numbers = #tpu.dot_dimension_numbers<[1], [0], [0], [1], [0, 0, 1, 1], [], []>} : vector<8x8xbf16>, vector<8x8xbf16>, vector<8x8xf32> -> vector<8x8xf32>
    %c0_31 = arith.constant 0 : index
    %c0_32 = arith.constant 0 : index
    %c16 = arith.constant 16 : index
    %72 = vector.load %arg7[%c0_31, %c0_32, %c16] : memref<1x8x32xf32, #tpu.memory_space<vmem>>, vector<1x8x8xf32>
    %73 = vector.shape_cast %72 : vector<1x8x8xf32> to vector<8x8xf32>
    %74 = vector.shape_cast %71 : vector<8x8xf32> to vector<1x8x8xf32>
    tpu.vector_store %arg7[%c0_31, %c0_32, %c16], %74 {strides = array<i32>} : memref<1x8x32xf32, #tpu.memory_space<vmem>>, vector<1x8x8xf32>,
    %75 = arith.addf %56, %68 : vector<8x8xf32>
    %76 = vector.extract_strided_slice %10 {offsets = [0, 24], sizes = [8, 8], strides = [1, 1]} : vector<8x32xbf16> to vector<8x8xbf16>
    %77 = vector.extract_strided_slice %18 {offsets = [0, 24], sizes = [8, 8], strides = [1, 1]} : vector<8x32xbf16> to vector<8x8xbf16>
    %cst_33 = arith.constant dense<0.000000e+00> : vector<8x8xf32>
    %78 = tpu.matmul %76, %77, %cst_33 {dimension_numbers = #tpu.dot_dimension_numbers<[1], [1], [0], [0], [0, 0, 1, 0], [], []>} : vector<8x8xbf16>, vector<8x8xbf16>, vector<8x8xf32> -> vector<8x8xf32>
    %cst_34 = arith.constant dense<0xFF800000> : vector<8xf32>
    %79 = vector.multi_reduction <maximumf>, %78, %cst_34 [1] : vector<8x8xf32> to vector<8xf32>
    %80 = vector.shape_cast %79 : vector<8xf32> to vector<8x1xf32>
    %81 = vector.broadcast %80 : vector<8x1xf32> to vector<8x8xf32>
    %82 = arith.subf %78, %81 : vector<8x8xf32>
    %83 = math.exp %82 : vector<8x8xf32>
    %cst_35 = arith.constant dense<0.000000e+00> : vector<8xf32>
    %84 = vector.multi_reduction <add>, %83, %cst_35 [1] : vector<8x8xf32> to vector<8xf32>
    %85 = vector.shape_cast %84 : vector<8xf32> to vector<8x1xf32>
    %86 = vector.broadcast %85 : vector<8x1xf32> to vector<8x8xf32>
    %87 = arith.divf %83, %86 : vector<8x8xf32>
    %88 = arith.truncf %87 : vector<8x8xf32> to vector<8x8xbf16>
    %89 = vector.extract_strided_slice %19 {offsets = [0, 24], sizes = [8, 8], strides = [1, 1]} : vector<8x32xbf16> to vector<8x8xbf16>
    %cst_36 = arith.constant dense<0.000000e+00> : vector<8x8xf32>
    %90 = tpu.matmul %88, %89, %cst_36 {dimension_numbers = #tpu.dot_dimension_numbers<[1], [0], [0], [1], [0, 0, 1, 1], [], []>} : vector<8x8xbf16>, vector<8x8xbf16>, vector<8x8xf32> -> vector<8x8xf32>
    %c0_37 = arith.constant 0 : index
    %c0_38 = arith.constant 0 : index
    %c24 = arith.constant 24 : index
    %91 = vector.load %arg7[%c0_37, %c0_38, %c24] : memref<1x8x32xf32, #tpu.memory_space<vmem>>, vector<1x8x8xf32>
    %92 = vector.shape_cast %91 : vector<1x8x8xf32> to vector<8x8xf32>
    %93 = vector.shape_cast %90 : vector<8x8xf32> to vector<1x8x8xf32>
    tpu.vector_store %arg7[%c0_37, %c0_38, %c24], %93 {strides = array<i32>} : memref<1x8x32xf32, #tpu.memory_space<vmem>>, vector<1x8x8xf32>,
    %94 = arith.addf %75, %87 : vector<8x8xf32>
    %cst_39 = arith.constant 2.500000e-01 : f32
    %95 = vector.broadcast %cst_39 : f32 to vector<8x8xf32>
    %96 = arith.mulf %94, %95 : vector<8x8xf32>
    %97 = vector.shape_cast %96 : vector<8x8xf32> to vector<1x8x8xf32>
    %c0_40 = arith.constant 0 : index
    %c0_41 = arith.constant 0 : index
    %c0_42 = arith.constant 0 : index
    %98 = vector.load %arg8[%c0_40, %c0_41, %c0_42] : memref<1x8x8xf32, #tpu.memory_space<vmem>>, vector<1x8x8xf32>
    tpu.vector_store %arg8[%c0_40, %c0_41, %c0_42], %97 {strides = array<i32>} : memref<1x8x8xf32, #tpu.memory_space<vmem>>, vector<1x8x8xf32>,
    return
  }
  func.func @transform_0(%arg0: i32) -> (i32, i32, i32) {
    %c0_i32 = arith.constant 0 : i32
    %c0_i32_0 = arith.constant 0 : i32
    %c0_i32_1 = arith.constant 0 : i32
    return %arg0, %c0_i32, %c0_i32_0 : i32, i32, i32
  }
  func.func @transform_1(%arg0: i32) -> (i32, i32, i32) {
    %c0_i32 = arith.constant 0 : i32
    %c0_i32_0 = arith.constant 0 : i32
    %c0_i32_1 = arith.constant 0 : i32
    return %arg0, %c0_i32, %c0_i32_0 : i32, i32, i32
  }
  func.func @transform_2(%arg0: i32) -> (i32, i32) {
    %c0_i32 = arith.constant 0 : i32
    %c0_i32_0 = arith.constant 0 : i32
    %c0_i32_1 = arith.constant 0 : i32
    return %c0_i32, %c0_i32_0 : i32, i32
  }
  func.func @transform_3(%arg0: i32) -> (i32, i32) {
    %c0_i32 = arith.constant 0 : i32
    %c0_i32_0 = arith.constant 0 : i32
    %c0_i32_1 = arith.constant 0 : i32
    return %c0_i32, %c0_i32_0 : i32, i32
  }
  func.func @transform_4(%arg0: i32) -> (i32, i32) {
    %c0_i32 = arith.constant 0 : i32
    %c0_i32_0 = arith.constant 0 : i32
    %c0_i32_1 = arith.constant 0 : i32
    return %c0_i32, %c0_i32_0 : i32, i32
  }
  func.func @transform_5(%arg0: i32) -> (i32, i32) {
    %c0_i32 = arith.constant 0 : i32
    %c0_i32_0 = arith.constant 0 : i32
    %c0_i32_1 = arith.constant 0 : i32
    return %c0_i32, %c0_i32_0 : i32, i32
  }
  func.func @transform_6(%arg0: i32) -> (i32, i32, i32) {
    %c0_i32 = arith.constant 0 : i32
    %c0_i32_0 = arith.constant 0 : i32
    %c0_i32_1 = arith.constant 0 : i32
    return %arg0, %c0_i32, %c0_i32_0 : i32, i32, i32
  }
  func.func @transform_7(%arg0: i32) -> (i32, i32, i32) {
    %c0_i32 = arith.constant 0 : i32
    %c0_i32_0 = arith.constant 0 : i32
    %c0_i32_1 = arith.constant 0 : i32
    return %arg0, %c0_i32, %c0_i32_0 : i32, i32, i32
  }
}

</mosaic_0001>

<llo_original>
// kernel: tpu_custom_call.1
$region0: #{tpu_custom_call.1}
  #allocation0 [shape = 'u32[]', space=smem, size = 0x4, offset = 0x4, fixed_abs, tag = 'smem constant byte address 0x4 - core index']
  #allocation1 [shape = 'u32[144,128]{1,0:T(1,128)}', space=vmem, size = 0x12000, scoped, tag = 'internal scratch']
  %s0 = inlined_call_operand.hbm [shape: f32[8,128], index: 0, kind: input, shape index: {}]
  %s1 = inlined_call_operand.hbm [shape: f32[8,128], index: 1, kind: output, shape index: {}]
  %s2 = sld [smem:[#allocation0]]
  $region18: #{tpu_custom_call.1} parent=0
    _
  %s4 = ssub.s32 1, %s2
  %s5 = scalar_select 0, %s4, %s2
  $region1: #{tpu_custom_call.1} parent=0
    #allocation2 [shape = 'u8[4096]{0}', space=vmem, size = 0x1000, scoped, tag = 'input window, operand 0, single buffered']
    #allocation3 [shape = 's32[1]{0}', space=sflag, size = 0x4, scoped, tag = 'scoped memory for tpu_custom_call.1']
    #allocation4 [shape = 's32[1]{0}', space=sflag, size = 0x4, scoped, tag = 'scoped memory for tpu_custom_call.1']
    #allocation5 [shape = 'u8[4096]{0}', space=vmem, size = 0x1000, scoped, tag = 'output window, operand 0, single buffered']
    %6 = vsyncpa [#allocation3], 0
    %7 = vsyncpa [#allocation4], 0
    // Predicated region
    $region2: #{tpu_custom_call.1} parent=1 // pred_check
      _
    $region3: #{tpu_custom_call.1} parent=1 // pred_check_branch
      %9 = sbr.rel (0) target = $region5
    $region4: #{tpu_custom_call.1} parent=1 // pred_region
      %s11 = ssub.s32 128, 128
      %12 = vsyncadd [#allocation3], %s11
      %s14 = sshll.u32 [#allocation2], 4
      %s15 = int_to_ptr.vmem [resolvable:$true] %s14
      %17 = dma.hbm_to_vmem [thread:$0]  %s0, 128, %s15, [#allocation3]
    $region5: #{tpu_custom_call.1} parent=1 // pred_fallthru
      _
    // Predicated region
    $region6: #{tpu_custom_call.1} parent=1 // pred_check
      _
    $region7: #{tpu_custom_call.1} parent=1 // pred_check_branch
      %19 = sbr.rel (0) target = $region9
    $region8: #{tpu_custom_call.1} parent=1 // pred_region
      %20 = dma.done [#allocation3], 128
    $region9: #{tpu_custom_call.1} parent=1 // pred_fallthru
      _
    %v21 = vld [vmem:[#allocation2] sm:$0xff]
    %v22 = vadd.f32 %v21, 1.0
    %23 = vst [vmem:[#allocation5] sm:$0xff] %v22
    // Predicated region
    $region10: #{tpu_custom_call.1} parent=1 // pred_check
      _
    $region11: #{tpu_custom_call.1} parent=1 // pred_check_branch
      %25 = sbr.rel (0) target = $region13
    $region12: #{tpu_custom_call.1} parent=1 // pred_region
      %s27 = ssub.s32 128, 128
      %28 = vsyncadd [#allocation4], %s27
      %s30 = sshll.u32 [#allocation5], 4
      %s31 = int_to_ptr.vmem [resolvable:$true] %s30
      %33 = dma.vmem_to_hbm [thread:$0]  %s31, 128, %s1, [#allocation4]
    $region13: #{tpu_custom_call.1} parent=1 // pred_fallthru
      _
    // Predicated region
    $region14: #{tpu_custom_call.1} parent=1 // pred_check
      _
    $region15: #{tpu_custom_call.1} parent=1 // pred_check_branch
      %35 = sbr.rel (0) target = $region17
    $region16: #{tpu_custom_call.1} parent=1 // pred_region
      %36 = dma.done [#allocation4], 128
    $region17: #{tpu_custom_call.1} parent=1 // pred_fallthru
      _
    %37 = vsyncpa [#allocation3], 1
    %38 = vsyncpa [#allocation4], 1

// kernel: _forward.17
$region0: #{_forward.17}
  #allocation0 [shape = 'u32[]', space=smem, size = 0x4, offset = 0x4, fixed_abs, tag = 'smem constant byte address 0x4 - core index']
  #allocation1 [shape = 'u32[144,128]{1,0:T(1,128)}', space=vmem, size = 0x12000, scoped, tag = 'internal scratch']
  %s0 = inlined_call_operand.vmem [shape: f32[16,32], index: 0, kind: input, shape index: {}]
  %s1 = inlined_call_operand.vmem [shape: bf16[32,32], index: 1, kind: input, shape index: {}]
  %s2 = inlined_call_operand.vmem [shape: f32[1,32], index: 2, kind: input, shape index: {}]
  %s3 = inlined_call_operand.vmem [shape: f32[16,32], index: 3, kind: input, shape index: {}]
  %s4 = inlined_call_operand.vmem [shape: f32[1,32], index: 4, kind: input, shape index: {}]
  %s5 = inlined_call_operand.vmem [shape: f32[1,32], index: 5, kind: input, shape index: {}]
  %s6 = inlined_call_operand.vmem [shape: f32[16,32], index: 6, kind: output, shape index: {}]
  %s7 = sld [smem:[#allocation0]]
  $region34: #{_forward.17} parent=0
    _
  %s9 = ssub.s32 1, %s7
  %s10 = scalar_select 0, %s9, %s7
  // Predicated region
  $region2: #{_forward.17} parent=0 // pred_check
    _
  $region3: #{_forward.17} parent=0 // pred_check_branch
    %12 = sbr.rel (0) target = $region5
  $region4: #{_forward.17} parent=0 // pred_region
    _
  $region5: #{_forward.17} parent=0 // pred_fallthru
    _
  // Predicated region
  $region6: #{_forward.17} parent=0 // pred_check
    _
  $region7: #{_forward.17} parent=0 // pred_check_branch
    %14 = sbr.rel (0) target = $region9
  $region8: #{_forward.17} parent=0 // pred_region
    _
  $region9: #{_forward.17} parent=0 // pred_fallthru
    _
  // Predicated region
  $region10: #{_forward.17} parent=0 // pred_check
    _
  $region11: #{_forward.17} parent=0 // pred_check_branch
    %16 = sbr.rel (0) target = $region13
  $region12: #{_forward.17} parent=0 // pred_region
    _
  $region13: #{_forward.17} parent=0 // pred_fallthru
    _
  // Predicated region
  $region14: #{_forward.17} parent=0 // pred_check
    _
  $region15: #{_forward.17} parent=0 // pred_check_branch
    %18 = sbr.rel (0) target = $region17
  $region16: #{_forward.17} parent=0 // pred_region
    _
  $region17: #{_forward.17} parent=0 // pred_fallthru
    _
  // Predicated region
  $region18: #{_forward.17} parent=0 // pred_check
    _
  $region19: #{_forward.17} parent=0 // pred_check_branch
    %20 = sbr.rel (0) target = $region21
  $region20: #{_forward.17} parent=0 // pred_region
    _
  $region21: #{_forward.17} parent=0 // pred_fallthru
    _
  // Predicated region
  $region22: #{_forward.17} parent=0 // pred_check
    _
  $region23: #{_forward.17} parent=0 // pred_check_branch
    %22 = sbr.rel (0) target = $region25
  $region24: #{_forward.17} parent=0 // pred_region
    _
  $region25: #{_forward.17} parent=0 // pred_fallthru
    _
  %v24 = vld [vmem:[%s0] sm:$0xff]
  %v25 = vld [vmem:[%s0 + $0x8] sm:$0xff]
  %v26 = vpack.c.bf16 %v25, %v24
  %v27 = vld [vmem:[%s1] sm:$0xf]
  %v28 = vld [vmem:[%s1 + $0x4] sm:$0xf]
  %v29 = vld [vmem:[%s1 + $0x8] sm:$0xf]
  %v30 = vld [vmem:[%s1 + $0xc] sm:$0xf]
  %v31 = vld [vmem:[%s2] sm:$0x1]
  %v33 = vlaneseq
  %v34 = vshrl.u32 %v33, 7
  %v35 = vsub.s32 0, %v34
  %v36 = vrot.slane %v31, %v35
  %v42 = vunpack.c.l.b16 %v27
  %v43 = vunpack.c.l.b16 %v28
  %v44 = vunpack.c.l.b16 %v29
  %v45 = vunpack.c.l.b16 %v30
  %v46 = vpack.c.b16 %v43, %v42
  %v47 = vpack.c.b16 %v45, %v44
  %vm50 = vcmask 261120
  %v52 = vsel %vm50, %v26, 0
  %54 = vmatprep.subr.bf16.mxu0 0
  %55 = vmatpush1.bf16.msra.mxu0 %v46
  %56 = vmatprep.subr.bf16.mxu0 0
  %57 = vmatpush1.bf16.msra.mxu0 %v47
  %58 = vmatprep.subr.bf16.mxu0 0
  %59 = vmatpush1.bf16.msra.mxu0 0
  %60 = vmatprep.subr.bf16.mxu0 0
  %61 = vmatpush1.bf16.msra.mxu0 0
  %62 = vmatprep.subr.bf16.mxu0 0
  %63 = vmatpush1.bf16.msra.mxu0 0
  %64 = vmatprep.subr.bf16.mxu0 0
  %65 = vmatpush1.bf16.msra.mxu0 0
  %66 = vmatprep.subr.bf16.mxu0 0
  %67 = vmatpush1.bf16.msra.mxu0 0
  %68 = vmatprep.subr.bf16.mxu0 0
  %69 = vmatpush1.bf16.msra.mxu0 0
  %70 = vmatprep.subr.bf16.mxu0 0
  %71 = vmatpush1.bf16.msra.mxu0 0
  %72 = vmatprep.subr.bf16.mxu0 0
  %73 = vmatpush1.bf16.msra.mxu0 0
  %74 = vmatprep.subr.bf16.mxu0 0
  %75 = vmatpush1.bf16.msra.mxu0 0
  %76 = vmatprep.subr.bf16.mxu0 0
  %77 = vmatpush1.bf16.msra.mxu0 0
  %78 = vmatprep.subr.bf16.mxu0 0
  %79 = vmatpush1.bf16.msra.mxu0 0
  %80 = vmatprep.subr.bf16.mxu0 0
  %81 = vmatpush1.bf16.msra.mxu0 0
  %82 = vmatprep.subr.bf16.mxu0 0
  %83 = vmatpush1.bf16.msra.mxu0 0
  %84 = vmatprep.subr.bf16.mxu0 0
  %85 = vmatpush1.bf16.msra.mxu0 0
  %86 = vmatprep.mubr.bf16.mxu0 0
  %87 = vmatmul.mubr.bf16.gmra.mrb[0].mxu0 %v52
  %v88 = vpop.f32.mrb[0].mxu0
  %v89 = vadd.f32 %v36, %v88
  %v90 = vpop.f32.mrb[0].mxu0
  %v91 = vpop.f32.mrb[0].mxu0
  %v92 = vadd.f32 %v36, %v91
  %v93 = vpop.f32.mrb[0].mxu0
  %94 = vdwg.mxu0
  %v95 = vld [vmem:[%s3] sm:$0xff]
  %v96 = vld [vmem:[%s3 + $0x8] sm:$0xff]
  %v97 = vadd.f32 %v95, %v89
  %v98 = vadd.f32 %v96, %v92
  %v99 = vsel %vm50, %v97, 0.0
  %100 = vadd.xlane.f32.xlu0 %v99
  %v101 = vpop.xlane.xlu0 %100
  %v102 = vsel %vm50, %v98, 0.0
  %103 = vadd.xlane.f32.xlu0 %v102
  %v104 = vpop.xlane.xlu0 %103
  %v105 = vrcp.pop 32.0
  %v106 = vmul.f32 %v101, %v105
  %v107 = vmul.f32 %v104, %v105
  %v108 = vsub.f32 %v97, %v106
  %v109 = vsub.f32 %v98, %v107
  %v110 = vmul.f32 %v108, %v108
  %v111 = vmul.f32 %v109, %v109
  %v112 = vsel %vm50, %v110, 0.0
  %113 = vadd.xlane.f32.xlu0 %v112
  %v114 = vpop.xlane.xlu0 %113
  %v115 = vsel %vm50, %v111, 0.0
  %116 = vadd.xlane.f32.xlu0 %v115
  %v117 = vpop.xlane.xlu0 %116
  %v118 = vmul.f32 %v114, %v105
  %v119 = vmul.f32 %v117, %v105
  %v120 = vadd.f32 %v118, 1e-05
  %v121 = vadd.f32 %v119, 1e-05
  %v122 = vrsqrt.pop %v120
  %v123 = vrsqrt.pop %v121
  %v124 = vmul.f32 %v108, %v122
  %v125 = vmul.f32 %v109, %v123
  %v126 = vld [vmem:[%s4] sm:$0x1]
  %v128 = vlaneseq
  %v129 = vshrl.u32 %v128, 7
  %v130 = vsub.s32 0, %v129
  %v131 = vrot.slane %v126, %v130
  %v133 = vmul.f32 %v124, %v131
  %v134 = vmul.f32 %v125, %v131
  %v135 = vld [vmem:[%s5] sm:$0x1]
  %v137 = vlaneseq
  %v138 = vshrl.u32 %v137, 7
  %v139 = vsub.s32 0, %v138
  %v140 = vrot.slane %v135, %v139
  %v142 = vadd.f32 %v133, %v140
  %v143 = vadd.f32 %v134, %v140
  %144 = vst.msk [vmem:[%s6] sm:$0xff] %vm50, %v142
  %145 = vst.msk [vmem:[%s6 + $0x8] sm:$0xff] %vm50, %v143
  // Predicated region
  $region26: #{_forward.17} parent=0 // pred_check
    _
  $region27: #{_forward.17} parent=0 // pred_check_branch
    %147 = sbr.rel (0) target = $region29
  $region28: #{_forward.17} parent=0 // pred_region
    _
  $region29: #{_forward.17} parent=0 // pred_fallthru
    _
  // Predicated region
  $region30: #{_forward.17} parent=0 // pred_check
    _
  $region31: #{_forward.17} parent=0 // pred_check_branch
    %149 = sbr.rel (0) target = $region33
  $region32: #{_forward.17} parent=0 // pred_region
    _
  $region33: #{_forward.17} parent=0 // pred_fallthru
    _

// kernel: _forward.18
$region0: #{_forward.18}
  #allocation0 [shape = 'u32[]', space=smem, size = 0x4, offset = 0x4, fixed_abs, tag = 'smem constant byte address 0x4 - core index']
  #allocation1 [shape = 'u32[144,128]{1,0:T(1,128)}', space=vmem, size = 0x12000, scoped, tag = 'internal scratch']
  #allocation2 [shape = 'f32[16,32]{1,0:T(8,128)}', space=vmem, size = 0x2000, scoped, tag = 'scratch operand']
  %s0 = inlined_call_operand.vmem [shape: f32[16,32], index: 0, kind: input, shape index: {}]
  %s1 = inlined_call_operand.vmem [shape: bf16[32,64], index: 1, kind: input, shape index: {}]
  %s2 = inlined_call_operand.vmem [shape: f32[1,64], index: 2, kind: input, shape index: {}]
  %s3 = inlined_call_operand.vmem [shape: bf16[64,32], index: 3, kind: input, shape index: {}]
  %s4 = inlined_call_operand.vmem [shape: f32[1,32], index: 4, kind: input, shape index: {}]
  %s5 = inlined_call_operand.vmem [shape: f32[1,32], index: 5, kind: input, shape index: {}]
  %s6 = inlined_call_operand.vmem [shape: f32[1,32], index: 6, kind: input, shape index: {}]
  %s7 = inlined_call_operand.vmem [shape: f32[16,32], index: 7, kind: output, shape index: {}]
  %s8 = sld [smem:[#allocation0]]
  $region46: #{_forward.18} parent=0
    _
  %s10 = ssub.s32 1, %s8
  %s11 = scalar_select 0, %s10, %s8
  // Predicated region
  $region2: #{_forward.18} parent=0 // pred_check
    _
  $region3: #{_forward.18} parent=0 // pred_check_branch
    %13 = sbr.rel (0) target = $region5
  $region4: #{_forward.18} parent=0 // pred_region
    _
  $region5: #{_forward.18} parent=0 // pred_fallthru
    _
  // Predicated region
  $region6: #{_forward.18} parent=0 // pred_check
    _
  $region7: #{_forward.18} parent=0 // pred_check_branch
    %15 = sbr.rel (0) target = $region9
  $region8: #{_forward.18} parent=0 // pred_region
    _
  $region9: #{_forward.18} parent=0 // pred_fallthru
    _
  // Predicated region
  $region10: #{_forward.18} parent=0 // pred_check
    _
  $region11: #{_forward.18} parent=0 // pred_check_branch
    %17 = sbr.rel (0) target = $region13
  $region12: #{_forward.18} parent=0 // pred_region
    _
  $region13: #{_forward.18} parent=0 // pred_fallthru
    _
  // Predicated region
  $region14: #{_forward.18} parent=0 // pred_check
    _
  $region15: #{_forward.18} parent=0 // pred_check_branch
    %19 = sbr.rel (0) target = $region17
  $region16: #{_forward.18} parent=0 // pred_region
    _
  $region17: #{_forward.18} parent=0 // pred_fallthru
    _
  // Predicated region
  $region18: #{_forward.18} parent=0 // pred_check
    _
  $region19: #{_forward.18} parent=0 // pred_check_branch
    %21 = sbr.rel (0) target = $region21
  $region20: #{_forward.18} parent=0 // pred_region
    _
  $region21: #{_forward.18} parent=0 // pred_fallthru
    _
  // Predicated region
  $region22: #{_forward.18} parent=0 // pred_check
    _
  $region23: #{_forward.18} parent=0 // pred_check_branch
    %23 = sbr.rel (0) target = $region25
  $region24: #{_forward.18} parent=0 // pred_region
    _
  $region25: #{_forward.18} parent=0 // pred_fallthru
    _
  // Predicated region
  $region26: #{_forward.18} parent=0 // pred_check
    _
  $region27: #{_forward.18} parent=0 // pred_check_branch
    %25 = sbr.rel (0) target = $region29
  $region28: #{_forward.18} parent=0 // pred_region
    _
  $region29: #{_forward.18} parent=0 // pred_fallthru
    _
  %p27 = scmp.eq.s32.totalorder 0, 0
  // Predicated region
  $region30: #{_forward.18} parent=0 // pred_check
    %p28 = pneg %p27
  $region31: #{_forward.18} parent=0 // pred_check_branch
    %30 = sbr.rel (%p28) target = $region33
  $region32: #{_forward.18} parent=0 // pred_region
    %vm31 = vcmask 261120
    %32 = vst.msk [vmem:[#allocation2] sm:$0xff] %vm31, 0.0
    %33 = vst.msk [vmem:[#allocation2 + $0x8] sm:$0xff] %vm31, 0.0
  $region33: #{_forward.18} parent=0 // pred_fallthru
    _
  %v34 = vld [vmem:[%s0] sm:$0xff]
  %v35 = vld [vmem:[%s0 + $0x8] sm:$0xff]
  %v36 = vpack.c.bf16 %v35, %v34
  %v37 = vld [vmem:[%s1] sm:$0xf]
  %v38 = vld [vmem:[%s1 + $0x4] sm:$0xf]
  %v39 = vld [vmem:[%s1 + $0x8] sm:$0xf]
  %v40 = vld [vmem:[%s1 + $0xc] sm:$0xf]
  %v41 = vld [vmem:[%s2] sm:$0x1]
  %v43 = vlaneseq
  %v44 = vshrl.u32 %v43, 7
  %v45 = vsub.s32 0, %v44
  %v46 = vrot.slane %v41, %v45
  %v52 = vunpack.c.l.b16 %v37
  %v53 = vunpack.c.l.b16 %v38
  %v54 = vunpack.c.l.b16 %v39
  %v55 = vunpack.c.l.b16 %v40
  %v56 = vpack.c.b16 %v53, %v52
  %v57 = vpack.c.b16 %v55, %v54
  %vm60 = vcmask 261120
  %v62 = vsel %vm60, %v36, 0
  %64 = vmatprep.subr.bf16.mxu0 0
  %65 = vmatpush1.bf16.msra.mxu0 %v56
  %66 = vmatprep.subr.bf16.mxu0 0
  %67 = vmatpush1.bf16.msra.mxu0 %v57
  %68 = vmatprep.subr.bf16.mxu0 0
  %69 = vmatpush1.bf16.msra.mxu0 0
  %70 = vmatprep.subr.bf16.mxu0 0
  %71 = vmatpush1.bf16.msra.mxu0 0
  %72 = vmatprep.subr.bf16.mxu0 0
  %73 = vmatpush1.bf16.msra.mxu0 0
  %74 = vmatprep.subr.bf16.mxu0 0
  %75 = vmatpush1.bf16.msra.mxu0 0
  %76 = vmatprep.subr.bf16.mxu0 0
  %77 = vmatpush1.bf16.msra.mxu0 0
  %78 = vmatprep.subr.bf16.mxu0 0
  %79 = vmatpush1.bf16.msra.mxu0 0
  %80 = vmatprep.subr.bf16.mxu0 0
  %81 = vmatpush1.bf16.msra.mxu0 0
  %82 = vmatprep.subr.bf16.mxu0 0
  %83 = vmatpush1.bf16.msra.mxu0 0
  %84 = vmatprep.subr.bf16.mxu0 0
  %85 = vmatpush1.bf16.msra.mxu0 0
  %86 = vmatprep.subr.bf16.mxu0 0
  %87 = vmatpush1.bf16.msra.mxu0 0
  %88 = vmatprep.subr.bf16.mxu0 0
  %89 = vmatpush1.bf16.msra.mxu0 0
  %90 = vmatprep.subr.bf16.mxu0 0
  %91 = vmatpush1.bf16.msra.mxu0 0
  %92 = vmatprep.subr.bf16.mxu0 0
  %93 = vmatpush1.bf16.msra.mxu0 0
  %94 = vmatprep.subr.bf16.mxu0 0
  %95 = vmatpush1.bf16.msra.mxu0 0
  %96 = vmatprep.mubr.bf16.mxu0 0
  %97 = vmatmul.mubr.bf16.gmra.mrb[0].mxu0 %v62
  %v98 = vpop.f32.mrb[0].mxu0
  %v99 = vadd.f32 %v46, %v98
  %v100 = vpop.f32.mrb[0].mxu0
  %v101 = vpop.f32.mrb[0].mxu0
  %v102 = vadd.f32 %v46, %v101
  %v103 = vpop.f32.mrb[0].mxu0
  %104 = vdwg.mxu0
  %v105 = vmax.f32 %v99, 0.0
  %v106 = vmax.f32 %v102, 0.0
  %v107 = vld [vmem:[#allocation2] sm:$0xff]
  %v108 = vld [vmem:[#allocation2 + $0x8] sm:$0xff]
  %v109 = vpack.c.bf16 %v106, %v105
  %v110 = vld [vmem:[%s3] sm:$0xf]
  %v111 = vld [vmem:[%s3 + $0x4] sm:$0xf]
  %v112 = vld [vmem:[%s3 + $0x8] sm:$0xf]
  %v113 = vld [vmem:[%s3 + $0xc] sm:$0xf]
  %v114 = vld [vmem:[%s3 + $0x10] sm:$0xf]
  %v115 = vld [vmem:[%s3 + $0x14] sm:$0xf]
  %v116 = vld [vmem:[%s3 + $0x18] sm:$0xf]
  %v117 = vld [vmem:[%s3 + $0x1c] sm:$0xf]
  %v126 = vunpack.c.l.b16 %v110
  %v127 = vunpack.c.l.b16 %v111
  %v128 = vunpack.c.l.b16 %v112
  %v129 = vunpack.c.l.b16 %v113
  %v130 = vunpack.c.l.b16 %v114
  %v131 = vunpack.c.l.b16 %v115
  %v132 = vunpack.c.l.b16 %v116
  %v133 = vunpack.c.l.b16 %v117
  %v134 = vpack.c.b16 %v127, %v126
  %v135 = vpack.c.b16 %v129, %v128
  %v136 = vpack.c.b16 %v131, %v130
  %v137 = vpack.c.b16 %v133, %v132
  %vm142 = vcmask 523264
  %v144 = vsel %vm142, %v109, 0
  %146 = vmatprep.subr.bf16.mxu0 0
  %147 = vmatpush1.bf16.msra.mxu0 %v134
  %148 = vmatprep.subr.bf16.mxu0 0
  %149 = vmatpush1.bf16.msra.mxu0 %v135
  %150 = vmatprep.subr.bf16.mxu0 0
  %151 = vmatpush1.bf16.msra.mxu0 %v136
  %152 = vmatprep.subr.bf16.mxu0 0
  %153 = vmatpush1.bf16.msra.mxu0 %v137
  %154 = vmatprep.subr.bf16.mxu0 0
  %155 = vmatpush1.bf16.msra.mxu0 0
  %156 = vmatprep.subr.bf16.mxu0 0
  %157 = vmatpush1.bf16.msra.mxu0 0
  %158 = vmatprep.subr.bf16.mxu0 0
  %159 = vmatpush1.bf16.msra.mxu0 0
  %160 = vmatprep.subr.bf16.mxu0 0
  %161 = vmatpush1.bf16.msra.mxu0 0
  %162 = vmatprep.subr.bf16.mxu0 0
  %163 = vmatpush1.bf16.msra.mxu0 0
  %164 = vmatprep.subr.bf16.mxu0 0
  %165 = vmatpush1.bf16.msra.mxu0 0
  %166 = vmatprep.subr.bf16.mxu0 0
  %167 = vmatpush1.bf16.msra.mxu0 0
  %168 = vmatprep.subr.bf16.mxu0 0
  %169 = vmatpush1.bf16.msra.mxu0 0
  %170 = vmatprep.subr.bf16.mxu0 0
  %171 = vmatpush1.bf16.msra.mxu0 0
  %172 = vmatprep.subr.bf16.mxu0 0
  %173 = vmatpush1.bf16.msra.mxu0 0
  %174 = vmatprep.subr.bf16.mxu0 0
  %175 = vmatpush1.bf16.msra.mxu0 0
  %176 = vmatprep.subr.bf16.mxu0 0
  %177 = vmatpush1.bf16.msra.mxu0 0
  %178 = vmatprep.mubr.bf16.mxu0 0
  %179 = vmatmul.mubr.bf16.gmra.mrb[0].mxu0 %v144
  %v180 = vpop.f32.mrb[0].mxu0
  %v181 = vadd.f32 0.0, %v180
  %v182 = vpop.f32.mrb[0].mxu0
  %v183 = vpop.f32.mrb[0].mxu0
  %v184 = vadd.f32 0.0, %v183
  %v185 = vpop.f32.mrb[0].mxu0
  %186 = vdwg.mxu0
  %v187 = vadd.f32 %v107, %v181
  %v188 = vadd.f32 %v108, %v184
  %189 = vst.msk [vmem:[#allocation2] sm:$0xff] %vm60, %v187
  %190 = vst.msk [vmem:[#allocation2 + $0x8] sm:$0xff] %vm60, %v188
  // Predicated region
  $region34: #{_forward.18} parent=0 // pred_check
    %p191 = pneg %p27
  $region35: #{_forward.18} parent=0 // pred_check_branch
    %193 = sbr.rel (%p191) target = $region37
  $region36: #{_forward.18} parent=0 // pred_region
    %v194 = vld [vmem:[%s0] sm:$0xff]
    %v195 = vld [vmem:[%s0 + $0x8] sm:$0xff]
    %v196 = vld [vmem:[#allocation2] sm:$0xff]
    %v197 = vld [vmem:[#allocation2 + $0x8] sm:$0xff]
    %v198 = vadd.f32 %v194, %v196
    %v199 = vadd.f32 %v195, %v197
    %v200 = vld [vmem:[%s4] sm:$0x1]
    %v202 = vlaneseq
    %v203 = vshrl.u32 %v202, 7
    %v204 = vsub.s32 0, %v203
    %v205 = vrot.slane %v200, %v204
    %v207 = vadd.f32 %v198, %v205
    %v208 = vadd.f32 %v199, %v205
    %v209 = vsel %vm60, %v207, 0.0
    %210 = vadd.xlane.f32.xlu0 %v209
    %v211 = vpop.xlane.xlu0 %210
    %v212 = vsel %vm60, %v208, 0.0
    %213 = vadd.xlane.f32.xlu0 %v212
    %v214 = vpop.xlane.xlu0 %213
    %v215 = vrcp.pop 32.0
    %v216 = vmul.f32 %v211, %v215
    %v217 = vmul.f32 %v214, %v215
    %v218 = vsub.f32 %v207, %v216
    %v219 = vsub.f32 %v208, %v217
    %v220 = vmul.f32 %v218, %v218
    %v221 = vmul.f32 %v219, %v219
    %v222 = vsel %vm60, %v220, 0.0
    %223 = vadd.xlane.f32.xlu0 %v222
    %v224 = vpop.xlane.xlu0 %223
    %v225 = vsel %vm60, %v221, 0.0
    %226 = vadd.xlane.f32.xlu0 %v225
    %v227 = vpop.xlane.xlu0 %226
    %v228 = vmul.f32 %v224, %v215
    %v229 = vmul.f32 %v227, %v215
    %v230 = vadd.f32 %v228, 1e-05
    %v231 = vadd.f32 %v229, 1e-05
    %v232 = vrsqrt.pop %v230
    %v233 = vrsqrt.pop %v231
    %v234 = vmul.f32 %v218, %v232
    %v235 = vmul.f32 %v219, %v233
    %v236 = vld [vmem:[%s5] sm:$0x1]
    %v238 = vlaneseq
    %v239 = vshrl.u32 %v238, 7
    %v240 = vsub.s32 0, %v239
    %v241 = vrot.slane %v236, %v240
    %v243 = vmul.f32 %v234, %v241
    %v244 = vmul.f32 %v235, %v241
    %v245 = vld [vmem:[%s6] sm:$0x1]
    %v247 = vlaneseq
    %v248 = vshrl.u32 %v247, 7
    %v249 = vsub.s32 0, %v248
    %v250 = vrot.slane %v245, %v249
    %v252 = vadd.f32 %v243, %v250
    %v253 = vadd.f32 %v244, %v250
    %254 = vst.msk [vmem:[%s7] sm:$0xff] %vm60, %v252
    %255 = vst.msk [vmem:[%s7 + $0x8] sm:$0xff] %vm60, %v253
  $region37: #{_forward.18} parent=0 // pred_fallthru
    _
  // Predicated region
  $region38: #{_forward.18} parent=0 // pred_check
    _
  $region39: #{_forward.18} parent=0 // pred_check_branch
    %257 = sbr.rel (0) target = $region41
  $region40: #{_forward.18} parent=0 // pred_region
    _
  $region41: #{_forward.18} parent=0 // pred_fallthru
    _
  // Predicated region
  $region42: #{_forward.18} parent=0 // pred_check
    _
  $region43: #{_forward.18} parent=0 // pred_check_branch
    %259 = sbr.rel (0) target = $region45
  $region44: #{_forward.18} parent=0 // pred_region
    _
  $region45: #{_forward.18} parent=0 // pred_fallthru
    _

// kernel: _forward.16
$region0: #{_forward.16}
  #allocation0 [shape = 'u32[]', space=smem, size = 0x4, offset = 0x4, fixed_abs, tag = 'smem constant byte address 0x4 - core index']
  #allocation1 [shape = 'u32[144,128]{1,0:T(1,128)}', space=vmem, size = 0x12000, scoped, tag = 'internal scratch']
  %s0 = inlined_call_operand.vmem [shape: f32[2,8,32], index: 0, kind: input, shape index: {}]
  %s1 = inlined_call_operand.vmem [shape: bf16[32,96], index: 1, kind: input, shape index: {}]
  %s2 = inlined_call_operand.vmem [shape: f32[1,96], index: 2, kind: input, shape index: {}]
  %s3 = inlined_call_operand.vmem [shape: f32[2,8,32], index: 3, kind: output, shape index: {0}]
  %s4 = inlined_call_operand.vmem [shape: f32[2,8,8], index: 4, kind: output, shape index: {1}]
  %5 = xla_tuple %s3, %s4
  %s6 = sld [smem:[#allocation0]]
  $region53: #{_forward.16} parent=0
    _
  %s8 = ssub.s32 1, %s6
  %s9 = scalar_select 0, %s8, %s6
  loop: start=0, step=1, limit=4
  $region2: #{_forward.16} parent=0 // loop_pre_header
    _
  $region3: #{_forward.16} parent=0 // loop_header
    %s11 = sphi 0, %s15
    %p12 = scmp.ge.s32.totalorder %s11, 4
    %s21 = sphi 0, %s23
    %s24 = sphi 0, %s21
    %s25 = sphi 0, %s24
    %s41 = sphi 0, %s25
    %s45 = sphi 0, %s45
    %s47 = sphi 0, %s45
    %s48 = sphi 0, %s47
    %s62 = sphi 0, %s48
    %s66 = sphi 0, %s66
    %s68 = sphi 0, %s66
    %s69 = sphi 0, %s68
    %s83 = sphi 0, %s69
    %s89 = sphi 0, %s91
    %s92 = sphi 0, %s89
    %s93 = sphi 0, %s92
    %s109 = sphi 0, %s93
    %s115 = sphi 0, %s117
    %s118 = sphi 0, %s115
    %s119 = sphi 0, %s118
    %s135 = sphi 0, %s119
  $region4: #{_forward.16} parent=0 // loop_header_branch
    %14 = sbr.rel (%p12) target = $region8
  $region5: #{_forward.16} parent=0 // loop_body
    %s16 = ssub.s32 %s11, 1
    %s17 = ssub.s32 %s11, 2
    %s18 = sadd.s32 %s11, 1
    %s19 = ssub.s32 %s11, %s18
    %p20 = scmp.eq.s32.totalorder %s19, 0
    %s22 = sadd.s32 %s21, 1
    %s23 = scalar_select %p20, %s21, %s22
    %p26 = pneg %p20
    %p27 = scmp.eq.s32.totalorder %s11, 1
    %p28 = por %p26, %p27
    %p29 = scmp.ne.s32.totalorder %s21, %s24
    %p30 = scmp.eq.s32.totalorder %s11, 0
    %p31 = por %p29, %p30
    %p32 = scmp.ne.s32.totalorder %s21, %s24
    %p33 = scmp.eq.s32.totalorder %s16, 1
    %p34 = por %p32, %p33
    %p35 = scmp.ne.s32.totalorder %s24, %s25
    %p36 = scmp.eq.s32.totalorder %s16, 0
    %p37 = por %p35, %p36
    %p38 = scmp.ne.s32.totalorder %s24, %s25
    %p39 = scmp.eq.s32.totalorder %s17, 1
    %p40 = por %p38, %p39
    %p42 = scmp.ne.s32.totalorder %s25, %s41
    %p43 = scmp.eq.s32.totalorder %s17, 0
    %p44 = por %p42, %p43
    %s46 = sadd.s32 %s45, 1
    %p49 = scmp.eq.s32.totalorder %s11, 1
    %p50 = scmp.ne.s32.totalorder %s45, %s47
    %p51 = scmp.eq.s32.totalorder %s11, 0
    %p52 = por %p50, %p51
    %p53 = scmp.ne.s32.totalorder %s45, %s47
    %p54 = scmp.eq.s32.totalorder %s16, 1
    %p55 = por %p53, %p54
    %p56 = scmp.ne.s32.totalorder %s47, %s48
    %p57 = scmp.eq.s32.totalorder %s16, 0
    %p58 = por %p56, %p57
    %p59 = scmp.ne.s32.totalorder %s47, %s48
    %p60 = scmp.eq.s32.totalorder %s17, 1
    %p61 = por %p59, %p60
    %p63 = scmp.ne.s32.totalorder %s48, %s62
    %p64 = scmp.eq.s32.totalorder %s17, 0
    %p65 = por %p63, %p64
    %s67 = sadd.s32 %s66, 1
    %p70 = scmp.eq.s32.totalorder %s11, 1
    %p71 = scmp.ne.s32.totalorder %s66, %s68
    %p72 = scmp.eq.s32.totalorder %s11, 0
    %p73 = por %p71, %p72
    %p74 = scmp.ne.s32.totalorder %s66, %s68
    %p75 = scmp.eq.s32.totalorder %s16, 1
    %p76 = por %p74, %p75
    %p77 = scmp.ne.s32.totalorder %s68, %s69
    %p78 = scmp.eq.s32.totalorder %s16, 0
    %p79 = por %p77, %p78
    %p80 = scmp.ne.s32.totalorder %s68, %s69
    %p81 = scmp.eq.s32.totalorder %s17, 1
    %p82 = por %p80, %p81
    %p84 = scmp.ne.s32.totalorder %s69, %s83
    %p85 = scmp.eq.s32.totalorder %s17, 0
    %p86 = por %p84, %p85
    %s87 = ssub.s32 %s11, %s18
    %p88 = scmp.eq.s32.totalorder %s87, 0
    %s90 = sadd.s32 %s89, 1
    %s91 = scalar_select %p88, %s89, %s90
    %p94 = pneg %p88
    %p95 = scmp.eq.s32.totalorder %s11, 1
    %p96 = por %p94, %p95
    %p97 = scmp.ne.s32.totalorder %s89, %s92
    %p98 = scmp.eq.s32.totalorder %s11, 0
    %p99 = por %p97, %p98
    %p100 = scmp.ne.s32.totalorder %s89, %s92
    %p101 = scmp.eq.s32.totalorder %s16, 1
    %p102 = por %p100, %p101
    %p103 = scmp.ne.s32.totalorder %s92, %s93
    %p104 = scmp.eq.s32.totalorder %s16, 0
    %p105 = por %p103, %p104
    %p106 = scmp.ne.s32.totalorder %s92, %s93
    %p107 = scmp.eq.s32.totalorder %s17, 1
    %p108 = por %p106, %p107
    %p110 = scmp.ne.s32.totalorder %s93, %s109
    %p111 = scmp.eq.s32.totalorder %s17, 0
    %p112 = por %p110, %p111
    %s113 = ssub.s32 %s11, %s18
    %p114 = scmp.eq.s32.totalorder %s113, 0
    %s116 = sadd.s32 %s115, 1
    %s117 = scalar_select %p114, %s115, %s116
    %p120 = pneg %p114
    %p121 = scmp.eq.s32.totalorder %s11, 1
    %p122 = por %p120, %p121
    %p123 = scmp.ne.s32.totalorder %s115, %s118
    %p124 = scmp.eq.s32.totalorder %s11, 0
    %p125 = por %p123, %p124
    %p126 = scmp.ne.s32.totalorder %s115, %s118
    %p127 = scmp.eq.s32.totalorder %s16, 1
    %p128 = por %p126, %p127
    %p129 = scmp.ne.s32.totalorder %s118, %s119
    %p130 = scmp.eq.s32.totalorder %s16, 0
    %p131 = por %p129, %p130
    %p132 = scmp.ne.s32.totalorder %s118, %s119
    %p133 = scmp.eq.s32.totalorder %s17, 1
    %p134 = por %p132, %p133
    %p136 = scmp.ne.s32.totalorder %s119, %s135
    %p137 = scmp.eq.s32.totalorder %s17, 0
    %p138 = por %p136, %p137
    %p139 = scmp.le.s32.totalorder 1, %s11
    %p140 = scmp.lt.s32.totalorder %s11, 3
    %p141 = pnand %p139, %p140
    %p142 = pneg %p141
    // Predicated region
    $region9: #{_forward.16} parent=5 // pred_check
      _
    $region10: #{_forward.16} parent=5 // pred_check_branch
      %144 = sbr.rel (%p141) target = $region12
    $region11: #{_forward.16} parent=5 // pred_region
      %s145 = ssub.s32 %s11, 1
      // Predicated region
      $region13: #{_forward.16} parent=11 // pred_check
        %p146 = pneg %p58
      $region14: #{_forward.16} parent=11 // pred_check_branch
        %148 = sbr.rel (%p146) target = $region16
      $region15: #{_forward.16} parent=11 // pred_region
        _
      $region16: #{_forward.16} parent=11 // pred_fallthru
        _
      // Predicated region
      $region17: #{_forward.16} parent=11 // pred_check
        %p149 = pneg %p79
      $region18: #{_forward.16} parent=11 // pred_check_branch
        %151 = sbr.rel (%p149) target = $region20
      $region19: #{_forward.16} parent=11 // pred_region
        _
      $region20: #{_forward.16} parent=11 // pred_fallthru
        _
    $region12: #{_forward.16} parent=5 // pred_fallthru
      _
    %p152 = scmp.lt.s32.totalorder %s11, 2
    // Predicated region
    $region21: #{_forward.16} parent=5 // pred_check
      %p153 = pneg %p152
    $region22: #{_forward.16} parent=5 // pred_check_branch
      %155 = sbr.rel (%p153) target = $region24
    $region23: #{_forward.16} parent=5 // pred_region
      // Predicated region
      $region25: #{_forward.16} parent=23 // pred_check
        %p156 = pneg %p31
      $region26: #{_forward.16} parent=23 // pred_check_branch
        %158 = sbr.rel (%p156) target = $region28
      $region27: #{_forward.16} parent=23 // pred_region
        %p159 = scmp.lt.s32.totalorder %s11, 1
        %s160 = scalar_select %p159, %s11, 1
        %s161 = smul.addr %s160, 8
        %s162 = scalar_lea.vmem %s0, %s161
      $region28: #{_forward.16} parent=23 // pred_fallthru
        _
    $region24: #{_forward.16} parent=5 // pred_fallthru
      _
    %p163 = scmp.le.s32.totalorder 1, %s11
    %p164 = scmp.lt.s32.totalorder %s11, 3
    %p165 = pnand %p163, %p164
    %p166 = pneg %p165
    // Predicated region
    $region29: #{_forward.16} parent=5 // pred_check
      _
    $region30: #{_forward.16} parent=5 // pred_check_branch
      %168 = sbr.rel (%p165) target = $region32
    $region31: #{_forward.16} parent=5 // pred_region
      %s169 = ssub.s32 %s11, 1
      %p170 = scmp.lt.s32.totalorder %s16, 1
      %s171 = scalar_select %p170, %s16, 1
      %s172 = smul.addr %s171, 8
      %s173 = scalar_lea.vmem %s0, %s172
      %p174 = pneg %p37
      %p175 = pneg %p34
      %p176 = pneg %p58
      %p177 = pneg %p55
      %p178 = pneg %p79
      %p179 = pneg %p76
      %p180 = pneg %p105
      %p181 = pneg %p102
      %p182 = scmp.lt.s32.totalorder %s16, 1
      %s183 = scalar_select %p182, %s16, 1
      %s184 = smul.addr %s183, 8
      %s185 = scalar_lea.vmem %s3, %s184
      %p186 = pneg %p131
      %p187 = pneg %p128
      %p188 = scmp.lt.s32.totalorder %s16, 1
      %s189 = scalar_select %p188, %s16, 1
      %s190 = smul.addr %s189, 8
      %s191 = scalar_lea.vmem %s4, %s190
      %p192 = scmp.lt.s32.totalorder %s16, 1
      %s193 = scalar_select %p192, %s16, 1
      %s194 = smul.addr %s193, 8
      %s195 = scalar_lea.vmem %s0, %s194
      %p196 = scmp.lt.s32.totalorder %s16, 1
      %s197 = scalar_select %p196, %s16, 1
      %s198 = smul.addr %s197, 8
      %s199 = scalar_lea.vmem %s3, %s198
      %p200 = scmp.lt.s32.totalorder %s16, 1
      %s201 = scalar_select %p200, %s16, 1
      %s202 = smul.addr %s201, 8
      %s203 = scalar_lea.vmem %s4, %s202
      %v205 = vld [vmem:[%s195] sm:$0xff]
      %v206 = vpack.c.bf16 %v205, %v205
      %v207 = vld [vmem:[%s1] sm:$0xf]
      %v208 = vld [vmem:[%s1 + $0x4] sm:$0xf]
      %v209 = vld [vmem:[%s1 + $0x8] sm:$0xf]
      %v210 = vld [vmem:[%s1 + $0xc] sm:$0xf]
      %v211 = vld [vmem:[%s2] sm:$0x1]
      %v213 = vlaneseq
      %v214 = vshrl.u32 %v213, 7
      %v215 = vsub.s32 0, %v214
      %v216 = vrot.slane %v211, %v215
      %v222 = vunpack.c.l.b16 %v207
      %v223 = vunpack.c.l.b16 %v208
      %v224 = vunpack.c.l.b16 %v209
      %v225 = vunpack.c.l.b16 %v210
      %v226 = vpack.c.b16 %v223, %v222
      %v227 = vpack.c.b16 %v225, %v224
      %vm230 = vcmask 261120
      %v232 = vsel %vm230, %v206, 0
      %234 = vmatprep.subr.bf16.mxu0 0
      %235 = vmatpush1.bf16.msra.mxu0 %v226
      %236 = vmatprep.subr.bf16.mxu0 0
      %237 = vmatpush1.bf16.msra.mxu0 %v227
      %238 = vmatprep.subr.bf16.mxu0 0
      %239 = vmatpush1.bf16.msra.mxu0 0
      %240 = vmatprep.subr.bf16.mxu0 0
      %241 = vmatpush1.bf16.msra.mxu0 0
      %242 = vmatprep.subr.bf16.mxu0 0
      %243 = vmatpush1.bf16.msra.mxu0 0
      %244 = vmatprep.subr.bf16.mxu0 0
      %245 = vmatpush1.bf16.msra.mxu0 0
      %246 = vmatprep.subr.bf16.mxu0 0
      %247 = vmatpush1.bf16.msra.mxu0 0
      %248 = vmatprep.subr.bf16.mxu0 0
      %249 = vmatpush1.bf16.msra.mxu0 0
      %250 = vmatprep.subr.bf16.mxu0 0
      %251 = vmatpush1.bf16.msra.mxu0 0
      %252 = vmatprep.subr.bf16.mxu0 0
      %253 = vmatpush1.bf16.msra.mxu0 0
      %254 = vmatprep.subr.bf16.mxu0 0
      %255 = vmatpush1.bf16.msra.mxu0 0
      %256 = vmatprep.subr.bf16.mxu0 0
      %257 = vmatpush1.bf16.msra.mxu0 0
      %258 = vmatprep.subr.bf16.mxu0 0
      %259 = vmatpush1.bf16.msra.mxu0 0
      %260 = vmatprep.subr.bf16.mxu0 0
      %261 = vmatpush1.bf16.msra.mxu0 0
      %262 = vmatprep.subr.bf16.mxu0 0
      %263 = vmatpush1.bf16.msra.mxu0 0
      %264 = vmatprep.subr.bf16.mxu0 0
      %265 = vmatpush1.bf16.msra.mxu0 0
      %266 = vmatprep.mubr.bf16.mxu0 0
      %267 = vmatmul.mubr.bf16.gmra.mrb[0].mxu0 %v232
      %v268 = vpop.f32.mrb[0].mxu0
      %v269 = vadd.f32 %v216, %v268
      %v270 = vpop.f32.mrb[0].mxu0
      %v271 = vpop.f32.mrb[0].mxu0
      %v272 = vpop.f32.mrb[0].mxu0
      %273 = vdwg.mxu0
      %v274 = vpack.c.bf16 %v269, %v269
      %276 = vrot.lane.b32.xlu0 %v274, 96
      %v277 = vpop.permute.xlu0 %276
      %vm278 = vcmask 64512
      %v280 = vsel %vm278, %v274, 0
      %v283 = vsel %vm278, %v277, 0
      %285 = vmatprep.subr.bf16.mxu0 0
      %286 = vmatpush1.bf16.xpose.msra.mxu0 %v283
      %287 = vmatprep.subr.bf16.mxu0 0
      %288 = vmatpush1.bf16.xpose.msra.mxu0 0
      %289 = vmatprep.subr.bf16.mxu0 0
      %290 = vmatpush1.bf16.xpose.msra.mxu0 0
      %291 = vmatprep.subr.bf16.mxu0 0
      %292 = vmatpush1.bf16.xpose.msra.mxu0 0
      %293 = vmatprep.subr.bf16.mxu0 0
      %294 = vmatpush1.bf16.xpose.msra.mxu0 0
      %295 = vmatprep.subr.bf16.mxu0 0
      %296 = vmatpush1.bf16.xpose.msra.mxu0 0
      %297 = vmatprep.subr.bf16.mxu0 0
      %298 = vmatpush1.bf16.xpose.msra.mxu0 0
      %299 = vmatprep.subr.bf16.mxu0 0
      %300 = vmatpush1.bf16.xpose.msra.mxu0 0
      %301 = vmatprep.subr.bf16.mxu0 0
      %302 = vmatpush1.bf16.xpose.msra.mxu0 0
      %303 = vmatprep.subr.bf16.mxu0 0
      %304 = vmatpush1.bf16.xpose.msra.mxu0 0
      %305 = vmatprep.subr.bf16.mxu0 0
      %306 = vmatpush1.bf16.xpose.msra.mxu0 0
      %307 = vmatprep.subr.bf16.mxu0 0
      %308 = vmatpush1.bf16.xpose.msra.mxu0 0
      %309 = vmatprep.subr.bf16.mxu0 0
      %310 = vmatpush1.bf16.xpose.msra.mxu0 0
      %311 = vmatprep.subr.bf16.mxu0 0
      %312 = vmatpush1.bf16.xpose.msra.mxu0 0
      %313 = vmatprep.subr.bf16.mxu0 0
      %314 = vmatpush1.bf16.xpose.msra.mxu0 0
      %315 = vmatprep.subr.bf16.mxu0 0
      %316 = vmatpush1.bf16.xpose.msra.mxu0 0
      %317 = vmatprep.mubr.bf16.mxu0 0
      %318 = vmatmul.mubr.bf16.gmra.mrb[0].mxu0 %v280
      %v319 = vpop.f32.mrb[0].mxu0
      %v320 = vadd.f32 0.0, %v319
      %v321 = vpop.f32.mrb[0].mxu0
      %v322 = vpop.f32.mrb[0].mxu0
      %v323 = vpop.f32.mrb[0].mxu0
      %324 = vdwg.mxu0
      %v325 = vsel %vm278, %v320, -inf
      %326 = vmax.xlane.f32.xlu0 %v325
      %v327 = vpop.xlane.xlu0 %326
      %v328 = vsub.f32 %v320, %v327
      %v329 = vmul.f32 %v328, 1.442695
      %v330 = vpow.pop %v329
      %v331 = vsel %vm278, %v330, 0.0
      %332 = vadd.xlane.f32.xlu0 %v331
      %v333 = vpop.xlane.xlu0 %332
      %v334 = vrcp.pop %v333
      %v335 = vmul.f32 %v330, %v334
      %v336 = vpack.c.bf16 %v335, %v335
      %337 = vrot.lane.b32.xlu0 %v274, 64
      %v338 = vpop.permute.xlu0 %337
      %v340 = vsel %vm278, %v336, 0
      %vm342 = vcmask 1043456
      %v344 = vsel %vm342, %v338, 0
      %346 = vmatprep.subr.bf16.mxu0 0
      %347 = vmatpush1.bf16.msra.mxu0 %v344
      %348 = vmatprep.subr.bf16.mxu0 0
      %349 = vmatpush1.bf16.msra.mxu0 0
      %350 = vmatprep.subr.bf16.mxu0 0
      %351 = vmatpush1.bf16.msra.mxu0 0
      %352 = vmatprep.subr.bf16.mxu0 0
      %353 = vmatpush1.bf16.msra.mxu0 0
      %354 = vmatprep.subr.bf16.mxu0 0
      %355 = vmatpush1.bf16.msra.mxu0 0
      %356 = vmatprep.subr.bf16.mxu0 0
      %357 = vmatpush1.bf16.msra.mxu0 0
      %358 = vmatprep.subr.bf16.mxu0 0
      %359 = vmatpush1.bf16.msra.mxu0 0
      %360 = vmatprep.subr.bf16.mxu0 0
      %361 = vmatpush1.bf16.msra.mxu0 0
      %362 = vmatprep.subr.bf16.mxu0 0
      %363 = vmatpush1.bf16.msra.mxu0 0
      %364 = vmatprep.subr.bf16.mxu0 0
      %365 = vmatpush1.bf16.msra.mxu0 0
      %366 = vmatprep.subr.bf16.mxu0 0
      %367 = vmatpush1.bf16.msra.mxu0 0
      %368 = vmatprep.subr.bf16.mxu0 0
      %369 = vmatpush1.bf16.msra.mxu0 0
      %370 = vmatprep.subr.bf16.mxu0 0
      %371 = vmatpush1.bf16.msra.mxu0 0
      %372 = vmatprep.subr.bf16.mxu0 0
      %373 = vmatpush1.bf16.msra.mxu0 0
      %374 = vmatprep.subr.bf16.mxu0 0
      %375 = vmatpush1.bf16.msra.mxu0 0
      %376 = vmatprep.subr.bf16.mxu0 0
      %377 = vmatpush1.bf16.msra.mxu0 0
      %378 = vmatprep.mubr.bf16.mxu0 0
      %379 = vmatmul.mubr.bf16.gmra.mrb[0].mxu0 %v340
      %v380 = vpop.f32.mrb[0].mxu0
      %v381 = vadd.f32 0.0, %v380
      %v382 = vpop.f32.mrb[0].mxu0
      %v383 = vpop.f32.mrb[0].mxu0
      %v384 = vpop.f32.mrb[0].mxu0
      %385 = vdwg.mxu0
      %386 = vst.msk [vmem:[%s199] sm:$0xff] %vm278, %v381
      %387 = vrot.lane.b32.xlu0 %v274, 120
      %v388 = vpop.permute.xlu0 %387
      %389 = vrot.lane.b32.xlu0 %v274, 88
      %v390 = vpop.permute.xlu0 %389
      %v392 = vsel %vm278, %v388, 0
      %v395 = vsel %vm278, %v390, 0
      %397 = vmatprep.subr.bf16.mxu0 0
      %398 = vmatpush1.bf16.xpose.msra.mxu0 %v395
      %399 = vmatprep.subr.bf16.mxu0 0
      %400 = vmatpush1.bf16.xpose.msra.mxu0 0
      %401 = vmatprep.subr.bf16.mxu0 0
      %402 = vmatpush1.bf16.xpose.msra.mxu0 0
      %403 = vmatprep.subr.bf16.mxu0 0
      %404 = vmatpush1.bf16.xpose.msra.mxu0 0
      %405 = vmatprep.subr.bf16.mxu0 0
      %406 = vmatpush1.bf16.xpose.msra.mxu0 0
      %407 = vmatprep.subr.bf16.mxu0 0
      %408 = vmatpush1.bf16.xpose.msra.mxu0 0
      %409 = vmatprep.subr.bf16.mxu0 0
      %410 = vmatpush1.bf16.xpose.msra.mxu0 0
      %411 = vmatprep.subr.bf16.mxu0 0
      %412 = vmatpush1.bf16.xpose.msra.mxu0 0
      %413 = vmatprep.subr.bf16.mxu0 0
      %414 = vmatpush1.bf16.xpose.msra.mxu0 0
      %415 = vmatprep.subr.bf16.mxu0 0
      %416 = vmatpush1.bf16.xpose.msra.mxu0 0
      %417 = vmatprep.subr.bf16.mxu0 0
      %418 = vmatpush1.bf16.xpose.msra.mxu0 0
      %419 = vmatprep.subr.bf16.mxu0 0
      %420 = vmatpush1.bf16.xpose.msra.mxu0 0
      %421 = vmatprep.subr.bf16.mxu0 0
      %422 = vmatpush1.bf16.xpose.msra.mxu0 0
      %423 = vmatprep.subr.bf16.mxu0 0
      %424 = vmatpush1.bf16.xpose.msra.mxu0 0
      %425 = vmatprep.subr.bf16.mxu0 0
      %426 = vmatpush1.bf16.xpose.msra.mxu0 0
      %427 = vmatprep.subr.bf16.mxu0 0
      %428 = vmatpush1.bf16.xpose.msra.mxu0 0
      %429 = vmatprep.mubr.bf16.mxu0 0
      %430 = vmatmul.mubr.bf16.gmra.mrb[0].mxu0 %v392
      %v431 = vpop.f32.mrb[0].mxu0
      %v432 = vadd.f32 0.0, %v431
      %v433 = vpop.f32.mrb[0].mxu0
      %v434 = vpop.f32.mrb[0].mxu0
      %v435 = vpop.f32.mrb[0].mxu0
      %436 = vdwg.mxu0
      %v437 = vsel %vm278, %v432, -inf
      %438 = vmax.xlane.f32.xlu0 %v437
      %v439 = vpop.xlane.xlu0 %438
      %v440 = vsub.f32 %v432, %v439
      %v441 = vmul.f32 %v440, 1.442695
      %v442 = vpow.pop %v441
      %v443 = vsel %vm278, %v442, 0.0
      %444 = vadd.xlane.f32.xlu0 %v443
      %v445 = vpop.xlane.xlu0 %444
      %v446 = vrcp.pop %v445
      %v447 = vmul.f32 %v442, %v446
      %v448 = vpack.c.bf16 %v447, %v447
      %449 = vrot.lane.b32.xlu0 %v274, 56
      %v450 = vpop.permute.xlu0 %449
      %v452 = vsel %vm278, %v448, 0
      %v455 = vsel %vm342, %v450, 0
      %457 = vmatprep.subr.bf16.mxu0 0
      %458 = vmatpush1.bf16.msra.mxu0 %v455
      %459 = vmatprep.subr.bf16.mxu0 0
      %460 = vmatpush1.bf16.msra.mxu0 0
      %461 = vmatprep.subr.bf16.mxu0 0
      %462 = vmatpush1.bf16.msra.mxu0 0
      %463 = vmatprep.subr.bf16.mxu0 0
      %464 = vmatpush1.bf16.msra.mxu0 0
      %465 = vmatprep.subr.bf16.mxu0 0
      %466 = vmatpush1.bf16.msra.mxu0 0
      %467 = vmatprep.subr.bf16.mxu0 0
      %468 = vmatpush1.bf16.msra.mxu0 0
      %469 = vmatprep.subr.bf16.mxu0 0
      %470 = vmatpush1.bf16.msra.mxu0 0
      %471 = vmatprep.subr.bf16.mxu0 0
      %472 = vmatpush1.bf16.msra.mxu0 0
      %473 = vmatprep.subr.bf16.mxu0 0
      %474 = vmatpush1.bf16.msra.mxu0 0
      %475 = vmatprep.subr.bf16.mxu0 0
      %476 = vmatpush1.bf16.msra.mxu0 0
      %477 = vmatprep.subr.bf16.mxu0 0
      %478 = vmatpush1.bf16.msra.mxu0 0
      %479 = vmatprep.subr.bf16.mxu0 0
      %480 = vmatpush1.bf16.msra.mxu0 0
      %481 = vmatprep.subr.bf16.mxu0 0
      %482 = vmatpush1.bf16.msra.mxu0 0
      %483 = vmatprep.subr.bf16.mxu0 0
      %484 = vmatpush1.bf16.msra.mxu0 0
      %485 = vmatprep.subr.bf16.mxu0 0
      %486 = vmatpush1.bf16.msra.mxu0 0
      %487 = vmatprep.subr.bf16.mxu0 0
      %488 = vmatpush1.bf16.msra.mxu0 0
      %489 = vmatprep.mubr.bf16.mxu0 0
      %490 = vmatmul.mubr.bf16.gmra.mrb[0].mxu0 %v452
      %v491 = vpop.f32.mrb[0].mxu0
      %v492 = vadd.f32 0.0, %v491
      %v493 = vpop.f32.mrb[0].mxu0
      %v494 = vpop.f32.mrb[0].mxu0
      %v495 = vpop.f32.mrb[0].mxu0
      %496 = vdwg.mxu0
      %498 = vrot.lane.b32.xlu0 %v492, 8
      %v499 = vpop.permute.xlu0 %498
      %vm501 = vcmask 130112
      %502 = vst.msk [vmem:[%s199] sm:$0xff] %vm501, %v499
      %v503 = vadd.f32 %v335, %v447
      %504 = vrot.lane.b32.xlu0 %v274, 112
      %v505 = vpop.permute.xlu0 %504
      %506 = vrot.lane.b32.xlu0 %v274, 80
      %v507 = vpop.permute.xlu0 %506
      %v509 = vsel %vm278, %v505, 0
      %v512 = vsel %vm278, %v507, 0
      %514 = vmatprep.subr.bf16.mxu0 0
      %515 = vmatpush1.bf16.xpose.msra.mxu0 %v512
      %516 = vmatprep.subr.bf16.mxu0 0
      %517 = vmatpush1.bf16.xpose.msra.mxu0 0
      %518 = vmatprep.subr.bf16.mxu0 0
      %519 = vmatpush1.bf16.xpose.msra.mxu0 0
      %520 = vmatprep.subr.bf16.mxu0 0
      %521 = vmatpush1.bf16.xpose.msra.mxu0 0
      %522 = vmatprep.subr.bf16.mxu0 0
      %523 = vmatpush1.bf16.xpose.msra.mxu0 0
      %524 = vmatprep.subr.bf16.mxu0 0
      %525 = vmatpush1.bf16.xpose.msra.mxu0 0
      %526 = vmatprep.subr.bf16.mxu0 0
      %527 = vmatpush1.bf16.xpose.msra.mxu0 0
      %528 = vmatprep.subr.bf16.mxu0 0
      %529 = vmatpush1.bf16.xpose.msra.mxu0 0
      %530 = vmatprep.subr.bf16.mxu0 0
      %531 = vmatpush1.bf16.xpose.msra.mxu0 0
      %532 = vmatprep.subr.bf16.mxu0 0
      %533 = vmatpush1.bf16.xpose.msra.mxu0 0
      %534 = vmatprep.subr.bf16.mxu0 0
      %535 = vmatpush1.bf16.xpose.msra.mxu0 0
      %536 = vmatprep.subr.bf16.mxu0 0
      %537 = vmatpush1.bf16.xpose.msra.mxu0 0
      %538 = vmatprep.subr.bf16.mxu0 0
      %539 = vmatpush1.bf16.xpose.msra.mxu0 0
      %540 = vmatprep.subr.bf16.mxu0 0
      %541 = vmatpush1.bf16.xpose.msra.mxu0 0
      %542 = vmatprep.subr.bf16.mxu0 0
      %543 = vmatpush1.bf16.xpose.msra.mxu0 0
      %544 = vmatprep.subr.bf16.mxu0 0
      %545 = vmatpush1.bf16.xpose.msra.mxu0 0
      %546 = vmatprep.mubr.bf16.mxu0 0
      %547 = vmatmul.mubr.bf16.gmra.mrb[0].mxu0 %v509
      %v548 = vpop.f32.mrb[0].mxu0
      %v549 = vadd.f32 0.0, %v548
      %v550 = vpop.f32.mrb[0].mxu0
      %v551 = vpop.f32.mrb[0].mxu0
      %v552 = vpop.f32.mrb[0].mxu0
      %553 = vdwg.mxu0
      %v554 = vsel %vm278, %v549, -inf
      %555 = vmax.xlane.f32.xlu0 %v554
      %v556 = vpop.xlane.xlu0 %555
      %v557 = vsub.f32 %v549, %v556
      %v558 = vmul.f32 %v557, 1.442695
      %v559 = vpow.pop %v558
      %v560 = vsel %vm278, %v559, 0.0
      %561 = vadd.xlane.f32.xlu0 %v560
      %v562 = vpop.xlane.xlu0 %561
      %v563 = vrcp.pop %v562
      %v564 = vmul.f32 %v559, %v563
      %v565 = vpack.c.bf16 %v564, %v564
      %566 = vrot.lane.b32.xlu0 %v274, 48
      %v567 = vpop.permute.xlu0 %566
      %v569 = vsel %vm278, %v565, 0
      %v572 = vsel %vm342, %v567, 0
      %574 = vmatprep.subr.bf16.mxu0 0
      %575 = vmatpush1.bf16.msra.mxu0 %v572
      %576 = vmatprep.subr.bf16.mxu0 0
      %577 = vmatpush1.bf16.msra.mxu0 0
      %578 = vmatprep.subr.bf16.mxu0 0
      %579 = vmatpush1.bf16.msra.mxu0 0
      %580 = vmatprep.subr.bf16.mxu0 0
      %581 = vmatpush1.bf16.msra.mxu0 0
      %582 = vmatprep.subr.bf16.mxu0 0
      %583 = vmatpush1.bf16.msra.mxu0 0
      %584 = vmatprep.subr.bf16.mxu0 0
      %585 = vmatpush1.bf16.msra.mxu0 0
      %586 = vmatprep.subr.bf16.mxu0 0
      %587 = vmatpush1.bf16.msra.mxu0 0
      %588 = vmatprep.subr.bf16.mxu0 0
      %589 = vmatpush1.bf16.msra.mxu0 0
      %590 = vmatprep.subr.bf16.mxu0 0
      %591 = vmatpush1.bf16.msra.mxu0 0
      %592 = vmatprep.subr.bf16.mxu0 0
      %593 = vmatpush1.bf16.msra.mxu0 0
      %594 = vmatprep.subr.bf16.mxu0 0
      %595 = vmatpush1.bf16.msra.mxu0 0
      %596 = vmatprep.subr.bf16.mxu0 0
      %597 = vmatpush1.bf16.msra.mxu0 0
      %598 = vmatprep.subr.bf16.mxu0 0
      %599 = vmatpush1.bf16.msra.mxu0 0
      %600 = vmatprep.subr.bf16.mxu0 0
      %601 = vmatpush1.bf16.msra.mxu0 0
      %602 = vmatprep.subr.bf16.mxu0 0
      %603 = vmatpush1.bf16.msra.mxu0 0
      %604 = vmatprep.subr.bf16.mxu0 0
      %605 = vmatpush1.bf16.msra.mxu0 0
      %606 = vmatprep.mubr.bf16.mxu0 0
      %607 = vmatmul.mubr.bf16.gmra.mrb[0].mxu0 %v569
      %v608 = vpop.f32.mrb[0].mxu0
      %v609 = vadd.f32 0.0, %v608
      %v610 = vpop.f32.mrb[0].mxu0
      %v611 = vpop.f32.mrb[0].mxu0
      %v612 = vpop.f32.mrb[0].mxu0
      %613 = vdwg.mxu0
      %615 = vrot.lane.b32.xlu0 %v609, 16
      %v616 = vpop.permute.xlu0 %615
      %vm618 = vcmask 195712
      %619 = vst.msk [vmem:[%s199] sm:$0xff] %vm618, %v616
      %v620 = vadd.f32 %v503, %v564
      %621 = vrot.lane.b32.xlu0 %v274, 104
      %v622 = vpop.permute.xlu0 %621
      %623 = vrot.lane.b32.xlu0 %v274, 72
      %v624 = vpop.permute.xlu0 %623
      %v626 = vsel %vm278, %v622, 0
      %v629 = vsel %vm278, %v624, 0
      %631 = vmatprep.subr.bf16.mxu0 0
      %632 = vmatpush1.bf16.xpose.msra.mxu0 %v629
      %633 = vmatprep.subr.bf16.mxu0 0
      %634 = vmatpush1.bf16.xpose.msra.mxu0 0
      %635 = vmatprep.subr.bf16.mxu0 0
      %636 = vmatpush1.bf16.xpose.msra.mxu0 0
      %637 = vmatprep.subr.bf16.mxu0 0
      %638 = vmatpush1.bf16.xpose.msra.mxu0 0
      %639 = vmatprep.subr.bf16.mxu0 0
      %640 = vmatpush1.bf16.xpose.msra.mxu0 0
      %641 = vmatprep.subr.bf16.mxu0 0
      %642 = vmatpush1.bf16.xpose.msra.mxu0 0
      %643 = vmatprep.subr.bf16.mxu0 0
      %644 = vmatpush1.bf16.xpose.msra.mxu0 0
      %645 = vmatprep.subr.bf16.mxu0 0
      %646 = vmatpush1.bf16.xpose.msra.mxu0 0
      %647 = vmatprep.subr.bf16.mxu0 0
      %648 = vmatpush1.bf16.xpose.msra.mxu0 0
      %649 = vmatprep.subr.bf16.mxu0 0
      %650 = vmatpush1.bf16.xpose.msra.mxu0 0
      %651 = vmatprep.subr.bf16.mxu0 0
      %652 = vmatpush1.bf16.xpose.msra.mxu0 0
      %653 = vmatprep.subr.bf16.mxu0 0
      %654 = vmatpush1.bf16.xpose.msra.mxu0 0
      %655 = vmatprep.subr.bf16.mxu0 0
      %656 = vmatpush1.bf16.xpose.msra.mxu0 0
      %657 = vmatprep.subr.bf16.mxu0 0
      %658 = vmatpush1.bf16.xpose.msra.mxu0 0
      %659 = vmatprep.subr.bf16.mxu0 0
      %660 = vmatpush1.bf16.xpose.msra.mxu0 0
      %661 = vmatprep.subr.bf16.mxu0 0
      %662 = vmatpush1.bf16.xpose.msra.mxu0 0
      %663 = vmatprep.mubr.bf16.mxu0 0
      %664 = vmatmul.mubr.bf16.gmra.mrb[0].mxu0 %v626
      %v665 = vpop.f32.mrb[0].mxu0
      %v666 = vadd.f32 0.0, %v665
      %v667 = vpop.f32.mrb[0].mxu0
      %v668 = vpop.f32.mrb[0].mxu0
      %v669 = vpop.f32.mrb[0].mxu0
      %670 = vdwg.mxu0
      %v671 = vsel %vm278, %v666, -inf
      %672 = vmax.xlane.f32.xlu0 %v671
      %v673 = vpop.xlane.xlu0 %672
      %v674 = vsub.f32 %v666, %v673
      %v675 = vmul.f32 %v674, 1.442695
      %v676 = vpow.pop %v675
      %v677 = vsel %vm278, %v676, 0.0
      %678 = vadd.xlane.f32.xlu0 %v677
      %v679 = vpop.xlane.xlu0 %678
      %v680 = vrcp.pop %v679
      %v681 = vmul.f32 %v676, %v680
      %v682 = vpack.c.bf16 %v681, %v681
      %683 = vrot.lane.b32.xlu0 %v274, 40
      %v684 = vpop.permute.xlu0 %683
      %v686 = vsel %vm278, %v682, 0
      %v689 = vsel %vm342, %v684, 0
      %691 = vmatprep.subr.bf16.mxu0 0
      %692 = vmatpush1.bf16.msra.mxu0 %v689
      %693 = vmatprep.subr.bf16.mxu0 0
      %694 = vmatpush1.bf16.msra.mxu0 0
      %695 = vmatprep.subr.bf16.mxu0 0
      %696 = vmatpush1.bf16.msra.mxu0 0
      %697 = vmatprep.subr.bf16.mxu0 0
      %698 = vmatpush1.bf16.msra.mxu0 0
      %699 = vmatprep.subr.bf16.mxu0 0
      %700 = vmatpush1.bf16.msra.mxu0 0
      %701 = vmatprep.subr.bf16.mxu0 0
      %702 = vmatpush1.bf16.msra.mxu0 0
      %703 = vmatprep.subr.bf16.mxu0 0
      %704 = vmatpush1.bf16.msra.mxu0 0
      %705 = vmatprep.subr.bf16.mxu0 0
      %706 = vmatpush1.bf16.msra.mxu0 0
      %707 = vmatprep.subr.bf16.mxu0 0
      %708 = vmatpush1.bf16.msra.mxu0 0
      %709 = vmatprep.subr.bf16.mxu0 0
      %710 = vmatpush1.bf16.msra.mxu0 0
      %711 = vmatprep.subr.bf16.mxu0 0
      %712 = vmatpush1.bf16.msra.mxu0 0
      %713 = vmatprep.subr.bf16.mxu0 0
      %714 = vmatpush1.bf16.msra.mxu0 0
      %715 = vmatprep.subr.bf16.mxu0 0
      %716 = vmatpush1.bf16.msra.mxu0 0
      %717 = vmatprep.subr.bf16.mxu0 0
      %718 = vmatpush1.bf16.msra.mxu0 0
      %719 = vmatprep.subr.bf16.mxu0 0
      %720 = vmatpush1.bf16.msra.mxu0 0
      %721 = vmatprep.subr.bf16.mxu0 0
      %722 = vmatpush1.bf16.msra.mxu0 0
      %723 = vmatprep.mubr.bf16.mxu0 0
      %724 = vmatmul.mubr.bf16.gmra.mrb[0].mxu0 %v686
      %v725 = vpop.f32.mrb[0].mxu0
      %v726 = vadd.f32 0.0, %v725
      %v727 = vpop.f32.mrb[0].mxu0
      %v728 = vpop.f32.mrb[0].mxu0
      %v729 = vpop.f32.mrb[0].mxu0
      %730 = vdwg.mxu0
      %732 = vrot.lane.b32.xlu0 %v726, 24
      %v733 = vpop.permute.xlu0 %732
      %vm735 = vcmask 261312
      %736 = vst.msk [vmem:[%s199] sm:$0xff] %vm735, %v733
      %v737 = vadd.f32 %v620, %v681
      %v738 = vmul.f32 %v737, 0.25
      %739 = vst.msk [vmem:[%s203] sm:$0xff] %vm278, %v738
      %p740 = scmp.lt.s32.totalorder %s16, 1
      %s741 = scalar_select %p740, %s16, 1
      %s742 = smul.addr %s741, 8
      %s743 = scalar_lea.vmem %s3, %s742
      %p744 = scmp.lt.s32.totalorder %s16, 1
      %s745 = scalar_select %p744, %s16, 1
      %s746 = smul.addr %s745, 8
      %s747 = scalar_lea.vmem %s4, %s746
      // Predicated region
      $region33: #{_forward.16} parent=31 // pred_check
        %p748 = pneg %p102
      $region34: #{_forward.16} parent=31 // pred_check_branch
        %750 = sbr.rel (%p748) target = $region36
      $region35: #{_forward.16} parent=31 // pred_region
        _
      $region36: #{_forward.16} parent=31 // pred_fallthru
        _
      // Predicated region
      $region37: #{_forward.16} parent=31 // pred_check
        %p751 = pneg %p128
      $region38: #{_forward.16} parent=31 // pred_check_branch
        %753 = sbr.rel (%p751) target = $region40
      $region39: #{_forward.16} parent=31 // pred_region
        _
      $region40: #{_forward.16} parent=31 // pred_fallthru
        _
    $region32: #{_forward.16} parent=5 // pred_fallthru
      _
    %p754 = scmp.le.s32.totalorder 2, %s11
    // Predicated region
    $region41: #{_forward.16} parent=5 // pred_check
      %p755 = pneg %p754
    $region42: #{_forward.16} parent=5 // pred_check_branch
      %757 = sbr.rel (%p755) target = $region44
    $region43: #{_forward.16} parent=5 // pred_region
      %s758 = ssub.s32 %s11, 2
      // Predicated region
      $region45: #{_forward.16} parent=43 // pred_check
        %p759 = pneg %p108
      $region46: #{_forward.16} parent=43 // pred_check_branch
        %761 = sbr.rel (%p759) target = $region48
      $region47: #{_forward.16} parent=43 // pred_region
        %p762 = scmp.lt.s32.totalorder %s17, 1
        %s763 = scalar_select %p762, %s17, 1
        %s764 = smul.addr %s763, 8
        %s765 = scalar_lea.vmem %s3, %s764
      $region48: #{_forward.16} parent=43 // pred_fallthru
        _
      // Predicated region
      $region49: #{_forward.16} parent=43 // pred_check
        %p766 = pneg %p134
      $region50: #{_forward.16} parent=43 // pred_check_branch
        %768 = sbr.rel (%p766) target = $region52
      $region51: #{_forward.16} parent=43 // pred_region
        %p769 = scmp.lt.s32.totalorder %s17, 1
        %s770 = scalar_select %p769, %s17, 1
        %s771 = smul.addr %s770, 8
        %s772 = scalar_lea.vmem %s4, %s771
      $region52: #{_forward.16} parent=43 // pred_fallthru
        _
    $region44: #{_forward.16} parent=5 // pred_fallthru
      _
  $region6: #{_forward.16} parent=0 // loop_footer
    %s15 = sadd.s32 1, %s11
  $region7: #{_forward.16} parent=0 // loop_footer_branch
    %10 = sbr.rel target = $region3
  $region8: #{_forward.16} parent=0 // loop_exit
    _

// kernel: _forward.22
$region0: #{_forward.22}
  #allocation0 [shape = 'u32[]', space=smem, size = 0x4, offset = 0x4, fixed_abs, tag = 'smem constant byte address 0x4 - core index']
  #allocation1 [shape = 'u32[144,128]{1,0:T(1,128)}', space=vmem, size = 0x12000, scoped, tag = 'internal scratch']
  %s0 = inlined_call_operand.vmem [shape: f32[2,8,32], index: 0, kind: input, shape index: {}]
  %s1 = inlined_call_operand.vmem [shape: bf16[32,96], index: 1, kind: input, shape index: {}]
  %s2 = inlined_call_operand.vmem [shape: f32[1,96], index: 2, kind: input, shape index: {}]
  %s3 = inlined_call_operand.vmem [shape: f32[8,8], index: 3, kind: input, shape index: {}]
  %s4 = inlined_call_operand.vmem [shape: f32[2,8,32], index: 4, kind: output, shape index: {}]
  %s5 = sld [smem:[#allocation0]]
  $region49: #{_forward.22} parent=0
    _
  %s7 = ssub.s32 1, %s5
  %s8 = scalar_select 0, %s7, %s5
  loop: start=0, step=1, limit=4
  $region2: #{_forward.22} parent=0 // loop_pre_header
    _
  $region3: #{_forward.22} parent=0 // loop_header
    %s10 = sphi 0, %s14
    %p11 = scmp.ge.s32.totalorder %s10, 4
    %s20 = sphi 0, %s22
    %s23 = sphi 0, %s20
    %s24 = sphi 0, %s23
    %s40 = sphi 0, %s24
    %s44 = sphi 0, %s44
    %s46 = sphi 0, %s44
    %s47 = sphi 0, %s46
    %s61 = sphi 0, %s47
    %s65 = sphi 0, %s65
    %s67 = sphi 0, %s65
    %s68 = sphi 0, %s67
    %s82 = sphi 0, %s68
    %s86 = sphi 0, %s86
    %s88 = sphi 0, %s86
    %s89 = sphi 0, %s88
    %s103 = sphi 0, %s89
    %s109 = sphi 0, %s111
    %s112 = sphi 0, %s109
    %s113 = sphi 0, %s112
    %s129 = sphi 0, %s113
  $region4: #{_forward.22} parent=0 // loop_header_branch
    %13 = sbr.rel (%p11) target = $region8
  $region5: #{_forward.22} parent=0 // loop_body
    %s15 = ssub.s32 %s10, 1
    %s16 = ssub.s32 %s10, 2
    %s17 = sadd.s32 %s10, 1
    %s18 = ssub.s32 %s10, %s17
    %p19 = scmp.eq.s32.totalorder %s18, 0
    %s21 = sadd.s32 %s20, 1
    %s22 = scalar_select %p19, %s20, %s21
    %p25 = pneg %p19
    %p26 = scmp.eq.s32.totalorder %s10, 1
    %p27 = por %p25, %p26
    %p28 = scmp.ne.s32.totalorder %s20, %s23
    %p29 = scmp.eq.s32.totalorder %s10, 0
    %p30 = por %p28, %p29
    %p31 = scmp.ne.s32.totalorder %s20, %s23
    %p32 = scmp.eq.s32.totalorder %s15, 1
    %p33 = por %p31, %p32
    %p34 = scmp.ne.s32.totalorder %s23, %s24
    %p35 = scmp.eq.s32.totalorder %s15, 0
    %p36 = por %p34, %p35
    %p37 = scmp.ne.s32.totalorder %s23, %s24
    %p38 = scmp.eq.s32.totalorder %s16, 1
    %p39 = por %p37, %p38
    %p41 = scmp.ne.s32.totalorder %s24, %s40
    %p42 = scmp.eq.s32.totalorder %s16, 0
    %p43 = por %p41, %p42
    %s45 = sadd.s32 %s44, 1
    %p48 = scmp.eq.s32.totalorder %s10, 1
    %p49 = scmp.ne.s32.totalorder %s44, %s46
    %p50 = scmp.eq.s32.totalorder %s10, 0
    %p51 = por %p49, %p50
    %p52 = scmp.ne.s32.totalorder %s44, %s46
    %p53 = scmp.eq.s32.totalorder %s15, 1
    %p54 = por %p52, %p53
    %p55 = scmp.ne.s32.totalorder %s46, %s47
    %p56 = scmp.eq.s32.totalorder %s15, 0
    %p57 = por %p55, %p56
    %p58 = scmp.ne.s32.totalorder %s46, %s47
    %p59 = scmp.eq.s32.totalorder %s16, 1
    %p60 = por %p58, %p59
    %p62 = scmp.ne.s32.totalorder %s47, %s61
    %p63 = scmp.eq.s32.totalorder %s16, 0
    %p64 = por %p62, %p63
    %s66 = sadd.s32 %s65, 1
    %p69 = scmp.eq.s32.totalorder %s10, 1
    %p70 = scmp.ne.s32.totalorder %s65, %s67
    %p71 = scmp.eq.s32.totalorder %s10, 0
    %p72 = por %p70, %p71
    %p73 = scmp.ne.s32.totalorder %s65, %s67
    %p74 = scmp.eq.s32.totalorder %s15, 1
    %p75 = por %p73, %p74
    %p76 = scmp.ne.s32.totalorder %s67, %s68
    %p77 = scmp.eq.s32.totalorder %s15, 0
    %p78 = por %p76, %p77
    %p79 = scmp.ne.s32.totalorder %s67, %s68
    %p80 = scmp.eq.s32.totalorder %s16, 1
    %p81 = por %p79, %p80
    %p83 = scmp.ne.s32.totalorder %s68, %s82
    %p84 = scmp.eq.s32.totalorder %s16, 0
    %p85 = por %p83, %p84
    %s87 = sadd.s32 %s86, 1
    %p90 = scmp.eq.s32.totalorder %s10, 1
    %p91 = scmp.ne.s32.totalorder %s86, %s88
    %p92 = scmp.eq.s32.totalorder %s10, 0
    %p93 = por %p91, %p92
    %p94 = scmp.ne.s32.totalorder %s86, %s88
    %p95 = scmp.eq.s32.totalorder %s15, 1
    %p96 = por %p94, %p95
    %p97 = scmp.ne.s32.totalorder %s88, %s89
    %p98 = scmp.eq.s32.totalorder %s15, 0
    %p99 = por %p97, %p98
    %p100 = scmp.ne.s32.totalorder %s88, %s89
    %p101 = scmp.eq.s32.totalorder %s16, 1
    %p102 = por %p100, %p101
    %p104 = scmp.ne.s32.totalorder %s89, %s103
    %p105 = scmp.eq.s32.totalorder %s16, 0
    %p106 = por %p104, %p105
    %s107 = ssub.s32 %s10, %s17
    %p108 = scmp.eq.s32.totalorder %s107, 0
    %s110 = sadd.s32 %s109, 1
    %s111 = scalar_select %p108, %s109, %s110
    %p114 = pneg %p108
    %p115 = scmp.eq.s32.totalorder %s10, 1
    %p116 = por %p114, %p115
    %p117 = scmp.ne.s32.totalorder %s109, %s112
    %p118 = scmp.eq.s32.totalorder %s10, 0
    %p119 = por %p117, %p118
    %p120 = scmp.ne.s32.totalorder %s109, %s112
    %p121 = scmp.eq.s32.totalorder %s15, 1
    %p122 = por %p120, %p121
    %p123 = scmp.ne.s32.totalorder %s112, %s113
    %p124 = scmp.eq.s32.totalorder %s15, 0
    %p125 = por %p123, %p124
    %p126 = scmp.ne.s32.totalorder %s112, %s113
    %p127 = scmp.eq.s32.totalorder %s16, 1
    %p128 = por %p126, %p127
    %p130 = scmp.ne.s32.totalorder %s113, %s129
    %p131 = scmp.eq.s32.totalorder %s16, 0
    %p132 = por %p130, %p131
    %p133 = scmp.le.s32.totalorder 1, %s10
    %p134 = scmp.lt.s32.totalorder %s10, 3
    %p135 = pnand %p133, %p134
    %p136 = pneg %p135
    // Predicated region
    $region9: #{_forward.22} parent=5 // pred_check
      _
    $region10: #{_forward.22} parent=5 // pred_check_branch
      %138 = sbr.rel (%p135) target = $region12
    $region11: #{_forward.22} parent=5 // pred_region
      %s139 = ssub.s32 %s10, 1
      // Predicated region
      $region13: #{_forward.22} parent=11 // pred_check
        %p140 = pneg %p57
      $region14: #{_forward.22} parent=11 // pred_check_branch
        %142 = sbr.rel (%p140) target = $region16
      $region15: #{_forward.22} parent=11 // pred_region
        _
      $region16: #{_forward.22} parent=11 // pred_fallthru
        _
      // Predicated region
      $region17: #{_forward.22} parent=11 // pred_check
        %p143 = pneg %p78
      $region18: #{_forward.22} parent=11 // pred_check_branch
        %145 = sbr.rel (%p143) target = $region20
      $region19: #{_forward.22} parent=11 // pred_region
        _
      $region20: #{_forward.22} parent=11 // pred_fallthru
        _
      // Predicated region
      $region21: #{_forward.22} parent=11 // pred_check
        %p146 = pneg %p99
      $region22: #{_forward.22} parent=11 // pred_check_branch
        %148 = sbr.rel (%p146) target = $region24
      $region23: #{_forward.22} parent=11 // pred_region
        _
      $region24: #{_forward.22} parent=11 // pred_fallthru
        _
    $region12: #{_forward.22} parent=5 // pred_fallthru
      _
    %p149 = scmp.lt.s32.totalorder %s10, 2
    // Predicated region
    $region25: #{_forward.22} parent=5 // pred_check
      %p150 = pneg %p149
    $region26: #{_forward.22} parent=5 // pred_check_branch
      %152 = sbr.rel (%p150) target = $region28
    $region27: #{_forward.22} parent=5 // pred_region
      // Predicated region
      $region29: #{_forward.22} parent=27 // pred_check
        %p153 = pneg %p30
      $region30: #{_forward.22} parent=27 // pred_check_branch
        %155 = sbr.rel (%p153) target = $region32
      $region31: #{_forward.22} parent=27 // pred_region
        %p156 = scmp.lt.s32.totalorder %s10, 1
        %s157 = scalar_select %p156, %s10, 1
        %s158 = smul.addr %s157, 8
        %s159 = scalar_lea.vmem %s0, %s158
      $region32: #{_forward.22} parent=27 // pred_fallthru
        _
    $region28: #{_forward.22} parent=5 // pred_fallthru
      _
    %p160 = scmp.le.s32.totalorder 1, %s10
    %p161 = scmp.lt.s32.totalorder %s10, 3
    %p162 = pnand %p160, %p161
    %p163 = pneg %p162
    // Predicated region
    $region33: #{_forward.22} parent=5 // pred_check
      _
    $region34: #{_forward.22} parent=5 // pred_check_branch
      %165 = sbr.rel (%p162) target = $region36
    $region35: #{_forward.22} parent=5 // pred_region
      %s166 = ssub.s32 %s10, 1
      %p167 = scmp.lt.s32.totalorder %s15, 1
      %s168 = scalar_select %p167, %s15, 1
      %s169 = smul.addr %s168, 8
      %s170 = scalar_lea.vmem %s0, %s169
      %p171 = pneg %p36
      %p172 = pneg %p33
      %p173 = pneg %p57
      %p174 = pneg %p54
      %p175 = pneg %p78
      %p176 = pneg %p75
      %p177 = pneg %p99
      %p178 = pneg %p96
      %p179 = pneg %p125
      %p180 = pneg %p122
      %p181 = scmp.lt.s32.totalorder %s15, 1
      %s182 = scalar_select %p181, %s15, 1
      %s183 = smul.addr %s182, 8
      %s184 = scalar_lea.vmem %s4, %s183
      %p185 = scmp.lt.s32.totalorder %s15, 1
      %s186 = scalar_select %p185, %s15, 1
      %s187 = smul.addr %s186, 8
      %s188 = scalar_lea.vmem %s0, %s187
      %p189 = scmp.lt.s32.totalorder %s15, 1
      %s190 = scalar_select %p189, %s15, 1
      %s191 = smul.addr %s190, 8
      %s192 = scalar_lea.vmem %s4, %s191
      %v194 = vld [vmem:[%s188] sm:$0xff]
      %v195 = vpack.c.bf16 %v194, %v194
      %v196 = vld [vmem:[%s1] sm:$0xf]
      %v197 = vld [vmem:[%s1 + $0x4] sm:$0xf]
      %v198 = vld [vmem:[%s1 + $0x8] sm:$0xf]
      %v199 = vld [vmem:[%s1 + $0xc] sm:$0xf]
      %v200 = vld [vmem:[%s2] sm:$0x1]
      %v202 = vlaneseq
      %v203 = vshrl.u32 %v202, 7
      %v204 = vsub.s32 0, %v203
      %v205 = vrot.slane %v200, %v204
      %v211 = vunpack.c.l.b16 %v196
      %v212 = vunpack.c.l.b16 %v197
      %v213 = vunpack.c.l.b16 %v198
      %v214 = vunpack.c.l.b16 %v199
      %v215 = vpack.c.b16 %v212, %v211
      %v216 = vpack.c.b16 %v214, %v213
      %vm219 = vcmask 261120
      %v221 = vsel %vm219, %v195, 0
      %223 = vmatprep.subr.bf16.mxu0 0
      %224 = vmatpush1.bf16.msra.mxu0 %v215
      %225 = vmatprep.subr.bf16.mxu0 0
      %226 = vmatpush1.bf16.msra.mxu0 %v216
      %227 = vmatprep.subr.bf16.mxu0 0
      %228 = vmatpush1.bf16.msra.mxu0 0
      %229 = vmatprep.subr.bf16.mxu0 0
      %230 = vmatpush1.bf16.msra.mxu0 0
      %231 = vmatprep.subr.bf16.mxu0 0
      %232 = vmatpush1.bf16.msra.mxu0 0
      %233 = vmatprep.subr.bf16.mxu0 0
      %234 = vmatpush1.bf16.msra.mxu0 0
      %235 = vmatprep.subr.bf16.mxu0 0
      %236 = vmatpush1.bf16.msra.mxu0 0
      %237 = vmatprep.subr.bf16.mxu0 0
      %238 = vmatpush1.bf16.msra.mxu0 0
      %239 = vmatprep.subr.bf16.mxu0 0
      %240 = vmatpush1.bf16.msra.mxu0 0
      %241 = vmatprep.subr.bf16.mxu0 0
      %242 = vmatpush1.bf16.msra.mxu0 0
      %243 = vmatprep.subr.bf16.mxu0 0
      %244 = vmatpush1.bf16.msra.mxu0 0
      %245 = vmatprep.subr.bf16.mxu0 0
      %246 = vmatpush1.bf16.msra.mxu0 0
      %247 = vmatprep.subr.bf16.mxu0 0
      %248 = vmatpush1.bf16.msra.mxu0 0
      %249 = vmatprep.subr.bf16.mxu0 0
      %250 = vmatpush1.bf16.msra.mxu0 0
      %251 = vmatprep.subr.bf16.mxu0 0
      %252 = vmatpush1.bf16.msra.mxu0 0
      %253 = vmatprep.subr.bf16.mxu0 0
      %254 = vmatpush1.bf16.msra.mxu0 0
      %255 = vmatprep.mubr.bf16.mxu0 0
      %256 = vmatmul.mubr.bf16.gmra.mrb[0].mxu0 %v221
      %v257 = vpop.f32.mrb[0].mxu0
      %v258 = vadd.f32 %v205, %v257
      %v259 = vpop.f32.mrb[0].mxu0
      %v260 = vpop.f32.mrb[0].mxu0
      %v261 = vpop.f32.mrb[0].mxu0
      %262 = vdwg.mxu0
      %v263 = vpack.c.bf16 %v258, %v258
      %v264 = vld [vmem:[%s3] sm:$0xff]
      %266 = vrot.lane.b32.xlu0 %v263, 96
      %v267 = vpop.permute.xlu0 %266
      %vm268 = vcmask 64512
      %v270 = vsel %vm268, %v263, 0
      %v273 = vsel %vm268, %v267, 0
      %275 = vmatprep.subr.bf16.mxu0 0
      %276 = vmatpush1.bf16.xpose.msra.mxu0 %v273
      %277 = vmatprep.subr.bf16.mxu0 0
      %278 = vmatpush1.bf16.xpose.msra.mxu0 0
      %279 = vmatprep.subr.bf16.mxu0 0
      %280 = vmatpush1.bf16.xpose.msra.mxu0 0
      %281 = vmatprep.subr.bf16.mxu0 0
      %282 = vmatpush1.bf16.xpose.msra.mxu0 0
      %283 = vmatprep.subr.bf16.mxu0 0
      %284 = vmatpush1.bf16.xpose.msra.mxu0 0
      %285 = vmatprep.subr.bf16.mxu0 0
      %286 = vmatpush1.bf16.xpose.msra.mxu0 0
      %287 = vmatprep.subr.bf16.mxu0 0
      %288 = vmatpush1.bf16.xpose.msra.mxu0 0
      %289 = vmatprep.subr.bf16.mxu0 0
      %290 = vmatpush1.bf16.xpose.msra.mxu0 0
      %291 = vmatprep.subr.bf16.mxu0 0
      %292 = vmatpush1.bf16.xpose.msra.mxu0 0
      %293 = vmatprep.subr.bf16.mxu0 0
      %294 = vmatpush1.bf16.xpose.msra.mxu0 0
      %295 = vmatprep.subr.bf16.mxu0 0
      %296 = vmatpush1.bf16.xpose.msra.mxu0 0
      %297 = vmatprep.subr.bf16.mxu0 0
      %298 = vmatpush1.bf16.xpose.msra.mxu0 0
      %299 = vmatprep.subr.bf16.mxu0 0
      %300 = vmatpush1.bf16.xpose.msra.mxu0 0
      %301 = vmatprep.subr.bf16.mxu0 0
      %302 = vmatpush1.bf16.xpose.msra.mxu0 0
      %303 = vmatprep.subr.bf16.mxu0 0
      %304 = vmatpush1.bf16.xpose.msra.mxu0 0
      %305 = vmatprep.subr.bf16.mxu0 0
      %306 = vmatpush1.bf16.xpose.msra.mxu0 0
      %307 = vmatprep.mubr.bf16.mxu0 0
      %308 = vmatmul.mubr.bf16.gmra.mrb[0].mxu0 %v270
      %v309 = vpop.f32.mrb[0].mxu0
      %v310 = vadd.f32 %v264, %v309
      %v311 = vpop.f32.mrb[0].mxu0
      %v312 = vpop.f32.mrb[0].mxu0
      %v313 = vpop.f32.mrb[0].mxu0
      %314 = vdwg.mxu0
      %v315 = vsel %vm268, %v310, -inf
      %316 = vmax.xlane.f32.xlu0 %v315
      %v317 = vpop.xlane.xlu0 %316
      %v318 = vsub.f32 %v310, %v317
      %v319 = vmul.f32 %v318, 1.442695
      %v320 = vpow.pop %v319
      %v321 = vsel %vm268, %v320, 0.0
      %322 = vadd.xlane.f32.xlu0 %v321
      %v323 = vpop.xlane.xlu0 %322
      %v324 = vrcp.pop %v323
      %v325 = vmul.f32 %v320, %v324
      %v326 = vpack.c.bf16 %v325, %v325
      %327 = vrot.lane.b32.xlu0 %v263, 64
      %v328 = vpop.permute.xlu0 %327
      %v330 = vsel %vm268, %v326, 0
      %vm332 = vcmask 1043456
      %v334 = vsel %vm332, %v328, 0
      %336 = vmatprep.subr.bf16.mxu0 0
      %337 = vmatpush1.bf16.msra.mxu0 %v334
      %338 = vmatprep.subr.bf16.mxu0 0
      %339 = vmatpush1.bf16.msra.mxu0 0
      %340 = vmatprep.subr.bf16.mxu0 0
      %341 = vmatpush1.bf16.msra.mxu0 0
      %342 = vmatprep.subr.bf16.mxu0 0
      %343 = vmatpush1.bf16.msra.mxu0 0
      %344 = vmatprep.subr.bf16.mxu0 0
      %345 = vmatpush1.bf16.msra.mxu0 0
      %346 = vmatprep.subr.bf16.mxu0 0
      %347 = vmatpush1.bf16.msra.mxu0 0
      %348 = vmatprep.subr.bf16.mxu0 0
      %349 = vmatpush1.bf16.msra.mxu0 0
      %350 = vmatprep.subr.bf16.mxu0 0
      %351 = vmatpush1.bf16.msra.mxu0 0
      %352 = vmatprep.subr.bf16.mxu0 0
      %353 = vmatpush1.bf16.msra.mxu0 0
      %354 = vmatprep.subr.bf16.mxu0 0
      %355 = vmatpush1.bf16.msra.mxu0 0
      %356 = vmatprep.subr.bf16.mxu0 0
      %357 = vmatpush1.bf16.msra.mxu0 0
      %358 = vmatprep.subr.bf16.mxu0 0
      %359 = vmatpush1.bf16.msra.mxu0 0
      %360 = vmatprep.subr.bf16.mxu0 0
      %361 = vmatpush1.bf16.msra.mxu0 0
      %362 = vmatprep.subr.bf16.mxu0 0
      %363 = vmatpush1.bf16.msra.mxu0 0
      %364 = vmatprep.subr.bf16.mxu0 0
      %365 = vmatpush1.bf16.msra.mxu0 0
      %366 = vmatprep.subr.bf16.mxu0 0
      %367 = vmatpush1.bf16.msra.mxu0 0
      %368 = vmatprep.mubr.bf16.mxu0 0
      %369 = vmatmul.mubr.bf16.gmra.mrb[0].mxu0 %v330
      %v370 = vpop.f32.mrb[0].mxu0
      %v371 = vadd.f32 0.0, %v370
      %v372 = vpop.f32.mrb[0].mxu0
      %v373 = vpop.f32.mrb[0].mxu0
      %v374 = vpop.f32.mrb[0].mxu0
      %375 = vdwg.mxu0
      %376 = vst.msk [vmem:[%s192] sm:$0xff] %vm268, %v371
      %377 = vrot.lane.b32.xlu0 %v263, 120
      %v378 = vpop.permute.xlu0 %377
      %379 = vrot.lane.b32.xlu0 %v263, 88
      %v380 = vpop.permute.xlu0 %379
      %v382 = vsel %vm268, %v378, 0
      %v385 = vsel %vm268, %v380, 0
      %387 = vmatprep.subr.bf16.mxu0 0
      %388 = vmatpush1.bf16.xpose.msra.mxu0 %v385
      %389 = vmatprep.subr.bf16.mxu0 0
      %390 = vmatpush1.bf16.xpose.msra.mxu0 0
      %391 = vmatprep.subr.bf16.mxu0 0
      %392 = vmatpush1.bf16.xpose.msra.mxu0 0
      %393 = vmatprep.subr.bf16.mxu0 0
      %394 = vmatpush1.bf16.xpose.msra.mxu0 0
      %395 = vmatprep.subr.bf16.mxu0 0
      %396 = vmatpush1.bf16.xpose.msra.mxu0 0
      %397 = vmatprep.subr.bf16.mxu0 0
      %398 = vmatpush1.bf16.xpose.msra.mxu0 0
      %399 = vmatprep.subr.bf16.mxu0 0
      %400 = vmatpush1.bf16.xpose.msra.mxu0 0
      %401 = vmatprep.subr.bf16.mxu0 0
      %402 = vmatpush1.bf16.xpose.msra.mxu0 0
      %403 = vmatprep.subr.bf16.mxu0 0
      %404 = vmatpush1.bf16.xpose.msra.mxu0 0
      %405 = vmatprep.subr.bf16.mxu0 0
      %406 = vmatpush1.bf16.xpose.msra.mxu0 0
      %407 = vmatprep.subr.bf16.mxu0 0
      %408 = vmatpush1.bf16.xpose.msra.mxu0 0
      %409 = vmatprep.subr.bf16.mxu0 0
      %410 = vmatpush1.bf16.xpose.msra.mxu0 0
      %411 = vmatprep.subr.bf16.mxu0 0
      %412 = vmatpush1.bf16.xpose.msra.mxu0 0
      %413 = vmatprep.subr.bf16.mxu0 0
      %414 = vmatpush1.bf16.xpose.msra.mxu0 0
      %415 = vmatprep.subr.bf16.mxu0 0
      %416 = vmatpush1.bf16.xpose.msra.mxu0 0
      %417 = vmatprep.subr.bf16.mxu0 0
      %418 = vmatpush1.bf16.xpose.msra.mxu0 0
      %419 = vmatprep.mubr.bf16.mxu0 0
      %420 = vmatmul.mubr.bf16.gmra.mrb[0].mxu0 %v382
      %v421 = vpop.f32.mrb[0].mxu0
      %v422 = vadd.f32 %v264, %v421
      %v423 = vpop.f32.mrb[0].mxu0
      %v424 = vpop.f32.mrb[0].mxu0
      %v425 = vpop.f32.mrb[0].mxu0
      %426 = vdwg.mxu0
      %v427 = vsel %vm268, %v422, -inf
      %428 = vmax.xlane.f32.xlu0 %v427
      %v429 = vpop.xlane.xlu0 %428
      %v430 = vsub.f32 %v422, %v429
      %v431 = vmul.f32 %v430, 1.442695
      %v432 = vpow.pop %v431
      %v433 = vsel %vm268, %v432, 0.0
      %434 = vadd.xlane.f32.xlu0 %v433
      %v435 = vpop.xlane.xlu0 %434
      %v436 = vrcp.pop %v435
      %v437 = vmul.f32 %v432, %v436
      %v438 = vpack.c.bf16 %v437, %v437
      %439 = vrot.lane.b32.xlu0 %v263, 56
      %v440 = vpop.permute.xlu0 %439
      %v442 = vsel %vm268, %v438, 0
      %v445 = vsel %vm332, %v440, 0
      %447 = vmatprep.subr.bf16.mxu0 0
      %448 = vmatpush1.bf16.msra.mxu0 %v445
      %449 = vmatprep.subr.bf16.mxu0 0
      %450 = vmatpush1.bf16.msra.mxu0 0
      %451 = vmatprep.subr.bf16.mxu0 0
      %452 = vmatpush1.bf16.msra.mxu0 0
      %453 = vmatprep.subr.bf16.mxu0 0
      %454 = vmatpush1.bf16.msra.mxu0 0
      %455 = vmatprep.subr.bf16.mxu0 0
      %456 = vmatpush1.bf16.msra.mxu0 0
      %457 = vmatprep.subr.bf16.mxu0 0
      %458 = vmatpush1.bf16.msra.mxu0 0
      %459 = vmatprep.subr.bf16.mxu0 0
      %460 = vmatpush1.bf16.msra.mxu0 0
      %461 = vmatprep.subr.bf16.mxu0 0
      %462 = vmatpush1.bf16.msra.mxu0 0
      %463 = vmatprep.subr.bf16.mxu0 0
      %464 = vmatpush1.bf16.msra.mxu0 0
      %465 = vmatprep.subr.bf16.mxu0 0
      %466 = vmatpush1.bf16.msra.mxu0 0
      %467 = vmatprep.subr.bf16.mxu0 0
      %468 = vmatpush1.bf16.msra.mxu0 0
      %469 = vmatprep.subr.bf16.mxu0 0
      %470 = vmatpush1.bf16.msra.mxu0 0
      %471 = vmatprep.subr.bf16.mxu0 0
      %472 = vmatpush1.bf16.msra.mxu0 0
      %473 = vmatprep.subr.bf16.mxu0 0
      %474 = vmatpush1.bf16.msra.mxu0 0
      %475 = vmatprep.subr.bf16.mxu0 0
      %476 = vmatpush1.bf16.msra.mxu0 0
      %477 = vmatprep.subr.bf16.mxu0 0
      %478 = vmatpush1.bf16.msra.mxu0 0
      %479 = vmatprep.mubr.bf16.mxu0 0
      %480 = vmatmul.mubr.bf16.gmra.mrb[0].mxu0 %v442
      %v481 = vpop.f32.mrb[0].mxu0
      %v482 = vadd.f32 0.0, %v481
      %v483 = vpop.f32.mrb[0].mxu0
      %v484 = vpop.f32.mrb[0].mxu0
      %v485 = vpop.f32.mrb[0].mxu0
      %486 = vdwg.mxu0
      %488 = vrot.lane.b32.xlu0 %v482, 8
      %v489 = vpop.permute.xlu0 %488
      %vm491 = vcmask 130112
      %492 = vst.msk [vmem:[%s192] sm:$0xff] %vm491, %v489
      %493 = vrot.lane.b32.xlu0 %v263, 112
      %v494 = vpop.permute.xlu0 %493
      %495 = vrot.lane.b32.xlu0 %v263, 80
      %v496 = vpop.permute.xlu0 %495
      %v498 = vsel %vm268, %v494, 0
      %v501 = vsel %vm268, %v496, 0
      %503 = vmatprep.subr.bf16.mxu0 0
      %504 = vmatpush1.bf16.xpose.msra.mxu0 %v501
      %505 = vmatprep.subr.bf16.mxu0 0
      %506 = vmatpush1.bf16.xpose.msra.mxu0 0
      %507 = vmatprep.subr.bf16.mxu0 0
      %508 = vmatpush1.bf16.xpose.msra.mxu0 0
      %509 = vmatprep.subr.bf16.mxu0 0
      %510 = vmatpush1.bf16.xpose.msra.mxu0 0
      %511 = vmatprep.subr.bf16.mxu0 0
      %512 = vmatpush1.bf16.xpose.msra.mxu0 0
      %513 = vmatprep.subr.bf16.mxu0 0
      %514 = vmatpush1.bf16.xpose.msra.mxu0 0
      %515 = vmatprep.subr.bf16.mxu0 0
      %516 = vmatpush1.bf16.xpose.msra.mxu0 0
      %517 = vmatprep.subr.bf16.mxu0 0
      %518 = vmatpush1.bf16.xpose.msra.mxu0 0
      %519 = vmatprep.subr.bf16.mxu0 0
      %520 = vmatpush1.bf16.xpose.msra.mxu0 0
      %521 = vmatprep.subr.bf16.mxu0 0
      %522 = vmatpush1.bf16.xpose.msra.mxu0 0
      %523 = vmatprep.subr.bf16.mxu0 0
      %524 = vmatpush1.bf16.xpose.msra.mxu0 0
      %525 = vmatprep.subr.bf16.mxu0 0
      %526 = vmatpush1.bf16.xpose.msra.mxu0 0
      %527 = vmatprep.subr.bf16.mxu0 0
      %528 = vmatpush1.bf16.xpose.msra.mxu0 0
      %529 = vmatprep.subr.bf16.mxu0 0
      %530 = vmatpush1.bf16.xpose.msra.mxu0 0
      %531 = vmatprep.subr.bf16.mxu0 0
      %532 = vmatpush1.bf16.xpose.msra.mxu0 0
      %533 = vmatprep.subr.bf16.mxu0 0
      %534 = vmatpush1.bf16.xpose.msra.mxu0 0
      %535 = vmatprep.mubr.bf16.mxu0 0
      %536 = vmatmul.mubr.bf16.gmra.mrb[0].mxu0 %v498
      %v537 = vpop.f32.mrb[0].mxu0
      %v538 = vadd.f32 %v264, %v537
      %v539 = vpop.f32.mrb[0].mxu0
      %v540 = vpop.f32.mrb[0].mxu0
      %v541 = vpop.f32.mrb[0].mxu0
      %542 = vdwg.mxu0
      %v543 = vsel %vm268, %v538, -inf
      %544 = vmax.xlane.f32.xlu0 %v543
      %v545 = vpop.xlane.xlu0 %544
      %v546 = vsub.f32 %v538, %v545
      %v547 = vmul.f32 %v546, 1.442695
      %v548 = vpow.pop %v547
      %v549 = vsel %vm268, %v548, 0.0
      %550 = vadd.xlane.f32.xlu0 %v549
      %v551 = vpop.xlane.xlu0 %550
      %v552 = vrcp.pop %v551
      %v553 = vmul.f32 %v548, %v552
      %v554 = vpack.c.bf16 %v553, %v553
      %555 = vrot.lane.b32.xlu0 %v263, 48
      %v556 = vpop.permute.xlu0 %555
      %v558 = vsel %vm268, %v554, 0
      %v561 = vsel %vm332, %v556, 0
      %563 = vmatprep.subr.bf16.mxu0 0
      %564 = vmatpush1.bf16.msra.mxu0 %v561
      %565 = vmatprep.subr.bf16.mxu0 0
      %566 = vmatpush1.bf16.msra.mxu0 0
      %567 = vmatprep.subr.bf16.mxu0 0
      %568 = vmatpush1.bf16.msra.mxu0 0
      %569 = vmatprep.subr.bf16.mxu0 0
      %570 = vmatpush1.bf16.msra.mxu0 0
      %571 = vmatprep.subr.bf16.mxu0 0
      %572 = vmatpush1.bf16.msra.mxu0 0
      %573 = vmatprep.subr.bf16.mxu0 0
      %574 = vmatpush1.bf16.msra.mxu0 0
      %575 = vmatprep.subr.bf16.mxu0 0
      %576 = vmatpush1.bf16.msra.mxu0 0
      %577 = vmatprep.subr.bf16.mxu0 0
      %578 = vmatpush1.bf16.msra.mxu0 0
      %579 = vmatprep.subr.bf16.mxu0 0
      %580 = vmatpush1.bf16.msra.mxu0 0
      %581 = vmatprep.subr.bf16.mxu0 0
      %582 = vmatpush1.bf16.msra.mxu0 0
      %583 = vmatprep.subr.bf16.mxu0 0
      %584 = vmatpush1.bf16.msra.mxu0 0
      %585 = vmatprep.subr.bf16.mxu0 0
      %586 = vmatpush1.bf16.msra.mxu0 0
      %587 = vmatprep.subr.bf16.mxu0 0
      %588 = vmatpush1.bf16.msra.mxu0 0
      %589 = vmatprep.subr.bf16.mxu0 0
      %590 = vmatpush1.bf16.msra.mxu0 0
      %591 = vmatprep.subr.bf16.mxu0 0
      %592 = vmatpush1.bf16.msra.mxu0 0
      %593 = vmatprep.subr.bf16.mxu0 0
      %594 = vmatpush1.bf16.msra.mxu0 0
      %595 = vmatprep.mubr.bf16.mxu0 0
      %596 = vmatmul.mubr.bf16.gmra.mrb[0].mxu0 %v558
      %v597 = vpop.f32.mrb[0].mxu0
      %v598 = vadd.f32 0.0, %v597
      %v599 = vpop.f32.mrb[0].mxu0
      %v600 = vpop.f32.mrb[0].mxu0
      %v601 = vpop.f32.mrb[0].mxu0
      %602 = vdwg.mxu0
      %604 = vrot.lane.b32.xlu0 %v598, 16
      %v605 = vpop.permute.xlu0 %604
      %vm607 = vcmask 195712
      %608 = vst.msk [vmem:[%s192] sm:$0xff] %vm607, %v605
      %609 = vrot.lane.b32.xlu0 %v263, 104
      %v610 = vpop.permute.xlu0 %609
      %611 = vrot.lane.b32.xlu0 %v263, 72
      %v612 = vpop.permute.xlu0 %611
      %v614 = vsel %vm268, %v610, 0
      %v617 = vsel %vm268, %v612, 0
      %619 = vmatprep.subr.bf16.mxu0 0
      %620 = vmatpush1.bf16.xpose.msra.mxu0 %v617
      %621 = vmatprep.subr.bf16.mxu0 0
      %622 = vmatpush1.bf16.xpose.msra.mxu0 0
      %623 = vmatprep.subr.bf16.mxu0 0
      %624 = vmatpush1.bf16.xpose.msra.mxu0 0
      %625 = vmatprep.subr.bf16.mxu0 0
      %626 = vmatpush1.bf16.xpose.msra.mxu0 0
      %627 = vmatprep.subr.bf16.mxu0 0
      %628 = vmatpush1.bf16.xpose.msra.mxu0 0
      %629 = vmatprep.subr.bf16.mxu0 0
      %630 = vmatpush1.bf16.xpose.msra.mxu0 0
      %631 = vmatprep.subr.bf16.mxu0 0
      %632 = vmatpush1.bf16.xpose.msra.mxu0 0
      %633 = vmatprep.subr.bf16.mxu0 0
      %634 = vmatpush1.bf16.xpose.msra.mxu0 0
      %635 = vmatprep.subr.bf16.mxu0 0
      %636 = vmatpush1.bf16.xpose.msra.mxu0 0
      %637 = vmatprep.subr.bf16.mxu0 0
      %638 = vmatpush1.bf16.xpose.msra.mxu0 0
      %639 = vmatprep.subr.bf16.mxu0 0
      %640 = vmatpush1.bf16.xpose.msra.mxu0 0
      %641 = vmatprep.subr.bf16.mxu0 0
      %642 = vmatpush1.bf16.xpose.msra.mxu0 0
      %643 = vmatprep.subr.bf16.mxu0 0
      %644 = vmatpush1.bf16.xpose.msra.mxu0 0
      %645 = vmatprep.subr.bf16.mxu0 0
      %646 = vmatpush1.bf16.xpose.msra.mxu0 0
      %647 = vmatprep.subr.bf16.mxu0 0
      %648 = vmatpush1.bf16.xpose.msra.mxu0 0
      %649 = vmatprep.subr.bf16.mxu0 0
      %650 = vmatpush1.bf16.xpose.msra.mxu0 0
      %651 = vmatprep.mubr.bf16.mxu0 0
      %652 = vmatmul.mubr.bf16.gmra.mrb[0].mxu0 %v614
      %v653 = vpop.f32.mrb[0].mxu0
      %v654 = vadd.f32 %v264, %v653
      %v655 = vpop.f32.mrb[0].mxu0
      %v656 = vpop.f32.mrb[0].mxu0
      %v657 = vpop.f32.mrb[0].mxu0
      %658 = vdwg.mxu0
      %v659 = vsel %vm268, %v654, -inf
      %660 = vmax.xlane.f32.xlu0 %v659
      %v661 = vpop.xlane.xlu0 %660
      %v662 = vsub.f32 %v654, %v661
      %v663 = vmul.f32 %v662, 1.442695
      %v664 = vpow.pop %v663
      %v665 = vsel %vm268, %v664, 0.0
      %666 = vadd.xlane.f32.xlu0 %v665
      %v667 = vpop.xlane.xlu0 %666
      %v668 = vrcp.pop %v667
      %v669 = vmul.f32 %v664, %v668
      %v670 = vpack.c.bf16 %v669, %v669
      %671 = vrot.lane.b32.xlu0 %v263, 40
      %v672 = vpop.permute.xlu0 %671
      %v674 = vsel %vm268, %v670, 0
      %v677 = vsel %vm332, %v672, 0
      %679 = vmatprep.subr.bf16.mxu0 0
      %680 = vmatpush1.bf16.msra.mxu0 %v677
      %681 = vmatprep.subr.bf16.mxu0 0
      %682 = vmatpush1.bf16.msra.mxu0 0
      %683 = vmatprep.subr.bf16.mxu0 0
      %684 = vmatpush1.bf16.msra.mxu0 0
      %685 = vmatprep.subr.bf16.mxu0 0
      %686 = vmatpush1.bf16.msra.mxu0 0
      %687 = vmatprep.subr.bf16.mxu0 0
      %688 = vmatpush1.bf16.msra.mxu0 0
      %689 = vmatprep.subr.bf16.mxu0 0
      %690 = vmatpush1.bf16.msra.mxu0 0
      %691 = vmatprep.subr.bf16.mxu0 0
      %692 = vmatpush1.bf16.msra.mxu0 0
      %693 = vmatprep.subr.bf16.mxu0 0
      %694 = vmatpush1.bf16.msra.mxu0 0
      %695 = vmatprep.subr.bf16.mxu0 0
      %696 = vmatpush1.bf16.msra.mxu0 0
      %697 = vmatprep.subr.bf16.mxu0 0
      %698 = vmatpush1.bf16.msra.mxu0 0
      %699 = vmatprep.subr.bf16.mxu0 0
      %700 = vmatpush1.bf16.msra.mxu0 0
      %701 = vmatprep.subr.bf16.mxu0 0
      %702 = vmatpush1.bf16.msra.mxu0 0
      %703 = vmatprep.subr.bf16.mxu0 0
      %704 = vmatpush1.bf16.msra.mxu0 0
      %705 = vmatprep.subr.bf16.mxu0 0
      %706 = vmatpush1.bf16.msra.mxu0 0
      %707 = vmatprep.subr.bf16.mxu0 0
      %708 = vmatpush1.bf16.msra.mxu0 0
      %709 = vmatprep.subr.bf16.mxu0 0
      %710 = vmatpush1.bf16.msra.mxu0 0
      %711 = vmatprep.mubr.bf16.mxu0 0
      %712 = vmatmul.mubr.bf16.gmra.mrb[0].mxu0 %v674
      %v713 = vpop.f32.mrb[0].mxu0
      %v714 = vadd.f32 0.0, %v713
      %v715 = vpop.f32.mrb[0].mxu0
      %v716 = vpop.f32.mrb[0].mxu0
      %v717 = vpop.f32.mrb[0].mxu0
      %718 = vdwg.mxu0
      %720 = vrot.lane.b32.xlu0 %v714, 24
      %v721 = vpop.permute.xlu0 %720
      %vm723 = vcmask 261312
      %724 = vst.msk [vmem:[%s192] sm:$0xff] %vm723, %v721
      %p725 = scmp.lt.s32.totalorder %s15, 1
      %s726 = scalar_select %p725, %s15, 1
      %s727 = smul.addr %s726, 8
      %s728 = scalar_lea.vmem %s4, %s727
      // Predicated region
      $region37: #{_forward.22} parent=35 // pred_check
        %p729 = pneg %p122
      $region38: #{_forward.22} parent=35 // pred_check_branch
        %731 = sbr.rel (%p729) target = $region40
      $region39: #{_forward.22} parent=35 // pred_region
        _
      $region40: #{_forward.22} parent=35 // pred_fallthru
        _
    $region36: #{_forward.22} parent=5 // pred_fallthru
      _
    %p732 = scmp.le.s32.totalorder 2, %s10
    // Predicated region
    $region41: #{_forward.22} parent=5 // pred_check
      %p733 = pneg %p732
    $region42: #{_forward.22} parent=5 // pred_check_branch
      %735 = sbr.rel (%p733) target = $region44
    $region43: #{_forward.22} parent=5 // pred_region
      %s736 = ssub.s32 %s10, 2
      // Predicated region
      $region45: #{_forward.22} parent=43 // pred_check
        %p737 = pneg %p128
      $region46: #{_forward.22} parent=43 // pred_check_branch
        %739 = sbr.rel (%p737) target = $region48
      $region47: #{_forward.22} parent=43 // pred_region
        %p740 = scmp.lt.s32.totalorder %s16, 1
        %s741 = scalar_select %p740, %s16, 1
        %s742 = smul.addr %s741, 8
        %s743 = scalar_lea.vmem %s4, %s742
      $region48: #{_forward.22} parent=43 // pred_fallthru
        _
    $region44: #{_forward.22} parent=5 // pred_fallthru
      _
  $region6: #{_forward.22} parent=0 // loop_footer
    %s14 = sadd.s32 1, %s10
  $region7: #{_forward.22} parent=0 // loop_footer_branch
    %9 = sbr.rel target = $region3
  $region8: #{_forward.22} parent=0 // loop_exit
    _

// kernel: _forward.24
$region0: #{_forward.24}
  #allocation0 [shape = 'u32[]', space=smem, size = 0x4, offset = 0x4, fixed_abs, tag = 'smem constant byte address 0x4 - core index']
  #allocation1 [shape = 'u32[144,128]{1,0:T(1,128)}', space=vmem, size = 0x12000, scoped, tag = 'internal scratch']
  %s0 = inlined_call_operand.vmem [shape: f32[2,8,32], index: 0, kind: input, shape index: {}]
  %s1 = inlined_call_operand.vmem [shape: f32[2,8,32], index: 1, kind: input, shape index: {}]
  %s2 = inlined_call_operand.vmem [shape: bf16[32,32], index: 2, kind: input, shape index: {}]
  %s3 = inlined_call_operand.vmem [shape: f32[1,32], index: 3, kind: input, shape index: {}]
  %s4 = inlined_call_operand.vmem [shape: bf16[32,64], index: 4, kind: input, shape index: {}]
  %s5 = inlined_call_operand.vmem [shape: f32[1,64], index: 5, kind: input, shape index: {}]
  %s6 = inlined_call_operand.vmem [shape: f32[2,8,32], index: 6, kind: output, shape index: {0}]
  %s7 = inlined_call_operand.vmem [shape: f32[2,8,8], index: 7, kind: output, shape index: {1}]
  %8 = xla_tuple %s6, %s7
  %s9 = sld [smem:[#allocation0]]
  $region65: #{_forward.24} parent=0
    _
  %s11 = ssub.s32 1, %s9
  %s12 = scalar_select 0, %s11, %s9
  loop: start=0, step=1, limit=4
  $region2: #{_forward.24} parent=0 // loop_pre_header
    _
  $region3: #{_forward.24} parent=0 // loop_header
    %s14 = sphi 0, %s18
    %p15 = scmp.ge.s32.totalorder %s14, 4
    %s24 = sphi 0, %s26
    %s27 = sphi 0, %s24
    %s28 = sphi 0, %s27
    %s44 = sphi 0, %s28
    %s50 = sphi 0, %s52
    %s53 = sphi 0, %s50
    %s54 = sphi 0, %s53
    %s70 = sphi 0, %s54
    %s74 = sphi 0, %s74
    %s76 = sphi 0, %s74
    %s77 = sphi 0, %s76
    %s91 = sphi 0, %s77
    %s95 = sphi 0, %s95
    %s97 = sphi 0, %s95
    %s98 = sphi 0, %s97
    %s112 = sphi 0, %s98
    %s116 = sphi 0, %s116
    %s118 = sphi 0, %s116
    %s119 = sphi 0, %s118
    %s133 = sphi 0, %s119
    %s137 = sphi 0, %s137
    %s139 = sphi 0, %s137
    %s140 = sphi 0, %s139
    %s154 = sphi 0, %s140
    %s160 = sphi 0, %s162
    %s163 = sphi 0, %s160
    %s164 = sphi 0, %s163
    %s180 = sphi 0, %s164
    %s186 = sphi 0, %s188
    %s189 = sphi 0, %s186
    %s190 = sphi 0, %s189
    %s206 = sphi 0, %s190
  $region4: #{_forward.24} parent=0 // loop_header_branch
    %17 = sbr.rel (%p15) target = $region8
  $region5: #{_forward.24} parent=0 // loop_body
    %s19 = ssub.s32 %s14, 1
    %s20 = ssub.s32 %s14, 2
    %s21 = sadd.s32 %s14, 1
    %s22 = ssub.s32 %s14, %s21
    %p23 = scmp.eq.s32.totalorder %s22, 0
    %s25 = sadd.s32 %s24, 1
    %s26 = scalar_select %p23, %s24, %s25
    %p29 = pneg %p23
    %p30 = scmp.eq.s32.totalorder %s14, 1
    %p31 = por %p29, %p30
    %p32 = scmp.ne.s32.totalorder %s24, %s27
    %p33 = scmp.eq.s32.totalorder %s14, 0
    %p34 = por %p32, %p33
    %p35 = scmp.ne.s32.totalorder %s24, %s27
    %p36 = scmp.eq.s32.totalorder %s19, 1
    %p37 = por %p35, %p36
    %p38 = scmp.ne.s32.totalorder %s27, %s28
    %p39 = scmp.eq.s32.totalorder %s19, 0
    %p40 = por %p38, %p39
    %p41 = scmp.ne.s32.totalorder %s27, %s28
    %p42 = scmp.eq.s32.totalorder %s20, 1
    %p43 = por %p41, %p42
    %p45 = scmp.ne.s32.totalorder %s28, %s44
    %p46 = scmp.eq.s32.totalorder %s20, 0
    %p47 = por %p45, %p46
    %s48 = ssub.s32 %s14, %s21
    %p49 = scmp.eq.s32.totalorder %s48, 0
    %s51 = sadd.s32 %s50, 1
    %s52 = scalar_select %p49, %s50, %s51
    %p55 = pneg %p49
    %p56 = scmp.eq.s32.totalorder %s14, 1
    %p57 = por %p55, %p56
    %p58 = scmp.ne.s32.totalorder %s50, %s53
    %p59 = scmp.eq.s32.totalorder %s14, 0
    %p60 = por %p58, %p59
    %p61 = scmp.ne.s32.totalorder %s50, %s53
    %p62 = scmp.eq.s32.totalorder %s19, 1
    %p63 = por %p61, %p62
    %p64 = scmp.ne.s32.totalorder %s53, %s54
    %p65 = scmp.eq.s32.totalorder %s19, 0
    %p66 = por %p64, %p65
    %p67 = scmp.ne.s32.totalorder %s53, %s54
    %p68 = scmp.eq.s32.totalorder %s20, 1
    %p69 = por %p67, %p68
    %p71 = scmp.ne.s32.totalorder %s54, %s70
    %p72 = scmp.eq.s32.totalorder %s20, 0
    %p73 = por %p71, %p72
    %s75 = sadd.s32 %s74, 1
    %p78 = scmp.eq.s32.totalorder %s14, 1
    %p79 = scmp.ne.s32.totalorder %s74, %s76
    %p80 = scmp.eq.s32.totalorder %s14, 0
    %p81 = por %p79, %p80
    %p82 = scmp.ne.s32.totalorder %s74, %s76
    %p83 = scmp.eq.s32.totalorder %s19, 1
    %p84 = por %p82, %p83
    %p85 = scmp.ne.s32.totalorder %s76, %s77
    %p86 = scmp.eq.s32.totalorder %s19, 0
    %p87 = por %p85, %p86
    %p88 = scmp.ne.s32.totalorder %s76, %s77
    %p89 = scmp.eq.s32.totalorder %s20, 1
    %p90 = por %p88, %p89
    %p92 = scmp.ne.s32.totalorder %s77, %s91
    %p93 = scmp.eq.s32.totalorder %s20, 0
    %p94 = por %p92, %p93
    %s96 = sadd.s32 %s95, 1
    %p99 = scmp.eq.s32.totalorder %s14, 1
    %p100 = scmp.ne.s32.totalorder %s95, %s97
    %p101 = scmp.eq.s32.totalorder %s14, 0
    %p102 = por %p100, %p101
    %p103 = scmp.ne.s32.totalorder %s95, %s97
    %p104 = scmp.eq.s32.totalorder %s19, 1
    %p105 = por %p103, %p104
    %p106 = scmp.ne.s32.totalorder %s97, %s98
    %p107 = scmp.eq.s32.totalorder %s19, 0
    %p108 = por %p106, %p107
    %p109 = scmp.ne.s32.totalorder %s97, %s98
    %p110 = scmp.eq.s32.totalorder %s20, 1
    %p111 = por %p109, %p110
    %p113 = scmp.ne.s32.totalorder %s98, %s112
    %p114 = scmp.eq.s32.totalorder %s20, 0
    %p115 = por %p113, %p114
    %s117 = sadd.s32 %s116, 1
    %p120 = scmp.eq.s32.totalorder %s14, 1
    %p121 = scmp.ne.s32.totalorder %s116, %s118
    %p122 = scmp.eq.s32.totalorder %s14, 0
    %p123 = por %p121, %p122
    %p124 = scmp.ne.s32.totalorder %s116, %s118
    %p125 = scmp.eq.s32.totalorder %s19, 1
    %p126 = por %p124, %p125
    %p127 = scmp.ne.s32.totalorder %s118, %s119
    %p128 = scmp.eq.s32.totalorder %s19, 0
    %p129 = por %p127, %p128
    %p130 = scmp.ne.s32.totalorder %s118, %s119
    %p131 = scmp.eq.s32.totalorder %s20, 1
    %p132 = por %p130, %p131
    %p134 = scmp.ne.s32.totalorder %s119, %s133
    %p135 = scmp.eq.s32.totalorder %s20, 0
    %p136 = por %p134, %p135
    %s138 = sadd.s32 %s137, 1
    %p141 = scmp.eq.s32.totalorder %s14, 1
    %p142 = scmp.ne.s32.totalorder %s137, %s139
    %p143 = scmp.eq.s32.totalorder %s14, 0
    %p144 = por %p142, %p143
    %p145 = scmp.ne.s32.totalorder %s137, %s139
    %p146 = scmp.eq.s32.totalorder %s19, 1
    %p147 = por %p145, %p146
    %p148 = scmp.ne.s32.totalorder %s139, %s140
    %p149 = scmp.eq.s32.totalorder %s19, 0
    %p150 = por %p148, %p149
    %p151 = scmp.ne.s32.totalorder %s139, %s140
    %p152 = scmp.eq.s32.totalorder %s20, 1
    %p153 = por %p151, %p152
    %p155 = scmp.ne.s32.totalorder %s140, %s154
    %p156 = scmp.eq.s32.totalorder %s20, 0
    %p157 = por %p155, %p156
    %s158 = ssub.s32 %s14, %s21
    %p159 = scmp.eq.s32.totalorder %s158, 0
    %s161 = sadd.s32 %s160, 1
    %s162 = scalar_select %p159, %s160, %s161
    %p165 = pneg %p159
    %p166 = scmp.eq.s32.totalorder %s14, 1
    %p167 = por %p165, %p166
    %p168 = scmp.ne.s32.totalorder %s160, %s163
    %p169 = scmp.eq.s32.totalorder %s14, 0
    %p170 = por %p168, %p169
    %p171 = scmp.ne.s32.totalorder %s160, %s163
    %p172 = scmp.eq.s32.totalorder %s19, 1
    %p173 = por %p171, %p172
    %p174 = scmp.ne.s32.totalorder %s163, %s164
    %p175 = scmp.eq.s32.totalorder %s19, 0
    %p176 = por %p174, %p175
    %p177 = scmp.ne.s32.totalorder %s163, %s164
    %p178 = scmp.eq.s32.totalorder %s20, 1
    %p179 = por %p177, %p178
    %p181 = scmp.ne.s32.totalorder %s164, %s180
    %p182 = scmp.eq.s32.totalorder %s20, 0
    %p183 = por %p181, %p182
    %s184 = ssub.s32 %s14, %s21
    %p185 = scmp.eq.s32.totalorder %s184, 0
    %s187 = sadd.s32 %s186, 1
    %s188 = scalar_select %p185, %s186, %s187
    %p191 = pneg %p185
    %p192 = scmp.eq.s32.totalorder %s14, 1
    %p193 = por %p191, %p192
    %p194 = scmp.ne.s32.totalorder %s186, %s189
    %p195 = scmp.eq.s32.totalorder %s14, 0
    %p196 = por %p194, %p195
    %p197 = scmp.ne.s32.totalorder %s186, %s189
    %p198 = scmp.eq.s32.totalorder %s19, 1
    %p199 = por %p197, %p198
    %p200 = scmp.ne.s32.totalorder %s189, %s190
    %p201 = scmp.eq.s32.totalorder %s19, 0
    %p202 = por %p200, %p201
    %p203 = scmp.ne.s32.totalorder %s189, %s190
    %p204 = scmp.eq.s32.totalorder %s20, 1
    %p205 = por %p203, %p204
    %p207 = scmp.ne.s32.totalorder %s190, %s206
    %p208 = scmp.eq.s32.totalorder %s20, 0
    %p209 = por %p207, %p208
    %p210 = scmp.le.s32.totalorder 1, %s14
    %p211 = scmp.lt.s32.totalorder %s14, 3
    %p212 = pnand %p210, %p211
    %p213 = pneg %p212
    // Predicated region
    $region9: #{_forward.24} parent=5 // pred_check
      _
    $region10: #{_forward.24} parent=5 // pred_check_branch
      %215 = sbr.rel (%p212) target = $region12
    $region11: #{_forward.24} parent=5 // pred_region
      %s216 = ssub.s32 %s14, 1
      // Predicated region
      $region13: #{_forward.24} parent=11 // pred_check
        %p217 = pneg %p87
      $region14: #{_forward.24} parent=11 // pred_check_branch
        %219 = sbr.rel (%p217) target = $region16
      $region15: #{_forward.24} parent=11 // pred_region
        _
      $region16: #{_forward.24} parent=11 // pred_fallthru
        _
      // Predicated region
      $region17: #{_forward.24} parent=11 // pred_check
        %p220 = pneg %p108
      $region18: #{_forward.24} parent=11 // pred_check_branch
        %222 = sbr.rel (%p220) target = $region20
      $region19: #{_forward.24} parent=11 // pred_region
        _
      $region20: #{_forward.24} parent=11 // pred_fallthru
        _
      // Predicated region
      $region21: #{_forward.24} parent=11 // pred_check
        %p223 = pneg %p129
      $region22: #{_forward.24} parent=11 // pred_check_branch
        %225 = sbr.rel (%p223) target = $region24
      $region23: #{_forward.24} parent=11 // pred_region
        _
      $region24: #{_forward.24} parent=11 // pred_fallthru
        _
      // Predicated region
      $region25: #{_forward.24} parent=11 // pred_check
        %p226 = pneg %p150
      $region26: #{_forward.24} parent=11 // pred_check_branch
        %228 = sbr.rel (%p226) target = $region28
      $region27: #{_forward.24} parent=11 // pred_region
        _
      $region28: #{_forward.24} parent=11 // pred_fallthru
        _
    $region12: #{_forward.24} parent=5 // pred_fallthru
      _
    %p229 = scmp.lt.s32.totalorder %s14, 2
    // Predicated region
    $region29: #{_forward.24} parent=5 // pred_check
      %p230 = pneg %p229
    $region30: #{_forward.24} parent=5 // pred_check_branch
      %232 = sbr.rel (%p230) target = $region32
    $region31: #{_forward.24} parent=5 // pred_region
      // Predicated region
      $region33: #{_forward.24} parent=31 // pred_check
        %p233 = pneg %p34
      $region34: #{_forward.24} parent=31 // pred_check_branch
        %235 = sbr.rel (%p233) target = $region36
      $region35: #{_forward.24} parent=31 // pred_region
        %p236 = scmp.lt.s32.totalorder %s14, 1
        %s237 = scalar_select %p236, %s14, 1
        %s238 = smul.addr %s237, 8
        %s239 = scalar_lea.vmem %s0, %s238
      $region36: #{_forward.24} parent=31 // pred_fallthru
        _
      // Predicated region
      $region37: #{_forward.24} parent=31 // pred_check
        %p240 = pneg %p60
      $region38: #{_forward.24} parent=31 // pred_check_branch
        %242 = sbr.rel (%p240) target = $region40
      $region39: #{_forward.24} parent=31 // pred_region
        %p243 = scmp.lt.s32.totalorder %s14, 1
        %s244 = scalar_select %p243, %s14, 1
        %s245 = smul.addr %s244, 8
        %s246 = scalar_lea.vmem %s1, %s245
      $region40: #{_forward.24} parent=31 // pred_fallthru
        _
    $region32: #{_forward.24} parent=5 // pred_fallthru
      _
    %p247 = scmp.le.s32.totalorder 1, %s14
    %p248 = scmp.lt.s32.totalorder %s14, 3
    %p249 = pnand %p247, %p248
    %p250 = pneg %p249
    // Predicated region
    $region41: #{_forward.24} parent=5 // pred_check
      _
    $region42: #{_forward.24} parent=5 // pred_check_branch
      %252 = sbr.rel (%p249) target = $region44
    $region43: #{_forward.24} parent=5 // pred_region
      %s253 = ssub.s32 %s14, 1
      %p254 = scmp.lt.s32.totalorder %s19, 1
      %s255 = scalar_select %p254, %s19, 1
      %s256 = smul.addr %s255, 8
      %s257 = scalar_lea.vmem %s0, %s256
      %p258 = pneg %p40
      %p259 = pneg %p37
      %p260 = scmp.lt.s32.totalorder %s19, 1
      %s261 = scalar_select %p260, %s19, 1
      %s262 = smul.addr %s261, 8
      %s263 = scalar_lea.vmem %s1, %s262
      %p264 = pneg %p66
      %p265 = pneg %p63
      %p266 = pneg %p87
      %p267 = pneg %p84
      %p268 = pneg %p108
      %p269 = pneg %p105
      %p270 = pneg %p129
      %p271 = pneg %p126
      %p272 = pneg %p150
      %p273 = pneg %p147
      %p274 = pneg %p176
      %p275 = pneg %p173
      %p276 = scmp.lt.s32.totalorder %s19, 1
      %s277 = scalar_select %p276, %s19, 1
      %s278 = smul.addr %s277, 8
      %s279 = scalar_lea.vmem %s6, %s278
      %p280 = pneg %p202
      %p281 = pneg %p199
      %p282 = scmp.lt.s32.totalorder %s19, 1
      %s283 = scalar_select %p282, %s19, 1
      %s284 = smul.addr %s283, 8
      %s285 = scalar_lea.vmem %s7, %s284
      %p286 = scmp.lt.s32.totalorder %s19, 1
      %s287 = scalar_select %p286, %s19, 1
      %s288 = smul.addr %s287, 8
      %s289 = scalar_lea.vmem %s0, %s288
      %p290 = scmp.lt.s32.totalorder %s19, 1
      %s291 = scalar_select %p290, %s19, 1
      %s292 = smul.addr %s291, 8
      %s293 = scalar_lea.vmem %s1, %s292
      %p294 = scmp.lt.s32.totalorder %s19, 1
      %s295 = scalar_select %p294, %s19, 1
      %s296 = smul.addr %s295, 8
      %s297 = scalar_lea.vmem %s6, %s296
      %p298 = scmp.lt.s32.totalorder %s19, 1
      %s299 = scalar_select %p298, %s19, 1
      %s300 = smul.addr %s299, 8
      %s301 = scalar_lea.vmem %s7, %s300
      %v303 = vld [vmem:[%s289] sm:$0xff]
      %v304 = vld [vmem:[%s293] sm:$0xff]
      %v305 = vpack.c.bf16 %v303, %v303
      %v306 = vld [vmem:[%s2] sm:$0xf]
      %v307 = vld [vmem:[%s2 + $0x4] sm:$0xf]
      %v308 = vld [vmem:[%s2 + $0x8] sm:$0xf]
      %v309 = vld [vmem:[%s2 + $0xc] sm:$0xf]
      %v310 = vld [vmem:[%s3] sm:$0x1]
      %v312 = vlaneseq
      %v313 = vshrl.u32 %v312, 7
      %v314 = vsub.s32 0, %v313
      %v315 = vrot.slane %v310, %v314
      %v321 = vunpack.c.l.b16 %v306
      %v322 = vunpack.c.l.b16 %v307
      %v323 = vunpack.c.l.b16 %v308
      %v324 = vunpack.c.l.b16 %v309
      %v325 = vpack.c.b16 %v322, %v321
      %v326 = vpack.c.b16 %v324, %v323
      %vm329 = vcmask 261120
      %v331 = vsel %vm329, %v305, 0
      %333 = vmatprep.subr.bf16.mxu0 0
      %334 = vmatpush1.bf16.msra.mxu0 %v325
      %335 = vmatprep.subr.bf16.mxu0 0
      %336 = vmatpush1.bf16.msra.mxu0 %v326
      %337 = vmatprep.subr.bf16.mxu0 0
      %338 = vmatpush1.bf16.msra.mxu0 0
      %339 = vmatprep.subr.bf16.mxu0 0
      %340 = vmatpush1.bf16.msra.mxu0 0
      %341 = vmatprep.subr.bf16.mxu0 0
      %342 = vmatpush1.bf16.msra.mxu0 0
      %343 = vmatprep.subr.bf16.mxu0 0
      %344 = vmatpush1.bf16.msra.mxu0 0
      %345 = vmatprep.subr.bf16.mxu0 0
      %346 = vmatpush1.bf16.msra.mxu0 0
      %347 = vmatprep.subr.bf16.mxu0 0
      %348 = vmatpush1.bf16.msra.mxu0 0
      %349 = vmatprep.subr.bf16.mxu0 0
      %350 = vmatpush1.bf16.msra.mxu0 0
      %351 = vmatprep.subr.bf16.mxu0 0
      %352 = vmatpush1.bf16.msra.mxu0 0
      %353 = vmatprep.subr.bf16.mxu0 0
      %354 = vmatpush1.bf16.msra.mxu0 0
      %355 = vmatprep.subr.bf16.mxu0 0
      %356 = vmatpush1.bf16.msra.mxu0 0
      %357 = vmatprep.subr.bf16.mxu0 0
      %358 = vmatpush1.bf16.msra.mxu0 0
      %359 = vmatprep.subr.bf16.mxu0 0
      %360 = vmatpush1.bf16.msra.mxu0 0
      %361 = vmatprep.subr.bf16.mxu0 0
      %362 = vmatpush1.bf16.msra.mxu0 0
      %363 = vmatprep.subr.bf16.mxu0 0
      %364 = vmatpush1.bf16.msra.mxu0 0
      %365 = vmatprep.mubr.bf16.mxu0 0
      %366 = vmatmul.mubr.bf16.gmra.mrb[0].mxu0 %v331
      %v367 = vpop.f32.mrb[0].mxu0
      %v368 = vadd.f32 %v315, %v367
      %v369 = vpop.f32.mrb[0].mxu0
      %v370 = vpop.f32.mrb[0].mxu0
      %v371 = vpop.f32.mrb[0].mxu0
      %372 = vdwg.mxu0
      %v373 = vpack.c.bf16 %v368, %v368
      %v374 = vpack.c.bf16 %v304, %v304
      %v375 = vld [vmem:[%s4] sm:$0xf]
      %v376 = vld [vmem:[%s4 + $0x4] sm:$0xf]
      %v377 = vld [vmem:[%s4 + $0x8] sm:$0xf]
      %v378 = vld [vmem:[%s4 + $0xc] sm:$0xf]
      %v379 = vld [vmem:[%s5] sm:$0x1]
      %v381 = vlaneseq
      %v382 = vshrl.u32 %v381, 7
      %v383 = vsub.s32 0, %v382
      %v384 = vrot.slane %v379, %v383
      %v390 = vunpack.c.l.b16 %v375
      %v391 = vunpack.c.l.b16 %v376
      %v392 = vunpack.c.l.b16 %v377
      %v393 = vunpack.c.l.b16 %v378
      %v394 = vpack.c.b16 %v391, %v390
      %v395 = vpack.c.b16 %v393, %v392
      %v399 = vsel %vm329, %v374, 0
      %401 = vmatprep.subr.bf16.mxu0 0
      %402 = vmatpush1.bf16.msra.mxu0 %v394
      %403 = vmatprep.subr.bf16.mxu0 0
      %404 = vmatpush1.bf16.msra.mxu0 %v395
      %405 = vmatprep.subr.bf16.mxu0 0
      %406 = vmatpush1.bf16.msra.mxu0 0
      %407 = vmatprep.subr.bf16.mxu0 0
      %408 = vmatpush1.bf16.msra.mxu0 0
      %409 = vmatprep.subr.bf16.mxu0 0
      %410 = vmatpush1.bf16.msra.mxu0 0
      %411 = vmatprep.subr.bf16.mxu0 0
      %412 = vmatpush1.bf16.msra.mxu0 0
      %413 = vmatprep.subr.bf16.mxu0 0
      %414 = vmatpush1.bf16.msra.mxu0 0
      %415 = vmatprep.subr.bf16.mxu0 0
      %416 = vmatpush1.bf16.msra.mxu0 0
      %417 = vmatprep.subr.bf16.mxu0 0
      %418 = vmatpush1.bf16.msra.mxu0 0
      %419 = vmatprep.subr.bf16.mxu0 0
      %420 = vmatpush1.bf16.msra.mxu0 0
      %421 = vmatprep.subr.bf16.mxu0 0
      %422 = vmatpush1.bf16.msra.mxu0 0
      %423 = vmatprep.subr.bf16.mxu0 0
      %424 = vmatpush1.bf16.msra.mxu0 0
      %425 = vmatprep.subr.bf16.mxu0 0
      %426 = vmatpush1.bf16.msra.mxu0 0
      %427 = vmatprep.subr.bf16.mxu0 0
      %428 = vmatpush1.bf16.msra.mxu0 0
      %429 = vmatprep.subr.bf16.mxu0 0
      %430 = vmatpush1.bf16.msra.mxu0 0
      %431 = vmatprep.subr.bf16.mxu0 0
      %432 = vmatpush1.bf16.msra.mxu0 0
      %433 = vmatprep.mubr.bf16.mxu0 0
      %434 = vmatmul.mubr.bf16.gmra.mrb[0].mxu0 %v399
      %v435 = vpop.f32.mrb[0].mxu0
      %v436 = vadd.f32 %v384, %v435
      %v437 = vpop.f32.mrb[0].mxu0
      %v438 = vpop.f32.mrb[0].mxu0
      %v439 = vpop.f32.mrb[0].mxu0
      %440 = vdwg.mxu0
      %v441 = vpack.c.bf16 %v436, %v436
      %vm442 = vcmask 64512
      %v444 = vsel %vm442, %v373, 0
      %v447 = vsel %vm442, %v441, 0
      %449 = vmatprep.subr.bf16.mxu0 0
      %450 = vmatpush1.bf16.xpose.msra.mxu0 %v447
      %451 = vmatprep.subr.bf16.mxu0 0
      %452 = vmatpush1.bf16.xpose.msra.mxu0 0
      %453 = vmatprep.subr.bf16.mxu0 0
      %454 = vmatpush1.bf16.xpose.msra.mxu0 0
      %455 = vmatprep.subr.bf16.mxu0 0
      %456 = vmatpush1.bf16.xpose.msra.mxu0 0
      %457 = vmatprep.subr.bf16.mxu0 0
      %458 = vmatpush1.bf16.xpose.msra.mxu0 0
      %459 = vmatprep.subr.bf16.mxu0 0
      %460 = vmatpush1.bf16.xpose.msra.mxu0 0
      %461 = vmatprep.subr.bf16.mxu0 0
      %462 = vmatpush1.bf16.xpose.msra.mxu0 0
      %463 = vmatprep.subr.bf16.mxu0 0
      %464 = vmatpush1.bf16.xpose.msra.mxu0 0
      %465 = vmatprep.subr.bf16.mxu0 0
      %466 = vmatpush1.bf16.xpose.msra.mxu0 0
      %467 = vmatprep.subr.bf16.mxu0 0
      %468 = vmatpush1.bf16.xpose.msra.mxu0 0
      %469 = vmatprep.subr.bf16.mxu0 0
      %470 = vmatpush1.bf16.xpose.msra.mxu0 0
      %471 = vmatprep.subr.bf16.mxu0 0
      %472 = vmatpush1.bf16.xpose.msra.mxu0 0
      %473 = vmatprep.subr.bf16.mxu0 0
      %474 = vmatpush1.bf16.xpose.msra.mxu0 0
      %475 = vmatprep.subr.bf16.mxu0 0
      %476 = vmatpush1.bf16.xpose.msra.mxu0 0
      %477 = vmatprep.subr.bf16.mxu0 0
      %478 = vmatpush1.bf16.xpose.msra.mxu0 0
      %479 = vmatprep.subr.bf16.mxu0 0
      %480 = vmatpush1.bf16.xpose.msra.mxu0 0
      %481 = vmatprep.mubr.bf16.mxu0 0
      %482 = vmatmul.mubr.bf16.gmra.mrb[0].mxu0 %v444
      %v483 = vpop.f32.mrb[0].mxu0
      %v484 = vadd.f32 0.0, %v483
      %v485 = vpop.f32.mrb[0].mxu0
      %v486 = vpop.f32.mrb[0].mxu0
      %v487 = vpop.f32.mrb[0].mxu0
      %488 = vdwg.mxu0
      %v489 = vsel %vm442, %v484, -inf
      %490 = vmax.xlane.f32.xlu0 %v489
      %v491 = vpop.xlane.xlu0 %490
      %v492 = vsub.f32 %v484, %v491
      %v493 = vmul.f32 %v492, 1.442695
      %v494 = vpow.pop %v493
      %v495 = vsel %vm442, %v494, 0.0
      %496 = vadd.xlane.f32.xlu0 %v495
      %v497 = vpop.xlane.xlu0 %496
      %v498 = vrcp.pop %v497
      %v499 = vmul.f32 %v494, %v498
      %v500 = vpack.c.bf16 %v499, %v499
      %502 = vrot.lane.b32.xlu0 %v441, 96
      %v503 = vpop.permute.xlu0 %502
      %v505 = vsel %vm442, %v500, 0
      %vm507 = vcmask 1043456
      %v509 = vsel %vm507, %v503, 0
      %511 = vmatprep.subr.bf16.mxu0 0
      %512 = vmatpush1.bf16.msra.mxu0 %v509
      %513 = vmatprep.subr.bf16.mxu0 0
      %514 = vmatpush1.bf16.msra.mxu0 0
      %515 = vmatprep.subr.bf16.mxu0 0
      %516 = vmatpush1.bf16.msra.mxu0 0
      %517 = vmatprep.subr.bf16.mxu0 0
      %518 = vmatpush1.bf16.msra.mxu0 0
      %519 = vmatprep.subr.bf16.mxu0 0
      %520 = vmatpush1.bf16.msra.mxu0 0
      %521 = vmatprep.subr.bf16.mxu0 0
      %522 = vmatpush1.bf16.msra.mxu0 0
      %523 = vmatprep.subr.bf16.mxu0 0
      %524 = vmatpush1.bf16.msra.mxu0 0
      %525 = vmatprep.subr.bf16.mxu0 0
      %526 = vmatpush1.bf16.msra.mxu0 0
      %527 = vmatprep.subr.bf16.mxu0 0
      %528 = vmatpush1.bf16.msra.mxu0 0
      %529 = vmatprep.subr.bf16.mxu0 0
      %530 = vmatpush1.bf16.msra.mxu0 0
      %531 = vmatprep.subr.bf16.mxu0 0
      %532 = vmatpush1.bf16.msra.mxu0 0
      %533 = vmatprep.subr.bf16.mxu0 0
      %534 = vmatpush1.bf16.msra.mxu0 0
      %535 = vmatprep.subr.bf16.mxu0 0
      %536 = vmatpush1.bf16.msra.mxu0 0
      %537 = vmatprep.subr.bf16.mxu0 0
      %538 = vmatpush1.bf16.msra.mxu0 0
      %539 = vmatprep.subr.bf16.mxu0 0
      %540 = vmatpush1.bf16.msra.mxu0 0
      %541 = vmatprep.subr.bf16.mxu0 0
      %542 = vmatpush1.bf16.msra.mxu0 0
      %543 = vmatprep.mubr.bf16.mxu0 0
      %544 = vmatmul.mubr.bf16.gmra.mrb[0].mxu0 %v505
      %v545 = vpop.f32.mrb[0].mxu0
      %v546 = vadd.f32 0.0, %v545
      %v547 = vpop.f32.mrb[0].mxu0
      %v548 = vpop.f32.mrb[0].mxu0
      %v549 = vpop.f32.mrb[0].mxu0
      %550 = vdwg.mxu0
      %551 = vst.msk [vmem:[%s297] sm:$0xff] %vm442, %v546
      %553 = vrot.lane.b32.xlu0 %v373, 120
      %v554 = vpop.permute.xlu0 %553
      %555 = vrot.lane.b32.xlu0 %v441, 120
      %v556 = vpop.permute.xlu0 %555
      %v558 = vsel %vm442, %v554, 0
      %v561 = vsel %vm442, %v556, 0
      %563 = vmatprep.subr.bf16.mxu0 0
      %564 = vmatpush1.bf16.xpose.msra.mxu0 %v561
      %565 = vmatprep.subr.bf16.mxu0 0
      %566 = vmatpush1.bf16.xpose.msra.mxu0 0
      %567 = vmatprep.subr.bf16.mxu0 0
      %568 = vmatpush1.bf16.xpose.msra.mxu0 0
      %569 = vmatprep.subr.bf16.mxu0 0
      %570 = vmatpush1.bf16.xpose.msra.mxu0 0
      %571 = vmatprep.subr.bf16.mxu0 0
      %572 = vmatpush1.bf16.xpose.msra.mxu0 0
      %573 = vmatprep.subr.bf16.mxu0 0
      %574 = vmatpush1.bf16.xpose.msra.mxu0 0
      %575 = vmatprep.subr.bf16.mxu0 0
      %576 = vmatpush1.bf16.xpose.msra.mxu0 0
      %577 = vmatprep.subr.bf16.mxu0 0
      %578 = vmatpush1.bf16.xpose.msra.mxu0 0
      %579 = vmatprep.subr.bf16.mxu0 0
      %580 = vmatpush1.bf16.xpose.msra.mxu0 0
      %581 = vmatprep.subr.bf16.mxu0 0
      %582 = vmatpush1.bf16.xpose.msra.mxu0 0
      %583 = vmatprep.subr.bf16.mxu0 0
      %584 = vmatpush1.bf16.xpose.msra.mxu0 0
      %585 = vmatprep.subr.bf16.mxu0 0
      %586 = vmatpush1.bf16.xpose.msra.mxu0 0
      %587 = vmatprep.subr.bf16.mxu0 0
      %588 = vmatpush1.bf16.xpose.msra.mxu0 0
      %589 = vmatprep.subr.bf16.mxu0 0
      %590 = vmatpush1.bf16.xpose.msra.mxu0 0
      %591 = vmatprep.subr.bf16.mxu0 0
      %592 = vmatpush1.bf16.xpose.msra.mxu0 0
      %593 = vmatprep.subr.bf16.mxu0 0
      %594 = vmatpush1.bf16.xpose.msra.mxu0 0
      %595 = vmatprep.mubr.bf16.mxu0 0
      %596 = vmatmul.mubr.bf16.gmra.mrb[0].mxu0 %v558
      %v597 = vpop.f32.mrb[0].mxu0
      %v598 = vadd.f32 0.0, %v597
      %v599 = vpop.f32.mrb[0].mxu0
      %v600 = vpop.f32.mrb[0].mxu0
      %v601 = vpop.f32.mrb[0].mxu0
      %602 = vdwg.mxu0
      %v603 = vsel %vm442, %v598, -inf
      %604 = vmax.xlane.f32.xlu0 %v603
      %v605 = vpop.xlane.xlu0 %604
      %v606 = vsub.f32 %v598, %v605
      %v607 = vmul.f32 %v606, 1.442695
      %v608 = vpow.pop %v607
      %v609 = vsel %vm442, %v608, 0.0
      %610 = vadd.xlane.f32.xlu0 %v609
      %v611 = vpop.xlane.xlu0 %610
      %v612 = vrcp.pop %v611
      %v613 = vmul.f32 %v608, %v612
      %v614 = vpack.c.bf16 %v613, %v613
      %615 = vrot.lane.b32.xlu0 %v441, 88
      %v616 = vpop.permute.xlu0 %615
      %v618 = vsel %vm442, %v614, 0
      %v621 = vsel %vm507, %v616, 0
      %623 = vmatprep.subr.bf16.mxu0 0
      %624 = vmatpush1.bf16.msra.mxu0 %v621
      %625 = vmatprep.subr.bf16.mxu0 0
      %626 = vmatpush1.bf16.msra.mxu0 0
      %627 = vmatprep.subr.bf16.mxu0 0
      %628 = vmatpush1.bf16.msra.mxu0 0
      %629 = vmatprep.subr.bf16.mxu0 0
      %630 = vmatpush1.bf16.msra.mxu0 0
      %631 = vmatprep.subr.bf16.mxu0 0
      %632 = vmatpush1.bf16.msra.mxu0 0
      %633 = vmatprep.subr.bf16.mxu0 0
      %634 = vmatpush1.bf16.msra.mxu0 0
      %635 = vmatprep.subr.bf16.mxu0 0
      %636 = vmatpush1.bf16.msra.mxu0 0
      %637 = vmatprep.subr.bf16.mxu0 0
      %638 = vmatpush1.bf16.msra.mxu0 0
      %639 = vmatprep.subr.bf16.mxu0 0
      %640 = vmatpush1.bf16.msra.mxu0 0
      %641 = vmatprep.subr.bf16.mxu0 0
      %642 = vmatpush1.bf16.msra.mxu0 0
      %643 = vmatprep.subr.bf16.mxu0 0
      %644 = vmatpush1.bf16.msra.mxu0 0
      %645 = vmatprep.subr.bf16.mxu0 0
      %646 = vmatpush1.bf16.msra.mxu0 0
      %647 = vmatprep.subr.bf16.mxu0 0
      %648 = vmatpush1.bf16.msra.mxu0 0
      %649 = vmatprep.subr.bf16.mxu0 0
      %650 = vmatpush1.bf16.msra.mxu0 0
      %651 = vmatprep.subr.bf16.mxu0 0
      %652 = vmatpush1.bf16.msra.mxu0 0
      %653 = vmatprep.subr.bf16.mxu0 0
      %654 = vmatpush1.bf16.msra.mxu0 0
      %655 = vmatprep.mubr.bf16.mxu0 0
      %656 = vmatmul.mubr.bf16.gmra.mrb[0].mxu0 %v618
      %v657 = vpop.f32.mrb[0].mxu0
      %v658 = vadd.f32 0.0, %v657
      %v659 = vpop.f32.mrb[0].mxu0
      %v660 = vpop.f32.mrb[0].mxu0
      %v661 = vpop.f32.mrb[0].mxu0
      %662 = vdwg.mxu0
      %664 = vrot.lane.b32.xlu0 %v658, 8
      %v665 = vpop.permute.xlu0 %664
      %vm667 = vcmask 130112
      %668 = vst.msk [vmem:[%s297] sm:$0xff] %vm667, %v665
      %v669 = vadd.f32 %v499, %v613
      %670 = vrot.lane.b32.xlu0 %v373, 112
      %v671 = vpop.permute.xlu0 %670
      %672 = vrot.lane.b32.xlu0 %v441, 112
      %v673 = vpop.permute.xlu0 %672
      %v675 = vsel %vm442, %v671, 0
      %v678 = vsel %vm442, %v673, 0
      %680 = vmatprep.subr.bf16.mxu0 0
      %681 = vmatpush1.bf16.xpose.msra.mxu0 %v678
      %682 = vmatprep.subr.bf16.mxu0 0
      %683 = vmatpush1.bf16.xpose.msra.mxu0 0
      %684 = vmatprep.subr.bf16.mxu0 0
      %685 = vmatpush1.bf16.xpose.msra.mxu0 0
      %686 = vmatprep.subr.bf16.mxu0 0
      %687 = vmatpush1.bf16.xpose.msra.mxu0 0
      %688 = vmatprep.subr.bf16.mxu0 0
      %689 = vmatpush1.bf16.xpose.msra.mxu0 0
      %690 = vmatprep.subr.bf16.mxu0 0
      %691 = vmatpush1.bf16.xpose.msra.mxu0 0
      %692 = vmatprep.subr.bf16.mxu0 0
      %693 = vmatpush1.bf16.xpose.msra.mxu0 0
      %694 = vmatprep.subr.bf16.mxu0 0
      %695 = vmatpush1.bf16.xpose.msra.mxu0 0
      %696 = vmatprep.subr.bf16.mxu0 0
      %697 = vmatpush1.bf16.xpose.msra.mxu0 0
      %698 = vmatprep.subr.bf16.mxu0 0
      %699 = vmatpush1.bf16.xpose.msra.mxu0 0
      %700 = vmatprep.subr.bf16.mxu0 0
      %701 = vmatpush1.bf16.xpose.msra.mxu0 0
      %702 = vmatprep.subr.bf16.mxu0 0
      %703 = vmatpush1.bf16.xpose.msra.mxu0 0
      %704 = vmatprep.subr.bf16.mxu0 0
      %705 = vmatpush1.bf16.xpose.msra.mxu0 0
      %706 = vmatprep.subr.bf16.mxu0 0
      %707 = vmatpush1.bf16.xpose.msra.mxu0 0
      %708 = vmatprep.subr.bf16.mxu0 0
      %709 = vmatpush1.bf16.xpose.msra.mxu0 0
      %710 = vmatprep.subr.bf16.mxu0 0
      %711 = vmatpush1.bf16.xpose.msra.mxu0 0
      %712 = vmatprep.mubr.bf16.mxu0 0
      %713 = vmatmul.mubr.bf16.gmra.mrb[0].mxu0 %v675
      %v714 = vpop.f32.mrb[0].mxu0
      %v715 = vadd.f32 0.0, %v714
      %v716 = vpop.f32.mrb[0].mxu0
      %v717 = vpop.f32.mrb[0].mxu0
      %v718 = vpop.f32.mrb[0].mxu0
      %719 = vdwg.mxu0
      %v720 = vsel %vm442, %v715, -inf
      %721 = vmax.xlane.f32.xlu0 %v720
      %v722 = vpop.xlane.xlu0 %721
      %v723 = vsub.f32 %v715, %v722
      %v724 = vmul.f32 %v723, 1.442695
      %v725 = vpow.pop %v724
      %v726 = vsel %vm442, %v725, 0.0
      %727 = vadd.xlane.f32.xlu0 %v726
      %v728 = vpop.xlane.xlu0 %727
      %v729 = vrcp.pop %v728
      %v730 = vmul.f32 %v725, %v729
      %v731 = vpack.c.bf16 %v730, %v730
      %732 = vrot.lane.b32.xlu0 %v441, 80
      %v733 = vpop.permute.xlu0 %732
      %v735 = vsel %vm442, %v731, 0
      %v738 = vsel %vm507, %v733, 0
      %740 = vmatprep.subr.bf16.mxu0 0
      %741 = vmatpush1.bf16.msra.mxu0 %v738
      %742 = vmatprep.subr.bf16.mxu0 0
      %743 = vmatpush1.bf16.msra.mxu0 0
      %744 = vmatprep.subr.bf16.mxu0 0
      %745 = vmatpush1.bf16.msra.mxu0 0
      %746 = vmatprep.subr.bf16.mxu0 0
      %747 = vmatpush1.bf16.msra.mxu0 0
      %748 = vmatprep.subr.bf16.mxu0 0
      %749 = vmatpush1.bf16.msra.mxu0 0
      %750 = vmatprep.subr.bf16.mxu0 0
      %751 = vmatpush1.bf16.msra.mxu0 0
      %752 = vmatprep.subr.bf16.mxu0 0
      %753 = vmatpush1.bf16.msra.mxu0 0
      %754 = vmatprep.subr.bf16.mxu0 0
      %755 = vmatpush1.bf16.msra.mxu0 0
      %756 = vmatprep.subr.bf16.mxu0 0
      %757 = vmatpush1.bf16.msra.mxu0 0
      %758 = vmatprep.subr.bf16.mxu0 0
      %759 = vmatpush1.bf16.msra.mxu0 0
      %760 = vmatprep.subr.bf16.mxu0 0
      %761 = vmatpush1.bf16.msra.mxu0 0
      %762 = vmatprep.subr.bf16.mxu0 0
      %763 = vmatpush1.bf16.msra.mxu0 0
      %764 = vmatprep.subr.bf16.mxu0 0
      %765 = vmatpush1.bf16.msra.mxu0 0
      %766 = vmatprep.subr.bf16.mxu0 0
      %767 = vmatpush1.bf16.msra.mxu0 0
      %768 = vmatprep.subr.bf16.mxu0 0
      %769 = vmatpush1.bf16.msra.mxu0 0
      %770 = vmatprep.subr.bf16.mxu0 0
      %771 = vmatpush1.bf16.msra.mxu0 0
      %772 = vmatprep.mubr.bf16.mxu0 0
      %773 = vmatmul.mubr.bf16.gmra.mrb[0].mxu0 %v735
      %v774 = vpop.f32.mrb[0].mxu0
      %v775 = vadd.f32 0.0, %v774
      %v776 = vpop.f32.mrb[0].mxu0
      %v777 = vpop.f32.mrb[0].mxu0
      %v778 = vpop.f32.mrb[0].mxu0
      %779 = vdwg.mxu0
      %781 = vrot.lane.b32.xlu0 %v775, 16
      %v782 = vpop.permute.xlu0 %781
      %vm784 = vcmask 195712
      %785 = vst.msk [vmem:[%s297] sm:$0xff] %vm784, %v782
      %v786 = vadd.f32 %v669, %v730
      %787 = vrot.lane.b32.xlu0 %v373, 104
      %v788 = vpop.permute.xlu0 %787
      %789 = vrot.lane.b32.xlu0 %v441, 104
      %v790 = vpop.permute.xlu0 %789
      %v792 = vsel %vm442, %v788, 0
      %v795 = vsel %vm442, %v790, 0
      %797 = vmatprep.subr.bf16.mxu0 0
      %798 = vmatpush1.bf16.xpose.msra.mxu0 %v795
      %799 = vmatprep.subr.bf16.mxu0 0
      %800 = vmatpush1.bf16.xpose.msra.mxu0 0
      %801 = vmatprep.subr.bf16.mxu0 0
      %802 = vmatpush1.bf16.xpose.msra.mxu0 0
      %803 = vmatprep.subr.bf16.mxu0 0
      %804 = vmatpush1.bf16.xpose.msra.mxu0 0
      %805 = vmatprep.subr.bf16.mxu0 0
      %806 = vmatpush1.bf16.xpose.msra.mxu0 0
      %807 = vmatprep.subr.bf16.mxu0 0
      %808 = vmatpush1.bf16.xpose.msra.mxu0 0
      %809 = vmatprep.subr.bf16.mxu0 0
      %810 = vmatpush1.bf16.xpose.msra.mxu0 0
      %811 = vmatprep.subr.bf16.mxu0 0
      %812 = vmatpush1.bf16.xpose.msra.mxu0 0
      %813 = vmatprep.subr.bf16.mxu0 0
      %814 = vmatpush1.bf16.xpose.msra.mxu0 0
      %815 = vmatprep.subr.bf16.mxu0 0
      %816 = vmatpush1.bf16.xpose.msra.mxu0 0
      %817 = vmatprep.subr.bf16.mxu0 0
      %818 = vmatpush1.bf16.xpose.msra.mxu0 0
      %819 = vmatprep.subr.bf16.mxu0 0
      %820 = vmatpush1.bf16.xpose.msra.mxu0 0
      %821 = vmatprep.subr.bf16.mxu0 0
      %822 = vmatpush1.bf16.xpose.msra.mxu0 0
      %823 = vmatprep.subr.bf16.mxu0 0
      %824 = vmatpush1.bf16.xpose.msra.mxu0 0
      %825 = vmatprep.subr.bf16.mxu0 0
      %826 = vmatpush1.bf16.xpose.msra.mxu0 0
      %827 = vmatprep.subr.bf16.mxu0 0
      %828 = vmatpush1.bf16.xpose.msra.mxu0 0
      %829 = vmatprep.mubr.bf16.mxu0 0
      %830 = vmatmul.mubr.bf16.gmra.mrb[0].mxu0 %v792
      %v831 = vpop.f32.mrb[0].mxu0
      %v832 = vadd.f32 0.0, %v831
      %v833 = vpop.f32.mrb[0].mxu0
      %v834 = vpop.f32.mrb[0].mxu0
      %v835 = vpop.f32.mrb[0].mxu0
      %836 = vdwg.mxu0
      %v837 = vsel %vm442, %v832, -inf
      %838 = vmax.xlane.f32.xlu0 %v837
      %v839 = vpop.xlane.xlu0 %838
      %v840 = vsub.f32 %v832, %v839
      %v841 = vmul.f32 %v840, 1.442695
      %v842 = vpow.pop %v841
      %v843 = vsel %vm442, %v842, 0.0
      %844 = vadd.xlane.f32.xlu0 %v843
      %v845 = vpop.xlane.xlu0 %844
      %v846 = vrcp.pop %v845
      %v847 = vmul.f32 %v842, %v846
      %v848 = vpack.c.bf16 %v847, %v847
      %849 = vrot.lane.b32.xlu0 %v441, 72
      %v850 = vpop.permute.xlu0 %849
      %v852 = vsel %vm442, %v848, 0
      %v855 = vsel %vm507, %v850, 0
      %857 = vmatprep.subr.bf16.mxu0 0
      %858 = vmatpush1.bf16.msra.mxu0 %v855
      %859 = vmatprep.subr.bf16.mxu0 0
      %860 = vmatpush1.bf16.msra.mxu0 0
      %861 = vmatprep.subr.bf16.mxu0 0
      %862 = vmatpush1.bf16.msra.mxu0 0
      %863 = vmatprep.subr.bf16.mxu0 0
      %864 = vmatpush1.bf16.msra.mxu0 0
      %865 = vmatprep.subr.bf16.mxu0 0
      %866 = vmatpush1.bf16.msra.mxu0 0
      %867 = vmatprep.subr.bf16.mxu0 0
      %868 = vmatpush1.bf16.msra.mxu0 0
      %869 = vmatprep.subr.bf16.mxu0 0
      %870 = vmatpush1.bf16.msra.mxu0 0
      %871 = vmatprep.subr.bf16.mxu0 0
      %872 = vmatpush1.bf16.msra.mxu0 0
      %873 = vmatprep.subr.bf16.mxu0 0
      %874 = vmatpush1.bf16.msra.mxu0 0
      %875 = vmatprep.subr.bf16.mxu0 0
      %876 = vmatpush1.bf16.msra.mxu0 0
      %877 = vmatprep.subr.bf16.mxu0 0
      %878 = vmatpush1.bf16.msra.mxu0 0
      %879 = vmatprep.subr.bf16.mxu0 0
      %880 = vmatpush1.bf16.msra.mxu0 0
      %881 = vmatprep.subr.bf16.mxu0 0
      %882 = vmatpush1.bf16.msra.mxu0 0
      %883 = vmatprep.subr.bf16.mxu0 0
      %884 = vmatpush1.bf16.msra.mxu0 0
      %885 = vmatprep.subr.bf16.mxu0 0
      %886 = vmatpush1.bf16.msra.mxu0 0
      %887 = vmatprep.subr.bf16.mxu0 0
      %888 = vmatpush1.bf16.msra.mxu0 0
      %889 = vmatprep.mubr.bf16.mxu0 0
      %890 = vmatmul.mubr.bf16.gmra.mrb[0].mxu0 %v852
      %v891 = vpop.f32.mrb[0].mxu0
      %v892 = vadd.f32 0.0, %v891
      %v893 = vpop.f32.mrb[0].mxu0
      %v894 = vpop.f32.mrb[0].mxu0
      %v895 = vpop.f32.mrb[0].mxu0
      %896 = vdwg.mxu0
      %898 = vrot.lane.b32.xlu0 %v892, 24
      %v899 = vpop.permute.xlu0 %898
      %vm901 = vcmask 261312
      %902 = vst.msk [vmem:[%s297] sm:$0xff] %vm901, %v899
      %v903 = vadd.f32 %v786, %v847
      %v904 = vmul.f32 %v903, 0.25
      %905 = vst.msk [vmem:[%s301] sm:$0xff] %vm442, %v904
      %p906 = scmp.lt.s32.totalorder %s19, 1
      %s907 = scalar_select %p906, %s19, 1
      %s908 = smul.addr %s907, 8
      %s909 = scalar_lea.vmem %s6, %s908
      %p910 = scmp.lt.s32.totalorder %s19, 1
      %s911 = scalar_select %p910, %s19, 1
      %s912 = smul.addr %s911, 8
      %s913 = scalar_lea.vmem %s7, %s912
      // Predicated region
      $region45: #{_forward.24} parent=43 // pred_check
        %p914 = pneg %p173
      $region46: #{_forward.24} parent=43 // pred_check_branch
        %916 = sbr.rel (%p914) target = $region48
      $region47: #{_forward.24} parent=43 // pred_region
        _
      $region48: #{_forward.24} parent=43 // pred_fallthru
        _
      // Predicated region
      $region49: #{_forward.24} parent=43 // pred_check
        %p917 = pneg %p199
      $region50: #{_forward.24} parent=43 // pred_check_branch
        %919 = sbr.rel (%p917) target = $region52
      $region51: #{_forward.24} parent=43 // pred_region
        _
      $region52: #{_forward.24} parent=43 // pred_fallthru
        _
    $region44: #{_forward.24} parent=5 // pred_fallthru
      _
    %p920 = scmp.le.s32.totalorder 2, %s14
    // Predicated region
    $region53: #{_forward.24} parent=5 // pred_check
      %p921 = pneg %p920
    $region54: #{_forward.24} parent=5 // pred_check_branch
      %923 = sbr.rel (%p921) target = $region56
    $region55: #{_forward.24} parent=5 // pred_region
      %s924 = ssub.s32 %s14, 2
      // Predicated region
      $region57: #{_forward.24} parent=55 // pred_check
        %p925 = pneg %p179
      $region58: #{_forward.24} parent=55 // pred_check_branch
        %927 = sbr.rel (%p925) target = $region60
      $region59: #{_forward.24} parent=55 // pred_region
        %p928 = scmp.lt.s32.totalorder %s20, 1
        %s929 = scalar_select %p928, %s20, 1
        %s930 = smul.addr %s929, 8
        %s931 = scalar_lea.vmem %s6, %s930
      $region60: #{_forward.24} parent=55 // pred_fallthru
        _
      // Predicated region
      $region61: #{_forward.24} parent=55 // pred_check
        %p932 = pneg %p205
      $region62: #{_forward.24} parent=55 // pred_check_branch
        %934 = sbr.rel (%p932) target = $region64
      $region63: #{_forward.24} parent=55 // pred_region
        %p935 = scmp.lt.s32.totalorder %s20, 1
        %s936 = scalar_select %p935, %s20, 1
        %s937 = smul.addr %s936, 8
        %s938 = scalar_lea.vmem %s7, %s937
      $region64: #{_forward.24} parent=55 // pred_fallthru
        _
    $region56: #{_forward.24} parent=5 // pred_fallthru
      _
  $region6: #{_forward.24} parent=0 // loop_footer
    %s18 = sadd.s32 1, %s14
  $region7: #{_forward.24} parent=0 // loop_footer_branch
    %13 = sbr.rel target = $region3
  $region8: #{_forward.24} parent=0 // loop_exit
    _

</llo_original>
